<compile_context>
chip_gen: v6e
topology: v6e:2x2x1
jax: 0.10.0
libtpu: 0.0.40
codegen_flags: <defaults>
</compile_context>

<pallas_src>
import functools
import math

import jax
import jax.numpy as jnp
from jax.experimental import pallas as pl
from jax.experimental.pallas import tpu as pltpu

FIRST_OMEGA_0 = 30.0
HIDDEN_OMEGA_0 = 30.0          # layers 1,2 are standard Linear+BN+ReLU in this config
BN_EPS = 1e-5

_VMEM_LIMIT = 32 * 1024 * 1024          # safe on v5e/v6e; within v7x's 64 MiB physical
_SINGLE_BLOCK_BUDGET = 12 * 1024 * 1024  # live-activation budget for the 1-step path
_ZCACHE_BUDGET = 16 * 1024 * 1024        # z1+z2 VMEM cache budget for the tiled path


# ----------------------------------------------------------------------------
# Fast path: whole batch resident in VMEM, one grid step, no recompute.
# ----------------------------------------------------------------------------
def _single_block_kernel(
    x_ref,                                  # (IN, Npad)   batch on lanes
    w0_ref, b0_ref,                         # (H, IN), (H, 1)  (omega_0 pre-folded)
    w1_ref, b1_ref, g1_ref, be1_ref,        # (H, H), (H, 1), (H, 1), (H, 1)
    w2_ref, b2_ref, g2_ref, be2_ref,
    wf_ref, bf_ref,                         # (OUT, H), (OUT, 1)
    out_ref,                                # (OUT, Npad)
    *, n_valid, n_pad):
    inv_n = 1.0 / float(n_valid)

    def linear(w_ref, b_ref, h):
        return jnp.dot(w_ref[...], h, preferred_element_type=jnp.float32) + b_ref[...]

    if n_valid != n_pad:
        lane = jax.lax.broadcasted_iota(jnp.int32, (1, n_pad), 1)
        mask = lane < n_valid
    else:
        mask = None

    def bn_relu(z, g_ref, be_ref):
        zm = z if mask is None else jnp.where(mask, z, 0.0)
        m = jnp.sum(zm, axis=1, keepdims=True) * inv_n
        # biased variance via E[z^2]-E[z]^2 (matches reference; can cancel if |mean|>>std)
        var = jnp.sum(zm * zm, axis=1, keepdims=True) * inv_n - m * m
        a = jax.lax.rsqrt(var + BN_EPS) * g_ref[...]    # folded BN scale
        c = be_ref[...] - m * a                         # folded BN shift
        return jnp.maximum(z * a + c, 0.0)

    h0 = jnp.sin(linear(w0_ref, b0_ref, x_ref[...]))    # omega_0 folded into w0/b0
    h1 = bn_relu(linear(w1_ref, b1_ref, h0), g1_ref, be1_ref)
    h2 = bn_relu(linear(w2_ref, b2_ref, h1), g2_ref, be2_ref)
    out_ref[...] = linear(wf_ref, bf_ref, h2)


# ----------------------------------------------------------------------------
# Tiled path: 3-phase grid over (phase, batch tile), optional VMEM z1/z2 cache.
# ----------------------------------------------------------------------------
def _make_tiled_kernel(*, n_valid, tile_n, n_tiles, cache_z):
    n_pad = n_tiles * tile_n
    mask_needed = n_valid != n_pad
    inv_n = 1.0 / float(n_valid)

    def kernel(x_ref, w0_ref, b0_ref, w1_ref, b1_ref, g1_ref, be1_ref,
               w2_ref, b2_ref, g2_ref, be2_ref, wf_ref, bf_ref,
               out_ref, *scratch):
        if cache_z:
            z1c_ref, z2c_ref, s1_ref, q1_ref, s2_ref, q2_ref = scratch
        else:
            z1c_ref = z2c_ref = None
            s1_ref, q1_ref, s2_ref, q2_ref = scratch

        phase = pl.program_id(0)    # 0: stats-1, 1: stats-2, 2: output
        j = pl.program_id(1)        # batch tile index

        def cols():
            return pl.ds(pl.multiple_of(j * tile_n, tile_n), tile_n)

        def linear(w_ref, b_ref, h):
            return jnp.dot(w_ref[...], h, preferred_element_type=jnp.float32) + b_ref[...]

        def sine0():
            return jnp.sin(linear(w0_ref, b0_ref, x_ref[...]))

        def scale_shift_relu(z, a_ref, c_ref):
            # BN folded to a single scale+shift (a, c produced by finalize()).
            return jnp.maximum(z * a_ref[...] + c_ref[...], 0.0)

        def accumulate(z, s_ref, q_ref):
            def add(zm):
                s_ref[...] += jnp.sum(zm, axis=1, keepdims=True)
                q_ref[...] += jnp.sum(zm * zm, axis=1, keepdims=True)

            if mask_needed:
                # Padded lanes only exist in the last tile -> mask only there.
                @pl.when(j == n_tiles - 1)
                def _():
                    lane = jax.lax.broadcasted_iota(jnp.int32, (1, tile_n), 1)
                    add(jnp.where(j * tile_n + lane < n_valid, z, 0.0))

                @pl.when(j != n_tiles - 1)
                def _():
                    add(z)
            else:
                add(z)

        def finalize(s_ref, q_ref, g_ref, be_ref):
            # After this, s_ref holds the BN scale and q_ref the BN shift.
            m = s_ref[...] * inv_n
            var = q_ref[...] * inv_n - m * m   # biased variance (matches reference)
            a = jax.lax.rsqrt(var + BN_EPS) * g_ref[...]
            s_ref[...] = a
            q_ref[...] = be_ref[...] - m * a

        # ---- phase 0: layer-1 pre-activation stats (+ optional z1 cache) ----
        @pl.when(phase == 0)
        def _():
            @pl.when(j == 0)
            def _():
                zero = jnp.zeros_like(s1_ref)
                s1_ref[...] = zero
                q1_ref[...] = zero
                s2_ref[...] = zero
                q2_ref[...] = zero

            z1 = linear(w1_ref, b1_ref, sine0())
            if cache_z:
                z1c_ref[:, cols()] = z1
            accumulate(z1, s1_ref, q1_ref)

            @pl.when(j == n_tiles - 1)
            def _():
                finalize(s1_ref, q1_ref, g1_ref, be1_ref)

        # ---- phase 1: layer-2 pre-activation stats (+ optional z2 cache) ----
        @pl.when(phase == 1)
        def _():
            z1 = z1c_ref[:, cols()] if cache_z else linear(w1_ref, b1_ref, sine0())
            z2 = linear(w2_ref, b2_ref, scale_shift_relu(z1, s1_ref, q1_ref))
            if cache_z:
                z2c_ref[:, cols()] = z2
            accumulate(z2, s2_ref, q2_ref)

            @pl.when(j == n_tiles - 1)
            def _():
                finalize(s2_ref, q2_ref, g2_ref, be2_ref)

        # ---- phase 2: normalize + final linear, emit the output tile ----
        @pl.when(phase == 2)
        def _():
            if cache_z:
                z2 = z2c_ref[:, cols()]
            else:
                h1 = scale_shift_relu(linear(w1_ref, b1_ref, sine0()), s1_ref, q1_ref)
                z2 = linear(w2_ref, b2_ref, h1)
            h2 = scale_shift_relu(z2, s2_ref, q2_ref)
            out_ref[...] = linear(wf_ref, bf_ref, h2)

    return kernel


# ----------------------------------------------------------------------------
# Parameters (PyTorch-matching init, omega_0 folded into the first layer)
# ----------------------------------------------------------------------------
def init_params(key, in_features, hidden_features, out_features):
    ks = jax.random.split(key, 8)

    def unif(k, shape, bound):
        return jax.random.uniform(k, shape, jnp.float32, -bound, bound)

    # SineLayer (is_first=True): weight ~ U(-1/in, 1/in); bias = nn.Linear default.
    w0 = unif(ks[0], (hidden_features, in_features), 1.0 / in_features)
    b0 = unif(ks[1], (hidden_features, 1), 1.0 / math.sqrt(in_features))
    # sin(w*(Wx+b)) == sin((wW)x + wb): fold omega_0 once at init.
    w0 = w0 * FIRST_OMEGA_0
    b0 = b0 * FIRST_OMEGA_0

    hb = 1.0 / math.sqrt(hidden_features)
    w1 = unif(ks[2], (hidden_features, hidden_features), hb)
    b1 = unif(ks[3], (hidden_features, 1), hb)
    g1 = jnp.ones((hidden_features, 1), jnp.float32)
    be1 = jnp.zeros((hidden_features, 1), jnp.float32)

    w2 = unif(ks[4], (hidden_features, hidden_features), hb)
    b2 = unif(ks[5], (hidden_features, 1), hb)
    g2 = jnp.ones((hidden_features, 1), jnp.float32)
    be2 = jnp.zeros((hidden_features, 1), jnp.float32)

    wf = unif(ks[6], (out_features, hidden_features), hb)
    bf = unif(ks[7], (out_features, 1), hb)

    return dict(w0=w0, b0=b0, w1=w1, b1=b1, g1=g1, be1=be1,
                w2=w2, b2=b2, g2=g2, be2=be2, wf=wf, bf=bf)


# ----------------------------------------------------------------------------
# Wrapper
# ----------------------------------------------------------------------------
def hybrid_siren_forward(x, params, *, tile_n=1024, path="auto"):
    """Matches HybridSiren.forward (training-mode BN with batch stats): (out, None)."""
    n, in_f = x.shape
    hidden = params["w1"].shape[0]
    out_f = params["wf"].shape[0]

    xt = x.T.astype(jnp.float32)            # (in_f, n): batch on the 128-wide lane axis

    weight_args = (
        params["w0"], params["b0"],
        params["w1"], params["b1"], params["g1"], params["be1"],
        params["w2"], params["b2"], params["g2"], params["be2"],
        params["wf"], params["bf"],
    )
    weight_bytes = sum(int(a.size) * 4 for a in weight_args)
    fwd_flops = 2 * n * (in_f * hidden + 2 * hidden * hidden + hidden * out_f)

    n_pad_min = max(128, ((n + 127) // 128) * 128)
    single_ok = (in_f + out_f + 8 * hidden) * 4 * n_pad_min <= _SINGLE_BLOCK_BUDGET
    if path == "auto":
        path = "single" if single_ok else "cached"

    # ---------------- single-block fast path ----------------
    if path == "single":
        n_pad = n_pad_min
        if n_pad != n:
            xt = jnp.pad(xt, ((0, 0), (0, n_pad - n)))

        kernel = functools.partial(_single_block_kernel, n_valid=n, n_pad=n_pad)
        cost = pl.CostEstimate(
            flops=int(fwd_flops),
            transcendentals=int(n * hidden),
            bytes_accessed=int(4 * n * (in_f + out_f)) + weight_bytes,
        )

        def const(a):
            return pl.BlockSpec(a.shape, lambda i: (0,) * a.ndim)

        out_t = pl.pallas_call(
            kernel,
            out_shape=jax.ShapeDtypeStruct((out_f, n_pad), jnp.float32),
            grid_spec=pltpu.PrefetchScalarGridSpec(
                num_scalar_prefetch=0,
                grid=(1,),
                in_specs=[pl.BlockSpec((in_f, n_pad), lambda i: (0, 0))]
                         + [const(a) for a in weight_args],
                out_specs=pl.BlockSpec((out_f, n_pad), lambda i: (0, 0)),
            ),
            compiler_params=pltpu.CompilerParams(
                dimension_semantics=("arbitrary",),
                vmem_limit_bytes=_VMEM_LIMIT),
            cost_estimate=cost,
        )(xt, *weight_args)
        return out_t[:, :n].T, None

    # ---------------- tiled 3-phase path ----------------
    tile_n = max(128, ((tile_n + 127) // 128) * 128)
    n_tiles = max(1, pl.cdiv(n, tile_n))
    n_pad = n_tiles * tile_n
    if n_pad != n:
        xt = jnp.pad(xt, ((0, 0), (0, n_pad - n)))

    if path == "cached":
        cache_z = 2 * hidden * n_pad * 4 <= _ZCACHE_BUDGET
    elif path == "recompute":
        cache_z = False
    else:
        raise ValueError(f"unknown path: {path}")
    # TODO(synk): for batches too large for a VMEM z-cache we fall back to recompute;
    # an HBM activation stash (extra output + input_output_aliases) would keep the
    # recompute savings at the cost of ~8*H bytes/sample of extra HBM traffic.

    stat_scratch = [pltpu.VMEM((hidden, 1), jnp.float32)] * 4
    if cache_z:
        scratch = [pltpu.VMEM((hidden, n_pad), jnp.float32)] * 2 + stat_scratch
    else:
        scratch = stat_scratch

    def const2(a):
        return pl.BlockSpec(a.shape, lambda p, j: (0,) * a.ndim)

    if cache_z:
        # x only needed in phase 0; park its block during phases 1/2 (no re-DMA).
        x_spec = pl.BlockSpec((in_f, tile_n), lambda p, j: (0, jnp.where(p == 0, j, 0)))
    else:
        x_spec = pl.BlockSpec((in_f, tile_n), lambda p, j: (0, j))
    in_specs = [x_spec] + [const2(a) for a in weight_args]

    # Output advances only in phase 2; phases 0/1 park on block 0 (never written in
    # the kernel, and phase 2 rewrites block 0 last, so this is safe even if the
    # pipeline were to write back revisited blocks).
    out_spec = pl.BlockSpec((out_f, tile_n), lambda p, j: (0, j * (p // 2)))

    cost = pl.CostEstimate(
        flops=int((1.3 if cache_z else 2.6) * fwd_flops),
        transcendentals=int((1 if cache_z else 3) * n * hidden),
        bytes_accessed=int(4 * n * (in_f * (1 if cache_z else 3) + out_f)) + weight_bytes,
    )

    kernel = _make_tiled_kernel(n_valid=n, tile_n=tile_n, n_tiles=n_tiles,
                                cache_z=cache_z)
    out_t = pl.pallas_call(
        kernel,
        out_shape=jax.ShapeDtypeStruct((out_f, n_pad), jnp.float32),
        grid_spec=pltpu.PrefetchScalarGridSpec(
            num_scalar_prefetch=0,
            grid=(3, n_tiles),
            in_specs=in_specs,
            out_specs=out_spec,
            scratch_shapes=scratch,
        ),
        # Whole-batch BN stats make the tile axis a sequential reduction.
        compiler_params=pltpu.CompilerParams(
            dimension_semantics=("arbitrary", "arbitrary"),
            vmem_limit_bytes=_VMEM_LIMIT),
        cost_estimate=cost,
    )(xt, *weight_args)

    return out_t[:, :n].T, None


# ----------------------------------------------------------------------------
# Pure-JAX reference (training-mode BN over the full batch)
# ----------------------------------------------------------------------------
def _reference_forward(x, params):
    hp = jax.lax.Precision.HIGHEST

    def dot(a, b):
        return jnp.dot(a, b, precision=hp)

    h = jnp.sin(dot(x, params["w0"].T) + params["b0"].T)   # omega_0 already folded

    def lin_bn_relu(h, w, b, g, be):
        z = dot(h, w.T) + b.T
        mu = jnp.mean(z, axis=0, keepdims=True)
        var = jnp.mean(z * z, axis=0, keepdims=True) - mu * mu
        zn = (z - mu) * jax.lax.rsqrt(var + BN_EPS) * g.T + be.T
        return jnp.maximum(zn, 0.0)

    h = lin_bn_relu(h, params["w1"], params["b1"], params["g1"], params["be1"])
    h = lin_bn_relu(h, params["w2"], params["b2"], params["g2"], params["be2"])
    return dot(h, params["wf"].T) + params["bf"].T


if __name__ == "__main__":
    key = jax.random.PRNGKey(0)
    k_x, k_p = jax.random.split(key)

    in_features = 4
    hidden_features = 32
    out_features = 4
    batch = 1000   # non-multiple of 128 -> exercises padded-lane masking

    x = jax.random.normal(k_x, (batch, in_features), jnp.float32)
    params = init_params(k_p, in_features, hidden_features, out_features)

    ref = _reference_forward(x, params)

    # 1) Auto path (single-block fast path at this size).
    out, aux = hybrid_siren_forward(x, params)
    out = jax.block_until_ready(out)
    assert out.shape == (batch, out_features)
    assert aux is None
    err = float(jnp.max(jnp.abs(out - ref)))
    assert jnp.allclose(out, ref, atol=3e-3, rtol=3e-3), err

    # 2) Tiled path with VMEM z1/z2 cache (forced; multi-tile + masked last tile).
    out_c, _ = hybrid_siren_forward(x, params, tile_n=256, path="cached")
    out_c = jax.block_until_ready(out_c)
    err_c = float(jnp.max(jnp.abs(out_c - ref)))
    assert jnp.allclose(out_c, ref, atol=3e-3, rtol=3e-3), err_c

    # 3) Tiled recompute fallback (forced; used only when the z-cache won't fit VMEM).
    out_r, _ = hybrid_siren_forward(x, params, tile_n=256, path="recompute")
    out_r = jax.block_until_ready(out_r)
    err_r = float(jnp.max(jnp.abs(out_r - ref)))
    assert jnp.allclose(out_r, ref, atol=3e-3, rtol=3e-3), err_r

    print("KERNEL_OK")
</pallas_src>

<mosaic_0001>
module attributes {stable_mosaic.version = 11 : i64} {
  func.func @_single_block_kernel(%arg0: i32, %arg1: memref<4x1024xf32, #tpu.memory_space<vmem>>, %arg2: memref<32x4xf32, #tpu.memory_space<vmem>>, %arg3: memref<32x1xf32, #tpu.memory_space<vmem>>, %arg4: memref<32x32xf32, #tpu.memory_space<vmem>>, %arg5: memref<32x1xf32, #tpu.memory_space<vmem>>, %arg6: memref<32x1xf32, #tpu.memory_space<vmem>>, %arg7: memref<32x1xf32, #tpu.memory_space<vmem>>, %arg8: memref<32x32xf32, #tpu.memory_space<vmem>>, %arg9: memref<32x1xf32, #tpu.memory_space<vmem>>, %arg10: memref<32x1xf32, #tpu.memory_space<vmem>>, %arg11: memref<32x1xf32, #tpu.memory_space<vmem>>, %arg12: memref<4x32xf32, #tpu.memory_space<vmem>>, %arg13: memref<4x1xf32, #tpu.memory_space<vmem>>, %arg14: memref<4x1024xf32, #tpu.memory_space<vmem>>) attributes {dimension_semantics = [#tpu.dimension_semantics<arbitrary>], iteration_bounds = array<i64: 1>, scalar_prefetch = 0 : i64, scratch_operands = 0 : i64, tpu.core_type = #tpu.core_type<tc>, window_params = [{pipeline_mode = #tpu.pipeline_mode<synchronous>, transform_indices = @transform_0, window_bounds = array<i64: 4, 1024>}, {pipeline_mode = #tpu.pipeline_mode<synchronous>, transform_indices = @transform_1, window_bounds = array<i64: 32, 4>}, {pipeline_mode = #tpu.pipeline_mode<synchronous>, transform_indices = @transform_2, window_bounds = array<i64: 32, 1>}, {pipeline_mode = #tpu.pipeline_mode<synchronous>, transform_indices = @transform_3, window_bounds = array<i64: 32, 32>}, {pipeline_mode = #tpu.pipeline_mode<synchronous>, transform_indices = @transform_4, window_bounds = array<i64: 32, 1>}, {pipeline_mode = #tpu.pipeline_mode<synchronous>, transform_indices = @transform_5, window_bounds = array<i64: 32, 1>}, {pipeline_mode = #tpu.pipeline_mode<synchronous>, transform_indices = @transform_6, window_bounds = array<i64: 32, 1>}, {pipeline_mode = #tpu.pipeline_mode<synchronous>, transform_indices = @transform_7, window_bounds = array<i64: 32, 32>}, {pipeline_mode = #tpu.pipeline_mode<synchronous>, transform_indices = @transform_8, window_bounds = array<i64: 32, 1>}, {pipeline_mode = #tpu.pipeline_mode<synchronous>, transform_indices = @transform_9, window_bounds = array<i64: 32, 1>}, {pipeline_mode = #tpu.pipeline_mode<synchronous>, transform_indices = @transform_10, window_bounds = array<i64: 32, 1>}, {pipeline_mode = #tpu.pipeline_mode<synchronous>, transform_indices = @transform_11, window_bounds = array<i64: 4, 32>}, {pipeline_mode = #tpu.pipeline_mode<synchronous>, transform_indices = @transform_12, window_bounds = array<i64: 4, 1>}, {pipeline_mode = #tpu.pipeline_mode<synchronous>, transform_indices = @transform_13, window_bounds = array<i64: 4, 1024>}]} {
    %0 = tpu.iota {dimensions = array<i32: 1>} : vector<1x1024xi32>
    %c1000_i32 = arith.constant 1000 : i32
    %1 = vector.broadcast %c1000_i32 : i32 to vector<1x1024xi32>
    %2 = arith.cmpi slt, %0, %1 : vector<1x1024xi32>
    %c0 = arith.constant 0 : index
    %c0_0 = arith.constant 0 : index
    %3 = vector.load %arg1[%c0, %c0_0] : memref<4x1024xf32, #tpu.memory_space<vmem>>, vector<4x1024xf32>
    %c0_1 = arith.constant 0 : index
    %c0_2 = arith.constant 0 : index
    %4 = vector.load %arg2[%c0_1, %c0_2] : memref<32x4xf32, #tpu.memory_space<vmem>>, vector<32x4xf32>
    %cst = arith.constant dense<0.000000e+00> : vector<32x1024xf32>
    %5 = tpu.matmul %4, %3, %cst {dimension_numbers = #tpu.dot_dimension_numbers<[1], [0], [0], [1], [0, 0, 1, 1], [], []>} : vector<32x4xf32>, vector<4x1024xf32>, vector<32x1024xf32> -> vector<32x1024xf32>
    %c0_3 = arith.constant 0 : index
    %c0_4 = arith.constant 0 : index
    %6 = vector.load %arg3[%c0_3, %c0_4] : memref<32x1xf32, #tpu.memory_space<vmem>>, vector<32x1xf32>
    %7 = vector.broadcast %6 : vector<32x1xf32> to vector<32x1024xf32>
    %8 = arith.addf %5, %7 : vector<32x1024xf32>
    %9 = math.sin %8 : vector<32x1024xf32>
    %c0_5 = arith.constant 0 : index
    %c0_6 = arith.constant 0 : index
    %10 = vector.load %arg4[%c0_5, %c0_6] : memref<32x32xf32, #tpu.memory_space<vmem>>, vector<32x32xf32>
    %cst_7 = arith.constant dense<0.000000e+00> : vector<32x1024xf32>
    %11 = tpu.matmul %10, %9, %cst_7 {dimension_numbers = #tpu.dot_dimension_numbers<[1], [0], [0], [1], [0, 0, 1, 1], [], []>} : vector<32x32xf32>, vector<32x1024xf32>, vector<32x1024xf32> -> vector<32x1024xf32>
    %c0_8 = arith.constant 0 : index
    %c0_9 = arith.constant 0 : index
    %12 = vector.load %arg5[%c0_8, %c0_9] : memref<32x1xf32, #tpu.memory_space<vmem>>, vector<32x1xf32>
    %13 = vector.broadcast %12 : vector<32x1xf32> to vector<32x1024xf32>
    %14 = arith.addf %11, %13 : vector<32x1024xf32>
    %cst_10 = arith.constant 0.000000e+00 : f32
    %15 = vector.shape_cast %2 : vector<1x1024xi1> to vector<1x1024xi1>
    %16 = vector.broadcast %15 : vector<1x1024xi1> to vector<32x1024xi1>
    %17 = vector.broadcast %cst_10 : f32 to vector<32x1024xf32>
    %18 = arith.select %16, %14, %17 : vector<32x1024xi1>, vector<32x1024xf32>
    %cst_11 = arith.constant dense<0.000000e+00> : vector<32xf32>
    %19 = vector.multi_reduction <add>, %18, %cst_11 [1] : vector<32x1024xf32> to vector<32xf32>
    %20 = vector.shape_cast %19 : vector<32xf32> to vector<32x1xf32>
    %cst_12 = arith.constant 1.000000e-03 : f32
    %21 = vector.broadcast %cst_12 : f32 to vector<32x1xf32>
    %22 = arith.mulf %20, %21 : vector<32x1xf32>
    %23 = arith.mulf %18, %18 : vector<32x1024xf32>
    %cst_13 = arith.constant dense<0.000000e+00> : vector<32xf32>
    %24 = vector.multi_reduction <add>, %23, %cst_13 [1] : vector<32x1024xf32> to vector<32xf32>
    %25 = vector.shape_cast %24 : vector<32xf32> to vector<32x1xf32>
    %cst_14 = arith.constant 1.000000e-03 : f32
    %26 = vector.broadcast %cst_14 : f32 to vector<32x1xf32>
    %27 = arith.mulf %25, %26 : vector<32x1xf32>
    %28 = arith.mulf %22, %22 : vector<32x1xf32>
    %29 = arith.subf %27, %28 : vector<32x1xf32>
    %cst_15 = arith.constant 9.99999974E-6 : f32
    %30 = vector.broadcast %cst_15 : f32 to vector<32x1xf32>
    %31 = arith.addf %29, %30 : vector<32x1xf32>
    %32 = math.rsqrt %31 : vector<32x1xf32>
    %c0_16 = arith.constant 0 : index
    %c0_17 = arith.constant 0 : index
    %33 = vector.load %arg6[%c0_16, %c0_17] : memref<32x1xf32, #tpu.memory_space<vmem>>, vector<32x1xf32>
    %34 = arith.mulf %32, %33 : vector<32x1xf32>
    %c0_18 = arith.constant 0 : index
    %c0_19 = arith.constant 0 : index
    %35 = vector.load %arg7[%c0_18, %c0_19] : memref<32x1xf32, #tpu.memory_space<vmem>>, vector<32x1xf32>
    %36 = arith.mulf %22, %34 : vector<32x1xf32>
    %37 = arith.subf %35, %36 : vector<32x1xf32>
    %38 = vector.broadcast %34 : vector<32x1xf32> to vector<32x1024xf32>
    %39 = arith.mulf %14, %38 : vector<32x1024xf32>
    %40 = vector.broadcast %37 : vector<32x1xf32> to vector<32x1024xf32>
    %41 = arith.addf %39, %40 : vector<32x1024xf32>
    %cst_20 = arith.constant 0.000000e+00 : f32
    %42 = vector.broadcast %cst_20 : f32 to vector<32x1024xf32>
    %43 = arith.maximumf %41, %42 : vector<32x1024xf32>
    %c0_21 = arith.constant 0 : index
    %c0_22 = arith.constant 0 : index
    %44 = vector.load %arg8[%c0_21, %c0_22] : memref<32x32xf32, #tpu.memory_space<vmem>>, vector<32x32xf32>
    %cst_23 = arith.constant dense<0.000000e+00> : vector<32x1024xf32>
    %45 = tpu.matmul %44, %43, %cst_23 {dimension_numbers = #tpu.dot_dimension_numbers<[1], [0], [0], [1], [0, 0, 1, 1], [], []>} : vector<32x32xf32>, vector<32x1024xf32>, vector<32x1024xf32> -> vector<32x1024xf32>
    %c0_24 = arith.constant 0 : index
    %c0_25 = arith.constant 0 : index
    %46 = vector.load %arg9[%c0_24, %c0_25] : memref<32x1xf32, #tpu.memory_space<vmem>>, vector<32x1xf32>
    %47 = vector.broadcast %46 : vector<32x1xf32> to vector<32x1024xf32>
    %48 = arith.addf %45, %47 : vector<32x1024xf32>
    %cst_26 = arith.constant 0.000000e+00 : f32
    %49 = vector.shape_cast %2 : vector<1x1024xi1> to vector<1x1024xi1>
    %50 = vector.broadcast %49 : vector<1x1024xi1> to vector<32x1024xi1>
    %51 = vector.broadcast %cst_26 : f32 to vector<32x1024xf32>
    %52 = arith.select %50, %48, %51 : vector<32x1024xi1>, vector<32x1024xf32>
    %cst_27 = arith.constant dense<0.000000e+00> : vector<32xf32>
    %53 = vector.multi_reduction <add>, %52, %cst_27 [1] : vector<32x1024xf32> to vector<32xf32>
    %54 = vector.shape_cast %53 : vector<32xf32> to vector<32x1xf32>
    %cst_28 = arith.constant 1.000000e-03 : f32
    %55 = vector.broadcast %cst_28 : f32 to vector<32x1xf32>
    %56 = arith.mulf %54, %55 : vector<32x1xf32>
    %57 = arith.mulf %52, %52 : vector<32x1024xf32>
    %cst_29 = arith.constant dense<0.000000e+00> : vector<32xf32>
    %58 = vector.multi_reduction <add>, %57, %cst_29 [1] : vector<32x1024xf32> to vector<32xf32>
    %59 = vector.shape_cast %58 : vector<32xf32> to vector<32x1xf32>
    %cst_30 = arith.constant 1.000000e-03 : f32
    %60 = vector.broadcast %cst_30 : f32 to vector<32x1xf32>
    %61 = arith.mulf %59, %60 : vector<32x1xf32>
    %62 = arith.mulf %56, %56 : vector<32x1xf32>
    %63 = arith.subf %61, %62 : vector<32x1xf32>
    %cst_31 = arith.constant 9.99999974E-6 : f32
    %64 = vector.broadcast %cst_31 : f32 to vector<32x1xf32>
    %65 = arith.addf %63, %64 : vector<32x1xf32>
    %66 = math.rsqrt %65 : vector<32x1xf32>
    %c0_32 = arith.constant 0 : index
    %c0_33 = arith.constant 0 : index
    %67 = vector.load %arg10[%c0_32, %c0_33] : memref<32x1xf32, #tpu.memory_space<vmem>>, vector<32x1xf32>
    %68 = arith.mulf %66, %67 : vector<32x1xf32>
    %c0_34 = arith.constant 0 : index
    %c0_35 = arith.constant 0 : index
    %69 = vector.load %arg11[%c0_34, %c0_35] : memref<32x1xf32, #tpu.memory_space<vmem>>, vector<32x1xf32>
    %70 = arith.mulf %56, %68 : vector<32x1xf32>
    %71 = arith.subf %69, %70 : vector<32x1xf32>
    %72 = vector.broadcast %68 : vector<32x1xf32> to vector<32x1024xf32>
    %73 = arith.mulf %48, %72 : vector<32x1024xf32>
    %74 = vector.broadcast %71 : vector<32x1xf32> to vector<32x1024xf32>
    %75 = arith.addf %73, %74 : vector<32x1024xf32>
    %cst_36 = arith.constant 0.000000e+00 : f32
    %76 = vector.broadcast %cst_36 : f32 to vector<32x1024xf32>
    %77 = arith.maximumf %75, %76 : vector<32x1024xf32>
    %c0_37 = arith.constant 0 : index
    %c0_38 = arith.constant 0 : index
    %78 = vector.load %arg12[%c0_37, %c0_38] : memref<4x32xf32, #tpu.memory_space<vmem>>, vector<4x32xf32>
    %cst_39 = arith.constant dense<0.000000e+00> : vector<4x1024xf32>
    %79 = tpu.matmul %78, %77, %cst_39 {dimension_numbers = #tpu.dot_dimension_numbers<[1], [0], [0], [1], [0, 0, 1, 1], [], []>} : vector<4x32xf32>, vector<32x1024xf32>, vector<4x1024xf32> -> vector<4x1024xf32>
    %c0_40 = arith.constant 0 : index
    %c0_41 = arith.constant 0 : index
    %80 = vector.load %arg13[%c0_40, %c0_41] : memref<4x1xf32, #tpu.memory_space<vmem>>, vector<4x1xf32>
    %81 = vector.broadcast %80 : vector<4x1xf32> to vector<4x1024xf32>
    %82 = arith.addf %79, %81 : vector<4x1024xf32>
    %c0_42 = arith.constant 0 : index
    %c0_43 = arith.constant 0 : index
    %83 = vector.load %arg14[%c0_42, %c0_43] : memref<4x1024xf32, #tpu.memory_space<vmem>>, vector<4x1024xf32>
    tpu.vector_store %arg14[%c0_42, %c0_43], %82 {strides = array<i32>} : memref<4x1024xf32, #tpu.memory_space<vmem>>, vector<4x1024xf32>,
    return
  }
  func.func @transform_0(%arg0: i32) -> (i32, i32) {
    %c0_i32 = arith.constant 0 : i32
    %c0_i32_0 = arith.constant 0 : i32
    %c0_i32_1 = arith.constant 0 : i32
    return %c0_i32, %c0_i32_0 : i32, i32
  }
  func.func @transform_1(%arg0: i32) -> (i32, i32) {
    %c0_i32 = arith.constant 0 : i32
    %c0_i32_0 = arith.constant 0 : i32
    %c0_i32_1 = arith.constant 0 : i32
    return %c0_i32, %c0_i32_0 : i32, i32
  }
  func.func @transform_2(%arg0: i32) -> (i32, i32) {
    %c0_i32 = arith.constant 0 : i32
    %c0_i32_0 = arith.constant 0 : i32
    %c0_i32_1 = arith.constant 0 : i32
    return %c0_i32, %c0_i32_0 : i32, i32
  }
  func.func @transform_3(%arg0: i32) -> (i32, i32) {
    %c0_i32 = arith.constant 0 : i32
    %c0_i32_0 = arith.constant 0 : i32
    %c0_i32_1 = arith.constant 0 : i32
    return %c0_i32, %c0_i32_0 : i32, i32
  }
  func.func @transform_4(%arg0: i32) -> (i32, i32) {
    %c0_i32 = arith.constant 0 : i32
    %c0_i32_0 = arith.constant 0 : i32
    %c0_i32_1 = arith.constant 0 : i32
    return %c0_i32, %c0_i32_0 : i32, i32
  }
  func.func @transform_5(%arg0: i32) -> (i32, i32) {
    %c0_i32 = arith.constant 0 : i32
    %c0_i32_0 = arith.constant 0 : i32
    %c0_i32_1 = arith.constant 0 : i32
    return %c0_i32, %c0_i32_0 : i32, i32
  }
  func.func @transform_6(%arg0: i32) -> (i32, i32) {
    %c0_i32 = arith.constant 0 : i32
    %c0_i32_0 = arith.constant 0 : i32
    %c0_i32_1 = arith.constant 0 : i32
    return %c0_i32, %c0_i32_0 : i32, i32
  }
  func.func @transform_7(%arg0: i32) -> (i32, i32) {
    %c0_i32 = arith.constant 0 : i32
    %c0_i32_0 = arith.constant 0 : i32
    %c0_i32_1 = arith.constant 0 : i32
    return %c0_i32, %c0_i32_0 : i32, i32
  }
  func.func @transform_8(%arg0: i32) -> (i32, i32) {
    %c0_i32 = arith.constant 0 : i32
    %c0_i32_0 = arith.constant 0 : i32
    %c0_i32_1 = arith.constant 0 : i32
    return %c0_i32, %c0_i32_0 : i32, i32
  }
  func.func @transform_9(%arg0: i32) -> (i32, i32) {
    %c0_i32 = arith.constant 0 : i32
    %c0_i32_0 = arith.constant 0 : i32
    %c0_i32_1 = arith.constant 0 : i32
    return %c0_i32, %c0_i32_0 : i32, i32
  }
  func.func @transform_10(%arg0: i32) -> (i32, i32) {
    %c0_i32 = arith.constant 0 : i32
    %c0_i32_0 = arith.constant 0 : i32
    %c0_i32_1 = arith.constant 0 : i32
    return %c0_i32, %c0_i32_0 : i32, i32
  }
  func.func @transform_11(%arg0: i32) -> (i32, i32) {
    %c0_i32 = arith.constant 0 : i32
    %c0_i32_0 = arith.constant 0 : i32
    %c0_i32_1 = arith.constant 0 : i32
    return %c0_i32, %c0_i32_0 : i32, i32
  }
  func.func @transform_12(%arg0: i32) -> (i32, i32) {
    %c0_i32 = arith.constant 0 : i32
    %c0_i32_0 = arith.constant 0 : i32
    %c0_i32_1 = arith.constant 0 : i32
    return %c0_i32, %c0_i32_0 : i32, i32
  }
  func.func @transform_13(%arg0: i32) -> (i32, i32) {
    %c0_i32 = arith.constant 0 : i32
    %c0_i32_0 = arith.constant 0 : i32
    %c0_i32_1 = arith.constant 0 : i32
    return %c0_i32, %c0_i32_0 : i32, i32
  }
}

</mosaic_0001>

<llo_original>
// kernel: tpu_custom_call.1
$region0: #{tpu_custom_call.1}
  #allocation0 [shape = 'u32[]', space=smem, size = 0x4, offset = 0x4, fixed_abs, tag = 'smem constant byte address 0x4 - core index']
  #allocation1 [shape = 'u32[144,128]{1,0:T(1,128)}', space=vmem, size = 0x12000, scoped, tag = 'internal scratch']
  %s0 = inlined_call_operand.vmem [shape: f32[4,1024], index: 0, kind: input, shape index: {}]
  %s1 = inlined_call_operand.vmem [shape: f32[32,4], index: 1, kind: input, shape index: {}]
  %s2 = inlined_call_operand.vmem [shape: f32[32,1], index: 2, kind: input, shape index: {}]
  %s3 = inlined_call_operand.vmem [shape: f32[32,32], index: 3, kind: input, shape index: {}]
  %s4 = inlined_call_operand.vmem [shape: f32[32,1], index: 4, kind: input, shape index: {}]
  %s5 = inlined_call_operand.vmem [shape: f32[32,1], index: 5, kind: input, shape index: {}]
  %s6 = inlined_call_operand.vmem [shape: f32[32,1], index: 6, kind: input, shape index: {}]
  %s7 = inlined_call_operand.vmem [shape: f32[32,32], index: 7, kind: input, shape index: {}]
  %s8 = inlined_call_operand.vmem [shape: f32[32,1], index: 8, kind: input, shape index: {}]
  %s9 = inlined_call_operand.vmem [shape: f32[32,1], index: 9, kind: input, shape index: {}]
  %s10 = inlined_call_operand.vmem [shape: f32[32,1], index: 10, kind: input, shape index: {}]
  %s11 = inlined_call_operand.vmem [shape: f32[4,32], index: 11, kind: input, shape index: {}]
  %s12 = inlined_call_operand.vmem [shape: f32[4,1], index: 12, kind: input, shape index: {}]
  %s13 = inlined_call_operand.hbm [shape: f32[4,1024], index: 13, kind: output, shape index: {}]
  %s14 = sld [smem:[#allocation0]]
  $region62: #{tpu_custom_call.1} parent=0
    _
  %s16 = ssub.s32 1, %s14
  %s17 = scalar_select 0, %s16, %s14
  $region1: #{tpu_custom_call.1} parent=0
    #allocation2 [shape = 'u8[16384]{0}', space=vmem, size = 0x4000, scoped, tag = 'output window, operand 0, single buffered']
    #allocation3 [shape = 's32[1]{0}', space=sflag, size = 0x4, scoped, tag = 'scoped memory for tpu_custom_call.1']
    %18 = vsyncpa [#allocation3], 0
    // Predicated region
    $region2: #{tpu_custom_call.1} parent=1 // pred_check
      _
    $region3: #{tpu_custom_call.1} parent=1 // pred_check_branch
      %20 = sbr.rel (0) target = $region5
    $region4: #{tpu_custom_call.1} parent=1 // pred_region
      _
    $region5: #{tpu_custom_call.1} parent=1 // pred_fallthru
      _
    // Predicated region
    $region6: #{tpu_custom_call.1} parent=1 // pred_check
      _
    $region7: #{tpu_custom_call.1} parent=1 // pred_check_branch
      %22 = sbr.rel (0) target = $region9
    $region8: #{tpu_custom_call.1} parent=1 // pred_region
      _
    $region9: #{tpu_custom_call.1} parent=1 // pred_fallthru
      _
    // Predicated region
    $region10: #{tpu_custom_call.1} parent=1 // pred_check
      _
    $region11: #{tpu_custom_call.1} parent=1 // pred_check_branch
      %24 = sbr.rel (0) target = $region13
    $region12: #{tpu_custom_call.1} parent=1 // pred_region
      _
    $region13: #{tpu_custom_call.1} parent=1 // pred_fallthru
      _
    // Predicated region
    $region14: #{tpu_custom_call.1} parent=1 // pred_check
      _
    $region15: #{tpu_custom_call.1} parent=1 // pred_check_branch
      %26 = sbr.rel (0) target = $region17
    $region16: #{tpu_custom_call.1} parent=1 // pred_region
      _
    $region17: #{tpu_custom_call.1} parent=1 // pred_fallthru
      _
    // Predicated region
    $region18: #{tpu_custom_call.1} parent=1 // pred_check
      _
    $region19: #{tpu_custom_call.1} parent=1 // pred_check_branch
      %28 = sbr.rel (0) target = $region21
    $region20: #{tpu_custom_call.1} parent=1 // pred_region
      _
    $region21: #{tpu_custom_call.1} parent=1 // pred_fallthru
      _
    // Predicated region
    $region22: #{tpu_custom_call.1} parent=1 // pred_check
      _
    $region23: #{tpu_custom_call.1} parent=1 // pred_check_branch
      %30 = sbr.rel (0) target = $region25
    $region24: #{tpu_custom_call.1} parent=1 // pred_region
      _
    $region25: #{tpu_custom_call.1} parent=1 // pred_fallthru
      _
    // Predicated region
    $region26: #{tpu_custom_call.1} parent=1 // pred_check
      _
    $region27: #{tpu_custom_call.1} parent=1 // pred_check_branch
      %32 = sbr.rel (0) target = $region29
    $region28: #{tpu_custom_call.1} parent=1 // pred_region
      _
    $region29: #{tpu_custom_call.1} parent=1 // pred_fallthru
      _
    // Predicated region
    $region30: #{tpu_custom_call.1} parent=1 // pred_check
      _
    $region31: #{tpu_custom_call.1} parent=1 // pred_check_branch
      %34 = sbr.rel (0) target = $region33
    $region32: #{tpu_custom_call.1} parent=1 // pred_region
      _
    $region33: #{tpu_custom_call.1} parent=1 // pred_fallthru
      _
    // Predicated region
    $region34: #{tpu_custom_call.1} parent=1 // pred_check
      _
    $region35: #{tpu_custom_call.1} parent=1 // pred_check_branch
      %36 = sbr.rel (0) target = $region37
    $region36: #{tpu_custom_call.1} parent=1 // pred_region
      _
    $region37: #{tpu_custom_call.1} parent=1 // pred_fallthru
      _
    // Predicated region
    $region38: #{tpu_custom_call.1} parent=1 // pred_check
      _
    $region39: #{tpu_custom_call.1} parent=1 // pred_check_branch
      %38 = sbr.rel (0) target = $region41
    $region40: #{tpu_custom_call.1} parent=1 // pred_region
      _
    $region41: #{tpu_custom_call.1} parent=1 // pred_fallthru
      _
    // Predicated region
    $region42: #{tpu_custom_call.1} parent=1 // pred_check
      _
    $region43: #{tpu_custom_call.1} parent=1 // pred_check_branch
      %40 = sbr.rel (0) target = $region45
    $region44: #{tpu_custom_call.1} parent=1 // pred_region
      _
    $region45: #{tpu_custom_call.1} parent=1 // pred_fallthru
      _
    // Predicated region
    $region46: #{tpu_custom_call.1} parent=1 // pred_check
      _
    $region47: #{tpu_custom_call.1} parent=1 // pred_check_branch
      %42 = sbr.rel (0) target = $region49
    $region48: #{tpu_custom_call.1} parent=1 // pred_region
      _
    $region49: #{tpu_custom_call.1} parent=1 // pred_fallthru
      _
    // Predicated region
    $region50: #{tpu_custom_call.1} parent=1 // pred_check
      _
    $region51: #{tpu_custom_call.1} parent=1 // pred_check_branch
      %44 = sbr.rel (0) target = $region53
    $region52: #{tpu_custom_call.1} parent=1 // pred_region
      _
    $region53: #{tpu_custom_call.1} parent=1 // pred_fallthru
      _
    %v45 = vlaneseq
    %v46 = vand.u32 %v45, 127
    %v47 = vadd.s32 %v46, 128
    %v48 = vadd.s32 %v46, 256
    %v49 = vadd.s32 %v46, 384
    %v50 = vadd.s32 %v46, 512
    %v51 = vadd.s32 %v46, 640
    %v52 = vadd.s32 %v46, 768
    %v53 = vadd.s32 %v46, 896
    %vm54 = vcmp.lt.s32.totalorder %v46, 1000
    %vm55 = vcmp.lt.s32.totalorder %v47, 1000
    %vm56 = vcmp.lt.s32.totalorder %v48, 1000
    %vm57 = vcmp.lt.s32.totalorder %v49, 1000
    %vm58 = vcmp.lt.s32.totalorder %v50, 1000
    %vm59 = vcmp.lt.s32.totalorder %v51, 1000
    %vm60 = vcmp.lt.s32.totalorder %v52, 1000
    %vm61 = vcmp.lt.s32.totalorder %v53, 1000
    %v62 = vld [vmem:[%s0] sm:$0xff]
    %v63 = vld [vmem:[%s0 + $0x8] sm:$0xff]
    %v64 = vld [vmem:[%s0 + $0x10] sm:$0xff]
    %v65 = vld [vmem:[%s0 + $0x18] sm:$0xff]
    %v66 = vld [vmem:[%s1] sm:$0xff]
    %v67 = vld [vmem:[%s1 + $0x8] sm:$0xff]
    %v68 = vld [vmem:[%s1 + $0x10] sm:$0xff]
    %v69 = vld [vmem:[%s1 + $0x18] sm:$0xff]
    %v70 = vld [vmem:[%s2] sm:$0xff]
    %v71 = vld [vmem:[%s2 + $0x8] sm:$0xff]
    %v72 = vld [vmem:[%s2 + $0x10] sm:$0xff]
    %v73 = vld [vmem:[%s2 + $0x18] sm:$0xff]
    %75 = vset.pattern.permute.xlu0 0
    %76 = vperm.xlu0 %75, %v70
    %v77 = vpop.permute.xlu0 %76
    %80 = vset.pattern.permute.xlu0 0
    %81 = vperm.xlu0 %80, %v71
    %v82 = vpop.permute.xlu0 %81
    %85 = vset.pattern.permute.xlu0 0
    %86 = vperm.xlu0 %85, %v72
    %v87 = vpop.permute.xlu0 %86
    %90 = vset.pattern.permute.xlu0 0
    %91 = vperm.xlu0 %90, %v73
    %v92 = vpop.permute.xlu0 %91
    %v98 = vcombine.high %v62, %v62
    %v99 = vcombine.high %v63, %v63
    %v100 = vcombine.high %v64, %v64
    %v101 = vcombine.high %v65, %v65
    %vm102 = vcmask 31744
    %v104 = vsel %vm102, %v66, 0
    %v107 = vsel %vm102, %v67, 0
    %v110 = vsel %vm102, %v68, 0
    %v113 = vsel %vm102, %v69, 0
    %vm115 = vcmask 1043456
    %v116 = vsel %vm115, %v62, 0
    %v118 = vsel %vm115, %v98, 0
    %v120 = vsel %vm115, %v63, 0
    %v122 = vsel %vm115, %v99, 0
    %v124 = vsel %vm115, %v64, 0
    %v126 = vsel %vm115, %v100, 0
    %v128 = vsel %vm115, %v65, 0
    %v130 = vsel %vm115, %v101, 0
    %132 = vmatprep.subr.mxu0 0.0
    %133 = vmatpush1.msra.mxu0 0.0
    %134 = vmatprep.subr.mxu0 0.0
    %135 = vmatpush1.msra.mxu0 0.0
    %136 = vmatprep.subr.mxu0 0.0
    %137 = vmatpush1.msra.mxu0 0.0
    %138 = vmatprep.subr.mxu0 0.0
    %139 = vmatpush1.msra.mxu0 0.0
    %140 = vmatprep.subr.mxu0 0.0
    %141 = vmatpush1.msra.mxu0 0.0
    %142 = vmatprep.subr.mxu0 0.0
    %143 = vmatpush1.msra.mxu0 0.0
    %144 = vmatprep.subr.mxu0 0.0
    %145 = vmatpush1.msra.mxu0 0.0
    %146 = vmatprep.subr.mxu0 0.0
    %147 = vmatpush1.msra.mxu0 0.0
    %148 = vmatprep.subr.mxu0 0.0
    %149 = vmatpush1.msra.mxu0 0.0
    %150 = vmatprep.subr.mxu0 0.0
    %151 = vmatpush1.msra.mxu0 0.0
    %152 = vmatprep.subr.mxu0 0.0
    %153 = vmatpush1.msra.mxu0 0.0
    %154 = vmatprep.subr.mxu0 0.0
    %155 = vmatpush1.msra.mxu0 0.0
    %156 = vmatprep.subr.mxu0 0.0
    %157 = vmatpush1.msra.mxu0 0.0
    %158 = vmatprep.subr.mxu0 0.0
    %159 = vmatpush1.msra.mxu0 0.0
    %160 = vmatprep.subr.mxu0 0.0
    %161 = vmatpush1.msra.mxu0 0.0
    %162 = vmatprep.subr.mxu0 %v118
    %163 = vmatpush1.msra.mxu0 %v116
    %164 = vmatprep.subr.mxu0 0.0
    %165 = vmatpush2.msra.mxu0 0.0
    %166 = vmatprep.subr.mxu0 0.0
    %167 = vmatpush2.msra.mxu0 0.0
    %168 = vmatprep.subr.mxu0 0.0
    %169 = vmatpush2.msra.mxu0 0.0
    %170 = vmatprep.subr.mxu0 0.0
    %171 = vmatpush2.msra.mxu0 0.0
    %172 = vmatprep.subr.mxu0 0.0
    %173 = vmatpush2.msra.mxu0 0.0
    %174 = vmatprep.subr.mxu0 0.0
    %175 = vmatpush2.msra.mxu0 0.0
    %176 = vmatprep.subr.mxu0 0.0
    %177 = vmatpush2.msra.mxu0 0.0
    %178 = vmatprep.subr.mxu0 0.0
    %179 = vmatpush2.msra.mxu0 0.0
    %180 = vmatprep.subr.mxu0 0.0
    %181 = vmatpush2.msra.mxu0 0.0
    %182 = vmatprep.subr.mxu0 0.0
    %183 = vmatpush2.msra.mxu0 0.0
    %184 = vmatprep.subr.mxu0 0.0
    %185 = vmatpush2.msra.mxu0 0.0
    %186 = vmatprep.subr.mxu0 0.0
    %187 = vmatpush2.msra.mxu0 0.0
    %188 = vmatprep.subr.mxu0 0.0
    %189 = vmatpush2.msra.mxu0 0.0
    %190 = vmatprep.subr.mxu0 0.0
    %191 = vmatpush2.msra.mxu0 0.0
    %192 = vmatprep.subr.mxu0 0.0
    %193 = vmatpush2.msra.mxu0 0.0
    %194 = vmatprep.subr.mxu0 0.0
    %195 = vmatpush2.msra.mxu0 0.0
    %196 = vmatprep.mubr.f32.mxu0 0.0
    %197 = vmatmul.mubr.f32.gmra.mxu0 %v104
    %v198 = vpop.f32.mrf.mxu0
    %v199 = vadd.f32 %v77, %v198
    %v200 = vpop.f32.mrf.mxu0
    %v201 = vadd.f32 %v77, %v200
    %202 = vmatprep.mubr.f32.mxu0 0.0
    %203 = vmatmul.mubr.f32.gmra.mxu0 %v107
    %v204 = vpop.f32.mrf.mxu0
    %v205 = vadd.f32 %v82, %v204
    %v206 = vpop.f32.mrf.mxu0
    %v207 = vadd.f32 %v82, %v206
    %208 = vmatprep.mubr.f32.mxu0 0.0
    %209 = vmatmul.mubr.f32.gmra.mxu0 %v110
    %v210 = vpop.f32.mrf.mxu0
    %v211 = vadd.f32 %v87, %v210
    %v212 = vpop.f32.mrf.mxu0
    %v213 = vadd.f32 %v87, %v212
    %214 = vmatprep.mubr.f32.mxu0 0.0
    %215 = vmatmul.mubr.f32.gmra.mxu0 %v113
    %v216 = vpop.f32.mrf.mxu0
    %v217 = vadd.f32 %v92, %v216
    %v218 = vpop.f32.mrf.mxu0
    %v219 = vadd.f32 %v92, %v218
    %220 = vdwg.mxu0
    %221 = vmatprep.subr.mxu0 0.0
    %222 = vmatpush1.msra.mxu0 0.0
    %223 = vmatprep.subr.mxu0 0.0
    %224 = vmatpush1.msra.mxu0 0.0
    %225 = vmatprep.subr.mxu0 0.0
    %226 = vmatpush1.msra.mxu0 0.0
    %227 = vmatprep.subr.mxu0 0.0
    %228 = vmatpush1.msra.mxu0 0.0
    %229 = vmatprep.subr.mxu0 0.0
    %230 = vmatpush1.msra.mxu0 0.0
    %231 = vmatprep.subr.mxu0 0.0
    %232 = vmatpush1.msra.mxu0 0.0
    %233 = vmatprep.subr.mxu0 0.0
    %234 = vmatpush1.msra.mxu0 0.0
    %235 = vmatprep.subr.mxu0 0.0
    %236 = vmatpush1.msra.mxu0 0.0
    %237 = vmatprep.subr.mxu0 0.0
    %238 = vmatpush1.msra.mxu0 0.0
    %239 = vmatprep.subr.mxu0 0.0
    %240 = vmatpush1.msra.mxu0 0.0
    %241 = vmatprep.subr.mxu0 0.0
    %242 = vmatpush1.msra.mxu0 0.0
    %243 = vmatprep.subr.mxu0 0.0
    %244 = vmatpush1.msra.mxu0 0.0
    %245 = vmatprep.subr.mxu0 0.0
    %246 = vmatpush1.msra.mxu0 0.0
    %247 = vmatprep.subr.mxu0 0.0
    %248 = vmatpush1.msra.mxu0 0.0
    %249 = vmatprep.subr.mxu0 0.0
    %250 = vmatpush1.msra.mxu0 0.0
    %251 = vmatprep.subr.mxu0 %v122
    %252 = vmatpush1.msra.mxu0 %v120
    %253 = vmatprep.subr.mxu0 0.0
    %254 = vmatpush2.msra.mxu0 0.0
    %255 = vmatprep.subr.mxu0 0.0
    %256 = vmatpush2.msra.mxu0 0.0
    %257 = vmatprep.subr.mxu0 0.0
    %258 = vmatpush2.msra.mxu0 0.0
    %259 = vmatprep.subr.mxu0 0.0
    %260 = vmatpush2.msra.mxu0 0.0
    %261 = vmatprep.subr.mxu0 0.0
    %262 = vmatpush2.msra.mxu0 0.0
    %263 = vmatprep.subr.mxu0 0.0
    %264 = vmatpush2.msra.mxu0 0.0
    %265 = vmatprep.subr.mxu0 0.0
    %266 = vmatpush2.msra.mxu0 0.0
    %267 = vmatprep.subr.mxu0 0.0
    %268 = vmatpush2.msra.mxu0 0.0
    %269 = vmatprep.subr.mxu0 0.0
    %270 = vmatpush2.msra.mxu0 0.0
    %271 = vmatprep.subr.mxu0 0.0
    %272 = vmatpush2.msra.mxu0 0.0
    %273 = vmatprep.subr.mxu0 0.0
    %274 = vmatpush2.msra.mxu0 0.0
    %275 = vmatprep.subr.mxu0 0.0
    %276 = vmatpush2.msra.mxu0 0.0
    %277 = vmatprep.subr.mxu0 0.0
    %278 = vmatpush2.msra.mxu0 0.0
    %279 = vmatprep.subr.mxu0 0.0
    %280 = vmatpush2.msra.mxu0 0.0
    %281 = vmatprep.subr.mxu0 0.0
    %282 = vmatpush2.msra.mxu0 0.0
    %283 = vmatprep.subr.mxu0 0.0
    %284 = vmatpush2.msra.mxu0 0.0
    %285 = vmatprep.mubr.f32.mxu0 0.0
    %286 = vmatmul.mubr.f32.gmra.mxu0 %v104
    %v287 = vpop.f32.mrf.mxu0
    %v288 = vadd.f32 %v77, %v287
    %v289 = vpop.f32.mrf.mxu0
    %v290 = vadd.f32 %v77, %v289
    %291 = vmatprep.mubr.f32.mxu0 0.0
    %292 = vmatmul.mubr.f32.gmra.mxu0 %v107
    %v293 = vpop.f32.mrf.mxu0
    %v294 = vadd.f32 %v82, %v293
    %v295 = vpop.f32.mrf.mxu0
    %v296 = vadd.f32 %v82, %v295
    %297 = vmatprep.mubr.f32.mxu0 0.0
    %298 = vmatmul.mubr.f32.gmra.mxu0 %v110
    %v299 = vpop.f32.mrf.mxu0
    %v300 = vadd.f32 %v87, %v299
    %v301 = vpop.f32.mrf.mxu0
    %v302 = vadd.f32 %v87, %v301
    %303 = vmatprep.mubr.f32.mxu0 0.0
    %304 = vmatmul.mubr.f32.gmra.mxu0 %v113
    %v305 = vpop.f32.mrf.mxu0
    %v306 = vadd.f32 %v92, %v305
    %v307 = vpop.f32.mrf.mxu0
    %v308 = vadd.f32 %v92, %v307
    %309 = vdwg.mxu0
    %310 = vmatprep.subr.mxu0 0.0
    %311 = vmatpush1.msra.mxu0 0.0
    %312 = vmatprep.subr.mxu0 0.0
    %313 = vmatpush1.msra.mxu0 0.0
    %314 = vmatprep.subr.mxu0 0.0
    %315 = vmatpush1.msra.mxu0 0.0
    %316 = vmatprep.subr.mxu0 0.0
    %317 = vmatpush1.msra.mxu0 0.0
    %318 = vmatprep.subr.mxu0 0.0
    %319 = vmatpush1.msra.mxu0 0.0
    %320 = vmatprep.subr.mxu0 0.0
    %321 = vmatpush1.msra.mxu0 0.0
    %322 = vmatprep.subr.mxu0 0.0
    %323 = vmatpush1.msra.mxu0 0.0
    %324 = vmatprep.subr.mxu0 0.0
    %325 = vmatpush1.msra.mxu0 0.0
    %326 = vmatprep.subr.mxu0 0.0
    %327 = vmatpush1.msra.mxu0 0.0
    %328 = vmatprep.subr.mxu0 0.0
    %329 = vmatpush1.msra.mxu0 0.0
    %330 = vmatprep.subr.mxu0 0.0
    %331 = vmatpush1.msra.mxu0 0.0
    %332 = vmatprep.subr.mxu0 0.0
    %333 = vmatpush1.msra.mxu0 0.0
    %334 = vmatprep.subr.mxu0 0.0
    %335 = vmatpush1.msra.mxu0 0.0
    %336 = vmatprep.subr.mxu0 0.0
    %337 = vmatpush1.msra.mxu0 0.0
    %338 = vmatprep.subr.mxu0 0.0
    %339 = vmatpush1.msra.mxu0 0.0
    %340 = vmatprep.subr.mxu0 %v126
    %341 = vmatpush1.msra.mxu0 %v124
    %342 = vmatprep.subr.mxu0 0.0
    %343 = vmatpush2.msra.mxu0 0.0
    %344 = vmatprep.subr.mxu0 0.0
    %345 = vmatpush2.msra.mxu0 0.0
    %346 = vmatprep.subr.mxu0 0.0
    %347 = vmatpush2.msra.mxu0 0.0
    %348 = vmatprep.subr.mxu0 0.0
    %349 = vmatpush2.msra.mxu0 0.0
    %350 = vmatprep.subr.mxu0 0.0
    %351 = vmatpush2.msra.mxu0 0.0
    %352 = vmatprep.subr.mxu0 0.0
    %353 = vmatpush2.msra.mxu0 0.0
    %354 = vmatprep.subr.mxu0 0.0
    %355 = vmatpush2.msra.mxu0 0.0
    %356 = vmatprep.subr.mxu0 0.0
    %357 = vmatpush2.msra.mxu0 0.0
    %358 = vmatprep.subr.mxu0 0.0
    %359 = vmatpush2.msra.mxu0 0.0
    %360 = vmatprep.subr.mxu0 0.0
    %361 = vmatpush2.msra.mxu0 0.0
    %362 = vmatprep.subr.mxu0 0.0
    %363 = vmatpush2.msra.mxu0 0.0
    %364 = vmatprep.subr.mxu0 0.0
    %365 = vmatpush2.msra.mxu0 0.0
    %366 = vmatprep.subr.mxu0 0.0
    %367 = vmatpush2.msra.mxu0 0.0
    %368 = vmatprep.subr.mxu0 0.0
    %369 = vmatpush2.msra.mxu0 0.0
    %370 = vmatprep.subr.mxu0 0.0
    %371 = vmatpush2.msra.mxu0 0.0
    %372 = vmatprep.subr.mxu0 0.0
    %373 = vmatpush2.msra.mxu0 0.0
    %374 = vmatprep.mubr.f32.mxu0 0.0
    %375 = vmatmul.mubr.f32.gmra.mxu0 %v104
    %v376 = vpop.f32.mrf.mxu0
    %v377 = vadd.f32 %v77, %v376
    %v378 = vpop.f32.mrf.mxu0
    %v379 = vadd.f32 %v77, %v378
    %380 = vmatprep.mubr.f32.mxu0 0.0
    %381 = vmatmul.mubr.f32.gmra.mxu0 %v107
    %v382 = vpop.f32.mrf.mxu0
    %v383 = vadd.f32 %v82, %v382
    %v384 = vpop.f32.mrf.mxu0
    %v385 = vadd.f32 %v82, %v384
    %386 = vmatprep.mubr.f32.mxu0 0.0
    %387 = vmatmul.mubr.f32.gmra.mxu0 %v110
    %v388 = vpop.f32.mrf.mxu0
    %v389 = vadd.f32 %v87, %v388
    %v390 = vpop.f32.mrf.mxu0
    %v391 = vadd.f32 %v87, %v390
    %392 = vmatprep.mubr.f32.mxu0 0.0
    %393 = vmatmul.mubr.f32.gmra.mxu0 %v113
    %v394 = vpop.f32.mrf.mxu0
    %v395 = vadd.f32 %v92, %v394
    %v396 = vpop.f32.mrf.mxu0
    %v397 = vadd.f32 %v92, %v396
    %398 = vdwg.mxu0
    %399 = vmatprep.subr.mxu0 0.0
    %400 = vmatpush1.msra.mxu0 0.0
    %401 = vmatprep.subr.mxu0 0.0
    %402 = vmatpush1.msra.mxu0 0.0
    %403 = vmatprep.subr.mxu0 0.0
    %404 = vmatpush1.msra.mxu0 0.0
    %405 = vmatprep.subr.mxu0 0.0
    %406 = vmatpush1.msra.mxu0 0.0
    %407 = vmatprep.subr.mxu0 0.0
    %408 = vmatpush1.msra.mxu0 0.0
    %409 = vmatprep.subr.mxu0 0.0
    %410 = vmatpush1.msra.mxu0 0.0
    %411 = vmatprep.subr.mxu0 0.0
    %412 = vmatpush1.msra.mxu0 0.0
    %413 = vmatprep.subr.mxu0 0.0
    %414 = vmatpush1.msra.mxu0 0.0
    %415 = vmatprep.subr.mxu0 0.0
    %416 = vmatpush1.msra.mxu0 0.0
    %417 = vmatprep.subr.mxu0 0.0
    %418 = vmatpush1.msra.mxu0 0.0
    %419 = vmatprep.subr.mxu0 0.0
    %420 = vmatpush1.msra.mxu0 0.0
    %421 = vmatprep.subr.mxu0 0.0
    %422 = vmatpush1.msra.mxu0 0.0
    %423 = vmatprep.subr.mxu0 0.0
    %424 = vmatpush1.msra.mxu0 0.0
    %425 = vmatprep.subr.mxu0 0.0
    %426 = vmatpush1.msra.mxu0 0.0
    %427 = vmatprep.subr.mxu0 0.0
    %428 = vmatpush1.msra.mxu0 0.0
    %429 = vmatprep.subr.mxu0 %v130
    %430 = vmatpush1.msra.mxu0 %v128
    %431 = vmatprep.subr.mxu0 0.0
    %432 = vmatpush2.msra.mxu0 0.0
    %433 = vmatprep.subr.mxu0 0.0
    %434 = vmatpush2.msra.mxu0 0.0
    %435 = vmatprep.subr.mxu0 0.0
    %436 = vmatpush2.msra.mxu0 0.0
    %437 = vmatprep.subr.mxu0 0.0
    %438 = vmatpush2.msra.mxu0 0.0
    %439 = vmatprep.subr.mxu0 0.0
    %440 = vmatpush2.msra.mxu0 0.0
    %441 = vmatprep.subr.mxu0 0.0
    %442 = vmatpush2.msra.mxu0 0.0
    %443 = vmatprep.subr.mxu0 0.0
    %444 = vmatpush2.msra.mxu0 0.0
    %445 = vmatprep.subr.mxu0 0.0
    %446 = vmatpush2.msra.mxu0 0.0
    %447 = vmatprep.subr.mxu0 0.0
    %448 = vmatpush2.msra.mxu0 0.0
    %449 = vmatprep.subr.mxu0 0.0
    %450 = vmatpush2.msra.mxu0 0.0
    %451 = vmatprep.subr.mxu0 0.0
    %452 = vmatpush2.msra.mxu0 0.0
    %453 = vmatprep.subr.mxu0 0.0
    %454 = vmatpush2.msra.mxu0 0.0
    %455 = vmatprep.subr.mxu0 0.0
    %456 = vmatpush2.msra.mxu0 0.0
    %457 = vmatprep.subr.mxu0 0.0
    %458 = vmatpush2.msra.mxu0 0.0
    %459 = vmatprep.subr.mxu0 0.0
    %460 = vmatpush2.msra.mxu0 0.0
    %461 = vmatprep.subr.mxu0 0.0
    %462 = vmatpush2.msra.mxu0 0.0
    %463 = vmatprep.mubr.f32.mxu0 0.0
    %464 = vmatmul.mubr.f32.gmra.mxu0 %v104
    %v465 = vpop.f32.mrf.mxu0
    %v466 = vadd.f32 %v77, %v465
    %v467 = vpop.f32.mrf.mxu0
    %v468 = vadd.f32 %v77, %v467
    %469 = vmatprep.mubr.f32.mxu0 0.0
    %470 = vmatmul.mubr.f32.gmra.mxu0 %v107
    %v471 = vpop.f32.mrf.mxu0
    %v472 = vadd.f32 %v82, %v471
    %v473 = vpop.f32.mrf.mxu0
    %v474 = vadd.f32 %v82, %v473
    %475 = vmatprep.mubr.f32.mxu0 0.0
    %476 = vmatmul.mubr.f32.gmra.mxu0 %v110
    %v477 = vpop.f32.mrf.mxu0
    %v478 = vadd.f32 %v87, %v477
    %v479 = vpop.f32.mrf.mxu0
    %v480 = vadd.f32 %v87, %v479
    %481 = vmatprep.mubr.f32.mxu0 0.0
    %482 = vmatmul.mubr.f32.gmra.mxu0 %v113
    %v483 = vpop.f32.mrf.mxu0
    %v484 = vadd.f32 %v92, %v483
    %v485 = vpop.f32.mrf.mxu0
    %v486 = vadd.f32 %v92, %v485
    %487 = vdwg.mxu0
    %v488 = vand.u32 2147483647, %v199
    %vm489 = vcmp.le.f32.partialorder %v488, 0.7853982
    %vm490 = vcmp.lt.s32.totalorder %v199, 0
    %v491 = vand.u32 %v199, 2139095040
    %v492 = vshrl.u32 %v491, 23
    %v493 = vsub.s32 %v492, 127
    %v494 = vand.u32 2147483647, %v199
    %v495 = vand.u32 %v494, 8388607
    %v496 = vor.u32 %v495, 8388608
    %v497 = vsub.s32 0, %v496
    %v498 = vadd.s32 %v493, 1
    %vm499 = vcmp.gt.s32.totalorder %v498, 0
    %v500 = vsel %vm499, %v498, 0
    %v501 = vshrl.u32 %v500, 5
    %v502 = vand.u32 %v500, 31
    %v503 = vsub.s32 32, %v502
    %v504 = vshrl.u32 683565275, %v503
    %v505 = vshll.u32 683565275, %v502
    %v506 = vshrl.u32 2475754826, %v503
    %v507 = vor.u32 %v505, %v506
    %v508 = vshll.u32 2475754826, %v502
    %v509 = vshrl.u32 2131351028, %v503
    %v510 = vor.u32 %v508, %v509
    %v511 = vshll.u32 2131351028, %v502
    %v512 = vshrl.u32 2102212464, %v503
    %v513 = vor.u32 %v511, %v512
    %v514 = vshll.u32 2102212464, %v502
    %v515 = vshrl.u32 920167782, %v503
    %v516 = vor.u32 %v514, %v515
    %v517 = vshll.u32 920167782, %v502
    %v518 = vshrl.u32 1326507024, %v503
    %v519 = vor.u32 %v517, %v518
    %vm520 = vcmp.lt.s32.totalorder %v501, 1
    %vm521 = vcmp.lt.s32.totalorder %v501, 2
    %vm522 = vcmp.lt.s32.totalorder %v501, 3
    %vm523 = vcmp.lt.s32.totalorder %v501, 4
    %v524 = vsel %vm520, %v504, %v507
    %v525 = vsel %vm523, %v513, 2102212464
    %v526 = vsel %vm522, %v510, %v525
    %v527 = vsel %vm521, %v524, %v526
    %v528 = vsel %vm520, %v507, %v510
    %v529 = vsel %vm523, %v516, 920167782
    %v530 = vsel %vm522, %v513, %v529
    %v531 = vsel %vm521, %v528, %v530
    %v532 = vsel %vm520, %v510, %v513
    %v533 = vsel %vm523, %v519, 1326507024
    %v534 = vsel %vm522, %v516, %v533
    %v535 = vsel %vm521, %v532, %v534
    %v536 = vshll.u32 %v496, 8
    %v537 = vmul.u32.u64.compose %v536, %v535
    %v538 = vextract.low.u32 %v537
    %v539 = vextract.high.u32 %v537
    %v540 = vmul.u32.u64.compose %v536, %v531
    %v541 = vextract.low.u32 %v540
    %v542 = vextract.high.u32 %v540
    %v543 = vmul.u32 %v536, %v527
    %v544 = vadd.s32 %v539, %v541
    %vm545 = vc.u32 %v539, %v541
    %v546 = vadd.s32 %v542, 1
    %v547 = vsel %vm545, %v546, %v542
    %v548 = vadd.s32 %v543, %v547
    %v549 = vadd.s32 %v548, 536870912
    %v550 = vshrl.u32 %v549, 30
    %v551 = vshll.u32 %v550, 30
    %v552 = vsub.s32 %v548, %v551
    %vm553 = vcmp.lt.s32.totalorder %v552, 0
    %v554 = vsub.s32 0, %v552
    %v555 = vsel %vm553, %v554, %v552
    %v556 = vclz %v555
    %v557 = vsub.s32 %v556, 2
    %vm558 = vcmp.gt.s32.totalorder 0, %v557
    %v559 = vsel %vm558, 0, %v557
    %v560 = vsub.s32 32, %v559
    %v561 = vshll.u32 %v552, %v559
    %v562 = vshrl.u32 %v544, %v560
    %v563 = vor.u32 %v561, %v562
    %v564 = vsub.s32 4294967266, %v559
    %v565 = vadd.s32 %v564, 127
    %v566 = vshll.u32 %v565, 23
    %v567 = vor.u32 4788187, %v566
    %v568 = vand.u32 2147483647, %v567
    %v570 = vcvt.s32.f32 %v563
    %v571 = vmul.f32 %v570, %v568
    %v572 = vxor.u32 %v571, 2147483648
    %v573 = vsel %vm490, %v572, %v571
    %v574 = vsub.s32 4, %v550
    %v575 = vsel %vm490, %v574, %v550
    %v576 = vsel %vm489, %v199, %v573
    %v577 = vsel %vm489, 0, %v575
    %v578 = vcosq.f32.pop %v576
    %v579 = vsinq.f32.pop %v576
    %vm580 = vweird.f32 %v199
    %v581 = vadd.s32 %v577, 3
    %v582 = vand.u32 %v581, 3
    %vm583 = vcmp.lt.s32.totalorder %v582, 2
    %vm584 = vcmp.eq.s32.totalorder %v582, 0
    %v585 = vxor.u32 %v579, 2147483648
    %v586 = vsel %vm584, %v578, %v585
    %vm587 = vcmp.eq.s32.totalorder %v582, 2
    %v588 = vxor.u32 %v578, 2147483648
    %v589 = vsel %vm587, %v588, %v579
    %v590 = vsel %vm583, %v586, %v589
    %v591 = vsel %vm580, nan, %v590
    %v592 = vand.u32 2147483647, %v201
    %vm593 = vcmp.le.f32.partialorder %v592, 0.7853982
    %vm594 = vcmp.lt.s32.totalorder %v201, 0
    %v595 = vand.u32 %v201, 2139095040
    %v596 = vshrl.u32 %v595, 23
    %v597 = vsub.s32 %v596, 127
    %v598 = vand.u32 2147483647, %v201
    %v599 = vand.u32 %v598, 8388607
    %v600 = vor.u32 %v599, 8388608
    %v601 = vsub.s32 0, %v600
    %v602 = vadd.s32 %v597, 1
    %vm603 = vcmp.gt.s32.totalorder %v602, 0
    %v604 = vsel %vm603, %v602, 0
    %v605 = vshrl.u32 %v604, 5
    %v606 = vand.u32 %v604, 31
    %v607 = vsub.s32 32, %v606
    %v608 = vshrl.u32 683565275, %v607
    %v609 = vshll.u32 683565275, %v606
    %v610 = vshrl.u32 2475754826, %v607
    %v611 = vor.u32 %v609, %v610
    %v612 = vshll.u32 2475754826, %v606
    %v613 = vshrl.u32 2131351028, %v607
    %v614 = vor.u32 %v612, %v613
    %v615 = vshll.u32 2131351028, %v606
    %v616 = vshrl.u32 2102212464, %v607
    %v617 = vor.u32 %v615, %v616
    %v618 = vshll.u32 2102212464, %v606
    %v619 = vshrl.u32 920167782, %v607
    %v620 = vor.u32 %v618, %v619
    %v621 = vshll.u32 920167782, %v606
    %v622 = vshrl.u32 1326507024, %v607
    %v623 = vor.u32 %v621, %v622
    %vm624 = vcmp.lt.s32.totalorder %v605, 1
    %vm625 = vcmp.lt.s32.totalorder %v605, 2
    %vm626 = vcmp.lt.s32.totalorder %v605, 3
    %vm627 = vcmp.lt.s32.totalorder %v605, 4
    %v628 = vsel %vm624, %v608, %v611
    %v629 = vsel %vm627, %v617, 2102212464
    %v630 = vsel %vm626, %v614, %v629
    %v631 = vsel %vm625, %v628, %v630
    %v632 = vsel %vm624, %v611, %v614
    %v633 = vsel %vm627, %v620, 920167782
    %v634 = vsel %vm626, %v617, %v633
    %v635 = vsel %vm625, %v632, %v634
    %v636 = vsel %vm624, %v614, %v617
    %v637 = vsel %vm627, %v623, 1326507024
    %v638 = vsel %vm626, %v620, %v637
    %v639 = vsel %vm625, %v636, %v638
    %v640 = vshll.u32 %v600, 8
    %v641 = vmul.u32.u64.compose %v640, %v639
    %v642 = vextract.low.u32 %v641
    %v643 = vextract.high.u32 %v641
    %v644 = vmul.u32.u64.compose %v640, %v635
    %v645 = vextract.low.u32 %v644
    %v646 = vextract.high.u32 %v644
    %v647 = vmul.u32 %v640, %v631
    %v648 = vadd.s32 %v643, %v645
    %vm649 = vc.u32 %v643, %v645
    %v650 = vadd.s32 %v646, 1
    %v651 = vsel %vm649, %v650, %v646
    %v652 = vadd.s32 %v647, %v651
    %v653 = vadd.s32 %v652, 536870912
    %v654 = vshrl.u32 %v653, 30
    %v655 = vshll.u32 %v654, 30
    %v656 = vsub.s32 %v652, %v655
    %vm657 = vcmp.lt.s32.totalorder %v656, 0
    %v658 = vsub.s32 0, %v656
    %v659 = vsel %vm657, %v658, %v656
    %v660 = vclz %v659
    %v661 = vsub.s32 %v660, 2
    %vm662 = vcmp.gt.s32.totalorder 0, %v661
    %v663 = vsel %vm662, 0, %v661
    %v664 = vsub.s32 32, %v663
    %v665 = vshll.u32 %v656, %v663
    %v666 = vshrl.u32 %v648, %v664
    %v667 = vor.u32 %v665, %v666
    %v668 = vsub.s32 4294967266, %v663
    %v669 = vadd.s32 %v668, 127
    %v670 = vshll.u32 %v669, 23
    %v671 = vor.u32 4788187, %v670
    %v672 = vand.u32 2147483647, %v671
    %v674 = vcvt.s32.f32 %v667
    %v675 = vmul.f32 %v674, %v672
    %v676 = vxor.u32 %v675, 2147483648
    %v677 = vsel %vm594, %v676, %v675
    %v678 = vsub.s32 4, %v654
    %v679 = vsel %vm594, %v678, %v654
    %v680 = vsel %vm593, %v201, %v677
    %v681 = vsel %vm593, 0, %v679
    %v682 = vcosq.f32.pop %v680
    %v683 = vsinq.f32.pop %v680
    %vm684 = vweird.f32 %v201
    %v685 = vadd.s32 %v681, 3
    %v686 = vand.u32 %v685, 3
    %vm687 = vcmp.lt.s32.totalorder %v686, 2
    %vm688 = vcmp.eq.s32.totalorder %v686, 0
    %v689 = vxor.u32 %v683, 2147483648
    %v690 = vsel %vm688, %v682, %v689
    %vm691 = vcmp.eq.s32.totalorder %v686, 2
    %v692 = vxor.u32 %v682, 2147483648
    %v693 = vsel %vm691, %v692, %v683
    %v694 = vsel %vm687, %v690, %v693
    %v695 = vsel %vm684, nan, %v694
    %v696 = vand.u32 2147483647, %v288
    %vm697 = vcmp.le.f32.partialorder %v696, 0.7853982
    %vm698 = vcmp.lt.s32.totalorder %v288, 0
    %v699 = vand.u32 %v288, 2139095040
    %v700 = vshrl.u32 %v699, 23
    %v701 = vsub.s32 %v700, 127
    %v702 = vand.u32 2147483647, %v288
    %v703 = vand.u32 %v702, 8388607
    %v704 = vor.u32 %v703, 8388608
    %v705 = vsub.s32 0, %v704
    %v706 = vadd.s32 %v701, 1
    %vm707 = vcmp.gt.s32.totalorder %v706, 0
    %v708 = vsel %vm707, %v706, 0
    %v709 = vshrl.u32 %v708, 5
    %v710 = vand.u32 %v708, 31
    %v711 = vsub.s32 32, %v710
    %v712 = vshrl.u32 683565275, %v711
    %v713 = vshll.u32 683565275, %v710
    %v714 = vshrl.u32 2475754826, %v711
    %v715 = vor.u32 %v713, %v714
    %v716 = vshll.u32 2475754826, %v710
    %v717 = vshrl.u32 2131351028, %v711
    %v718 = vor.u32 %v716, %v717
    %v719 = vshll.u32 2131351028, %v710
    %v720 = vshrl.u32 2102212464, %v711
    %v721 = vor.u32 %v719, %v720
    %v722 = vshll.u32 2102212464, %v710
    %v723 = vshrl.u32 920167782, %v711
    %v724 = vor.u32 %v722, %v723
    %v725 = vshll.u32 920167782, %v710
    %v726 = vshrl.u32 1326507024, %v711
    %v727 = vor.u32 %v725, %v726
    %vm728 = vcmp.lt.s32.totalorder %v709, 1
    %vm729 = vcmp.lt.s32.totalorder %v709, 2
    %vm730 = vcmp.lt.s32.totalorder %v709, 3
    %vm731 = vcmp.lt.s32.totalorder %v709, 4
    %v732 = vsel %vm728, %v712, %v715
    %v733 = vsel %vm731, %v721, 2102212464
    %v734 = vsel %vm730, %v718, %v733
    %v735 = vsel %vm729, %v732, %v734
    %v736 = vsel %vm728, %v715, %v718
    %v737 = vsel %vm731, %v724, 920167782
    %v738 = vsel %vm730, %v721, %v737
    %v739 = vsel %vm729, %v736, %v738
    %v740 = vsel %vm728, %v718, %v721
    %v741 = vsel %vm731, %v727, 1326507024
    %v742 = vsel %vm730, %v724, %v741
    %v743 = vsel %vm729, %v740, %v742
    %v744 = vshll.u32 %v704, 8
    %v745 = vmul.u32.u64.compose %v744, %v743
    %v746 = vextract.low.u32 %v745
    %v747 = vextract.high.u32 %v745
    %v748 = vmul.u32.u64.compose %v744, %v739
    %v749 = vextract.low.u32 %v748
    %v750 = vextract.high.u32 %v748
    %v751 = vmul.u32 %v744, %v735
    %v752 = vadd.s32 %v747, %v749
    %vm753 = vc.u32 %v747, %v749
    %v754 = vadd.s32 %v750, 1
    %v755 = vsel %vm753, %v754, %v750
    %v756 = vadd.s32 %v751, %v755
    %v757 = vadd.s32 %v756, 536870912
    %v758 = vshrl.u32 %v757, 30
    %v759 = vshll.u32 %v758, 30
    %v760 = vsub.s32 %v756, %v759
    %vm761 = vcmp.lt.s32.totalorder %v760, 0
    %v762 = vsub.s32 0, %v760
    %v763 = vsel %vm761, %v762, %v760
    %v764 = vclz %v763
    %v765 = vsub.s32 %v764, 2
    %vm766 = vcmp.gt.s32.totalorder 0, %v765
    %v767 = vsel %vm766, 0, %v765
    %v768 = vsub.s32 32, %v767
    %v769 = vshll.u32 %v760, %v767
    %v770 = vshrl.u32 %v752, %v768
    %v771 = vor.u32 %v769, %v770
    %v772 = vsub.s32 4294967266, %v767
    %v773 = vadd.s32 %v772, 127
    %v774 = vshll.u32 %v773, 23
    %v775 = vor.u32 4788187, %v774
    %v776 = vand.u32 2147483647, %v775
    %v778 = vcvt.s32.f32 %v771
    %v779 = vmul.f32 %v778, %v776
    %v780 = vxor.u32 %v779, 2147483648
    %v781 = vsel %vm698, %v780, %v779
    %v782 = vsub.s32 4, %v758
    %v783 = vsel %vm698, %v782, %v758
    %v784 = vsel %vm697, %v288, %v781
    %v785 = vsel %vm697, 0, %v783
    %v786 = vcosq.f32.pop %v784
    %v787 = vsinq.f32.pop %v784
    %vm788 = vweird.f32 %v288
    %v789 = vadd.s32 %v785, 3
    %v790 = vand.u32 %v789, 3
    %vm791 = vcmp.lt.s32.totalorder %v790, 2
    %vm792 = vcmp.eq.s32.totalorder %v790, 0
    %v793 = vxor.u32 %v787, 2147483648
    %v794 = vsel %vm792, %v786, %v793
    %vm795 = vcmp.eq.s32.totalorder %v790, 2
    %v796 = vxor.u32 %v786, 2147483648
    %v797 = vsel %vm795, %v796, %v787
    %v798 = vsel %vm791, %v794, %v797
    %v799 = vsel %vm788, nan, %v798
    %v800 = vand.u32 2147483647, %v290
    %vm801 = vcmp.le.f32.partialorder %v800, 0.7853982
    %vm802 = vcmp.lt.s32.totalorder %v290, 0
    %v803 = vand.u32 %v290, 2139095040
    %v804 = vshrl.u32 %v803, 23
    %v805 = vsub.s32 %v804, 127
    %v806 = vand.u32 2147483647, %v290
    %v807 = vand.u32 %v806, 8388607
    %v808 = vor.u32 %v807, 8388608
    %v809 = vsub.s32 0, %v808
    %v810 = vadd.s32 %v805, 1
    %vm811 = vcmp.gt.s32.totalorder %v810, 0
    %v812 = vsel %vm811, %v810, 0
    %v813 = vshrl.u32 %v812, 5
    %v814 = vand.u32 %v812, 31
    %v815 = vsub.s32 32, %v814
    %v816 = vshrl.u32 683565275, %v815
    %v817 = vshll.u32 683565275, %v814
    %v818 = vshrl.u32 2475754826, %v815
    %v819 = vor.u32 %v817, %v818
    %v820 = vshll.u32 2475754826, %v814
    %v821 = vshrl.u32 2131351028, %v815
    %v822 = vor.u32 %v820, %v821
    %v823 = vshll.u32 2131351028, %v814
    %v824 = vshrl.u32 2102212464, %v815
    %v825 = vor.u32 %v823, %v824
    %v826 = vshll.u32 2102212464, %v814
    %v827 = vshrl.u32 920167782, %v815
    %v828 = vor.u32 %v826, %v827
    %v829 = vshll.u32 920167782, %v814
    %v830 = vshrl.u32 1326507024, %v815
    %v831 = vor.u32 %v829, %v830
    %vm832 = vcmp.lt.s32.totalorder %v813, 1
    %vm833 = vcmp.lt.s32.totalorder %v813, 2
    %vm834 = vcmp.lt.s32.totalorder %v813, 3
    %vm835 = vcmp.lt.s32.totalorder %v813, 4
    %v836 = vsel %vm832, %v816, %v819
    %v837 = vsel %vm835, %v825, 2102212464
    %v838 = vsel %vm834, %v822, %v837
    %v839 = vsel %vm833, %v836, %v838
    %v840 = vsel %vm832, %v819, %v822
    %v841 = vsel %vm835, %v828, 920167782
    %v842 = vsel %vm834, %v825, %v841
    %v843 = vsel %vm833, %v840, %v842
    %v844 = vsel %vm832, %v822, %v825
    %v845 = vsel %vm835, %v831, 1326507024
    %v846 = vsel %vm834, %v828, %v845
    %v847 = vsel %vm833, %v844, %v846
    %v848 = vshll.u32 %v808, 8
    %v849 = vmul.u32.u64.compose %v848, %v847
    %v850 = vextract.low.u32 %v849
    %v851 = vextract.high.u32 %v849
    %v852 = vmul.u32.u64.compose %v848, %v843
    %v853 = vextract.low.u32 %v852
    %v854 = vextract.high.u32 %v852
    %v855 = vmul.u32 %v848, %v839
    %v856 = vadd.s32 %v851, %v853
    %vm857 = vc.u32 %v851, %v853
    %v858 = vadd.s32 %v854, 1
    %v859 = vsel %vm857, %v858, %v854
    %v860 = vadd.s32 %v855, %v859
    %v861 = vadd.s32 %v860, 536870912
    %v862 = vshrl.u32 %v861, 30
    %v863 = vshll.u32 %v862, 30
    %v864 = vsub.s32 %v860, %v863
    %vm865 = vcmp.lt.s32.totalorder %v864, 0
    %v866 = vsub.s32 0, %v864
    %v867 = vsel %vm865, %v866, %v864
    %v868 = vclz %v867
    %v869 = vsub.s32 %v868, 2
    %vm870 = vcmp.gt.s32.totalorder 0, %v869
    %v871 = vsel %vm870, 0, %v869
    %v872 = vsub.s32 32, %v871
    %v873 = vshll.u32 %v864, %v871
    %v874 = vshrl.u32 %v856, %v872
    %v875 = vor.u32 %v873, %v874
    %v876 = vsub.s32 4294967266, %v871
    %v877 = vadd.s32 %v876, 127
    %v878 = vshll.u32 %v877, 23
    %v879 = vor.u32 4788187, %v878
    %v880 = vand.u32 2147483647, %v879
    %v882 = vcvt.s32.f32 %v875
    %v883 = vmul.f32 %v882, %v880
    %v884 = vxor.u32 %v883, 2147483648
    %v885 = vsel %vm802, %v884, %v883
    %v886 = vsub.s32 4, %v862
    %v887 = vsel %vm802, %v886, %v862
    %v888 = vsel %vm801, %v290, %v885
    %v889 = vsel %vm801, 0, %v887
    %v890 = vcosq.f32.pop %v888
    %v891 = vsinq.f32.pop %v888
    %vm892 = vweird.f32 %v290
    %v893 = vadd.s32 %v889, 3
    %v894 = vand.u32 %v893, 3
    %vm895 = vcmp.lt.s32.totalorder %v894, 2
    %vm896 = vcmp.eq.s32.totalorder %v894, 0
    %v897 = vxor.u32 %v891, 2147483648
    %v898 = vsel %vm896, %v890, %v897
    %vm899 = vcmp.eq.s32.totalorder %v894, 2
    %v900 = vxor.u32 %v890, 2147483648
    %v901 = vsel %vm899, %v900, %v891
    %v902 = vsel %vm895, %v898, %v901
    %v903 = vsel %vm892, nan, %v902
    %v904 = vand.u32 2147483647, %v377
    %vm905 = vcmp.le.f32.partialorder %v904, 0.7853982
    %vm906 = vcmp.lt.s32.totalorder %v377, 0
    %v907 = vand.u32 %v377, 2139095040
    %v908 = vshrl.u32 %v907, 23
    %v909 = vsub.s32 %v908, 127
    %v910 = vand.u32 2147483647, %v377
    %v911 = vand.u32 %v910, 8388607
    %v912 = vor.u32 %v911, 8388608
    %v913 = vsub.s32 0, %v912
    %v914 = vadd.s32 %v909, 1
    %vm915 = vcmp.gt.s32.totalorder %v914, 0
    %v916 = vsel %vm915, %v914, 0
    %v917 = vshrl.u32 %v916, 5
    %v918 = vand.u32 %v916, 31
    %v919 = vsub.s32 32, %v918
    %v920 = vshrl.u32 683565275, %v919
    %v921 = vshll.u32 683565275, %v918
    %v922 = vshrl.u32 2475754826, %v919
    %v923 = vor.u32 %v921, %v922
    %v924 = vshll.u32 2475754826, %v918
    %v925 = vshrl.u32 2131351028, %v919
    %v926 = vor.u32 %v924, %v925
    %v927 = vshll.u32 2131351028, %v918
    %v928 = vshrl.u32 2102212464, %v919
    %v929 = vor.u32 %v927, %v928
    %v930 = vshll.u32 2102212464, %v918
    %v931 = vshrl.u32 920167782, %v919
    %v932 = vor.u32 %v930, %v931
    %v933 = vshll.u32 920167782, %v918
    %v934 = vshrl.u32 1326507024, %v919
    %v935 = vor.u32 %v933, %v934
    %vm936 = vcmp.lt.s32.totalorder %v917, 1
    %vm937 = vcmp.lt.s32.totalorder %v917, 2
    %vm938 = vcmp.lt.s32.totalorder %v917, 3
    %vm939 = vcmp.lt.s32.totalorder %v917, 4
    %v940 = vsel %vm936, %v920, %v923
    %v941 = vsel %vm939, %v929, 2102212464
    %v942 = vsel %vm938, %v926, %v941
    %v943 = vsel %vm937, %v940, %v942
    %v944 = vsel %vm936, %v923, %v926
    %v945 = vsel %vm939, %v932, 920167782
    %v946 = vsel %vm938, %v929, %v945
    %v947 = vsel %vm937, %v944, %v946
    %v948 = vsel %vm936, %v926, %v929
    %v949 = vsel %vm939, %v935, 1326507024
    %v950 = vsel %vm938, %v932, %v949
    %v951 = vsel %vm937, %v948, %v950
    %v952 = vshll.u32 %v912, 8
    %v953 = vmul.u32.u64.compose %v952, %v951
    %v954 = vextract.low.u32 %v953
    %v955 = vextract.high.u32 %v953
    %v956 = vmul.u32.u64.compose %v952, %v947
    %v957 = vextract.low.u32 %v956
    %v958 = vextract.high.u32 %v956
    %v959 = vmul.u32 %v952, %v943
    %v960 = vadd.s32 %v955, %v957
    %vm961 = vc.u32 %v955, %v957
    %v962 = vadd.s32 %v958, 1
    %v963 = vsel %vm961, %v962, %v958
    %v964 = vadd.s32 %v959, %v963
    %v965 = vadd.s32 %v964, 536870912
    %v966 = vshrl.u32 %v965, 30
    %v967 = vshll.u32 %v966, 30
    %v968 = vsub.s32 %v964, %v967
    %vm969 = vcmp.lt.s32.totalorder %v968, 0
    %v970 = vsub.s32 0, %v968
    %v971 = vsel %vm969, %v970, %v968
    %v972 = vclz %v971
    %v973 = vsub.s32 %v972, 2
    %vm974 = vcmp.gt.s32.totalorder 0, %v973
    %v975 = vsel %vm974, 0, %v973
    %v976 = vsub.s32 32, %v975
    %v977 = vshll.u32 %v968, %v975
    %v978 = vshrl.u32 %v960, %v976
    %v979 = vor.u32 %v977, %v978
    %v980 = vsub.s32 4294967266, %v975
    %v981 = vadd.s32 %v980, 127
    %v982 = vshll.u32 %v981, 23
    %v983 = vor.u32 4788187, %v982
    %v984 = vand.u32 2147483647, %v983
    %v986 = vcvt.s32.f32 %v979
    %v987 = vmul.f32 %v986, %v984
    %v988 = vxor.u32 %v987, 2147483648
    %v989 = vsel %vm906, %v988, %v987
    %v990 = vsub.s32 4, %v966
    %v991 = vsel %vm906, %v990, %v966
    %v992 = vsel %vm905, %v377, %v989
    %v993 = vsel %vm905, 0, %v991
    %v994 = vcosq.f32.pop %v992
    %v995 = vsinq.f32.pop %v992
    %vm996 = vweird.f32 %v377
    %v997 = vadd.s32 %v993, 3
    %v998 = vand.u32 %v997, 3
    %vm999 = vcmp.lt.s32.totalorder %v998, 2
    %vm1000 = vcmp.eq.s32.totalorder %v998, 0
    %v1001 = vxor.u32 %v995, 2147483648
    %v1002 = vsel %vm1000, %v994, %v1001
    %vm1003 = vcmp.eq.s32.totalorder %v998, 2
    %v1004 = vxor.u32 %v994, 2147483648
    %v1005 = vsel %vm1003, %v1004, %v995
    %v1006 = vsel %vm999, %v1002, %v1005
    %v1007 = vsel %vm996, nan, %v1006
    %v1008 = vand.u32 2147483647, %v379
    %vm1009 = vcmp.le.f32.partialorder %v1008, 0.7853982
    %vm1010 = vcmp.lt.s32.totalorder %v379, 0
    %v1011 = vand.u32 %v379, 2139095040
    %v1012 = vshrl.u32 %v1011, 23
    %v1013 = vsub.s32 %v1012, 127
    %v1014 = vand.u32 2147483647, %v379
    %v1015 = vand.u32 %v1014, 8388607
    %v1016 = vor.u32 %v1015, 8388608
    %v1017 = vsub.s32 0, %v1016
    %v1018 = vadd.s32 %v1013, 1
    %vm1019 = vcmp.gt.s32.totalorder %v1018, 0
    %v1020 = vsel %vm1019, %v1018, 0
    %v1021 = vshrl.u32 %v1020, 5
    %v1022 = vand.u32 %v1020, 31
    %v1023 = vsub.s32 32, %v1022
    %v1024 = vshrl.u32 683565275, %v1023
    %v1025 = vshll.u32 683565275, %v1022
    %v1026 = vshrl.u32 2475754826, %v1023
    %v1027 = vor.u32 %v1025, %v1026
    %v1028 = vshll.u32 2475754826, %v1022
    %v1029 = vshrl.u32 2131351028, %v1023
    %v1030 = vor.u32 %v1028, %v1029
    %v1031 = vshll.u32 2131351028, %v1022
    %v1032 = vshrl.u32 2102212464, %v1023
    %v1033 = vor.u32 %v1031, %v1032
    %v1034 = vshll.u32 2102212464, %v1022
    %v1035 = vshrl.u32 920167782, %v1023
    %v1036 = vor.u32 %v1034, %v1035
    %v1037 = vshll.u32 920167782, %v1022
    %v1038 = vshrl.u32 1326507024, %v1023
    %v1039 = vor.u32 %v1037, %v1038
    %vm1040 = vcmp.lt.s32.totalorder %v1021, 1
    %vm1041 = vcmp.lt.s32.totalorder %v1021, 2
    %vm1042 = vcmp.lt.s32.totalorder %v1021, 3
    %vm1043 = vcmp.lt.s32.totalorder %v1021, 4
    %v1044 = vsel %vm1040, %v1024, %v1027
    %v1045 = vsel %vm1043, %v1033, 2102212464
    %v1046 = vsel %vm1042, %v1030, %v1045
    %v1047 = vsel %vm1041, %v1044, %v1046
    %v1048 = vsel %vm1040, %v1027, %v1030
    %v1049 = vsel %vm1043, %v1036, 920167782
    %v1050 = vsel %vm1042, %v1033, %v1049
    %v1051 = vsel %vm1041, %v1048, %v1050
    %v1052 = vsel %vm1040, %v1030, %v1033
    %v1053 = vsel %vm1043, %v1039, 1326507024
    %v1054 = vsel %vm1042, %v1036, %v1053
    %v1055 = vsel %vm1041, %v1052, %v1054
    %v1056 = vshll.u32 %v1016, 8
    %v1057 = vmul.u32.u64.compose %v1056, %v1055
    %v1058 = vextract.low.u32 %v1057
    %v1059 = vextract.high.u32 %v1057
    %v1060 = vmul.u32.u64.compose %v1056, %v1051
    %v1061 = vextract.low.u32 %v1060
    %v1062 = vextract.high.u32 %v1060
    %v1063 = vmul.u32 %v1056, %v1047
    %v1064 = vadd.s32 %v1059, %v1061
    %vm1065 = vc.u32 %v1059, %v1061
    %v1066 = vadd.s32 %v1062, 1
    %v1067 = vsel %vm1065, %v1066, %v1062
    %v1068 = vadd.s32 %v1063, %v1067
    %v1069 = vadd.s32 %v1068, 536870912
    %v1070 = vshrl.u32 %v1069, 30
    %v1071 = vshll.u32 %v1070, 30
    %v1072 = vsub.s32 %v1068, %v1071
    %vm1073 = vcmp.lt.s32.totalorder %v1072, 0
    %v1074 = vsub.s32 0, %v1072
    %v1075 = vsel %vm1073, %v1074, %v1072
    %v1076 = vclz %v1075
    %v1077 = vsub.s32 %v1076, 2
    %vm1078 = vcmp.gt.s32.totalorder 0, %v1077
    %v1079 = vsel %vm1078, 0, %v1077
    %v1080 = vsub.s32 32, %v1079
    %v1081 = vshll.u32 %v1072, %v1079
    %v1082 = vshrl.u32 %v1064, %v1080
    %v1083 = vor.u32 %v1081, %v1082
    %v1084 = vsub.s32 4294967266, %v1079
    %v1085 = vadd.s32 %v1084, 127
    %v1086 = vshll.u32 %v1085, 23
    %v1087 = vor.u32 4788187, %v1086
    %v1088 = vand.u32 2147483647, %v1087
    %v1090 = vcvt.s32.f32 %v1083
    %v1091 = vmul.f32 %v1090, %v1088
    %v1092 = vxor.u32 %v1091, 2147483648
    %v1093 = vsel %vm1010, %v1092, %v1091
    %v1094 = vsub.s32 4, %v1070
    %v1095 = vsel %vm1010, %v1094, %v1070
    %v1096 = vsel %vm1009, %v379, %v1093
    %v1097 = vsel %vm1009, 0, %v1095
    %v1098 = vcosq.f32.pop %v1096
    %v1099 = vsinq.f32.pop %v1096
    %vm1100 = vweird.f32 %v379
    %v1101 = vadd.s32 %v1097, 3
    %v1102 = vand.u32 %v1101, 3
    %vm1103 = vcmp.lt.s32.totalorder %v1102, 2
    %vm1104 = vcmp.eq.s32.totalorder %v1102, 0
    %v1105 = vxor.u32 %v1099, 2147483648
    %v1106 = vsel %vm1104, %v1098, %v1105
    %vm1107 = vcmp.eq.s32.totalorder %v1102, 2
    %v1108 = vxor.u32 %v1098, 2147483648
    %v1109 = vsel %vm1107, %v1108, %v1099
    %v1110 = vsel %vm1103, %v1106, %v1109
    %v1111 = vsel %vm1100, nan, %v1110
    %v1112 = vand.u32 2147483647, %v466
    %vm1113 = vcmp.le.f32.partialorder %v1112, 0.7853982
    %vm1114 = vcmp.lt.s32.totalorder %v466, 0
    %v1115 = vand.u32 %v466, 2139095040
    %v1116 = vshrl.u32 %v1115, 23
    %v1117 = vsub.s32 %v1116, 127
    %v1118 = vand.u32 2147483647, %v466
    %v1119 = vand.u32 %v1118, 8388607
    %v1120 = vor.u32 %v1119, 8388608
    %v1121 = vsub.s32 0, %v1120
    %v1122 = vadd.s32 %v1117, 1
    %vm1123 = vcmp.gt.s32.totalorder %v1122, 0
    %v1124 = vsel %vm1123, %v1122, 0
    %v1125 = vshrl.u32 %v1124, 5
    %v1126 = vand.u32 %v1124, 31
    %v1127 = vsub.s32 32, %v1126
    %v1128 = vshrl.u32 683565275, %v1127
    %v1129 = vshll.u32 683565275, %v1126
    %v1130 = vshrl.u32 2475754826, %v1127
    %v1131 = vor.u32 %v1129, %v1130
    %v1132 = vshll.u32 2475754826, %v1126
    %v1133 = vshrl.u32 2131351028, %v1127
    %v1134 = vor.u32 %v1132, %v1133
    %v1135 = vshll.u32 2131351028, %v1126
    %v1136 = vshrl.u32 2102212464, %v1127
    %v1137 = vor.u32 %v1135, %v1136
    %v1138 = vshll.u32 2102212464, %v1126
    %v1139 = vshrl.u32 920167782, %v1127
    %v1140 = vor.u32 %v1138, %v1139
    %v1141 = vshll.u32 920167782, %v1126
    %v1142 = vshrl.u32 1326507024, %v1127
    %v1143 = vor.u32 %v1141, %v1142
    %vm1144 = vcmp.lt.s32.totalorder %v1125, 1
    %vm1145 = vcmp.lt.s32.totalorder %v1125, 2
    %vm1146 = vcmp.lt.s32.totalorder %v1125, 3
    %vm1147 = vcmp.lt.s32.totalorder %v1125, 4
    %v1148 = vsel %vm1144, %v1128, %v1131
    %v1149 = vsel %vm1147, %v1137, 2102212464
    %v1150 = vsel %vm1146, %v1134, %v1149
    %v1151 = vsel %vm1145, %v1148, %v1150
    %v1152 = vsel %vm1144, %v1131, %v1134
    %v1153 = vsel %vm1147, %v1140, 920167782
    %v1154 = vsel %vm1146, %v1137, %v1153
    %v1155 = vsel %vm1145, %v1152, %v1154
    %v1156 = vsel %vm1144, %v1134, %v1137
    %v1157 = vsel %vm1147, %v1143, 1326507024
    %v1158 = vsel %vm1146, %v1140, %v1157
    %v1159 = vsel %vm1145, %v1156, %v1158
    %v1160 = vshll.u32 %v1120, 8
    %v1161 = vmul.u32.u64.compose %v1160, %v1159
    %v1162 = vextract.low.u32 %v1161
    %v1163 = vextract.high.u32 %v1161
    %v1164 = vmul.u32.u64.compose %v1160, %v1155
    %v1165 = vextract.low.u32 %v1164
    %v1166 = vextract.high.u32 %v1164
    %v1167 = vmul.u32 %v1160, %v1151
    %v1168 = vadd.s32 %v1163, %v1165
    %vm1169 = vc.u32 %v1163, %v1165
    %v1170 = vadd.s32 %v1166, 1
    %v1171 = vsel %vm1169, %v1170, %v1166
    %v1172 = vadd.s32 %v1167, %v1171
    %v1173 = vadd.s32 %v1172, 536870912
    %v1174 = vshrl.u32 %v1173, 30
    %v1175 = vshll.u32 %v1174, 30
    %v1176 = vsub.s32 %v1172, %v1175
    %vm1177 = vcmp.lt.s32.totalorder %v1176, 0
    %v1178 = vsub.s32 0, %v1176
    %v1179 = vsel %vm1177, %v1178, %v1176
    %v1180 = vclz %v1179
    %v1181 = vsub.s32 %v1180, 2
    %vm1182 = vcmp.gt.s32.totalorder 0, %v1181
    %v1183 = vsel %vm1182, 0, %v1181
    %v1184 = vsub.s32 32, %v1183
    %v1185 = vshll.u32 %v1176, %v1183
    %v1186 = vshrl.u32 %v1168, %v1184
    %v1187 = vor.u32 %v1185, %v1186
    %v1188 = vsub.s32 4294967266, %v1183
    %v1189 = vadd.s32 %v1188, 127
    %v1190 = vshll.u32 %v1189, 23
    %v1191 = vor.u32 4788187, %v1190
    %v1192 = vand.u32 2147483647, %v1191
    %v1194 = vcvt.s32.f32 %v1187
    %v1195 = vmul.f32 %v1194, %v1192
    %v1196 = vxor.u32 %v1195, 2147483648
    %v1197 = vsel %vm1114, %v1196, %v1195
    %v1198 = vsub.s32 4, %v1174
    %v1199 = vsel %vm1114, %v1198, %v1174
    %v1200 = vsel %vm1113, %v466, %v1197
    %v1201 = vsel %vm1113, 0, %v1199
    %v1202 = vcosq.f32.pop %v1200
    %v1203 = vsinq.f32.pop %v1200
    %vm1204 = vweird.f32 %v466
    %v1205 = vadd.s32 %v1201, 3
    %v1206 = vand.u32 %v1205, 3
    %vm1207 = vcmp.lt.s32.totalorder %v1206, 2
    %vm1208 = vcmp.eq.s32.totalorder %v1206, 0
    %v1209 = vxor.u32 %v1203, 2147483648
    %v1210 = vsel %vm1208, %v1202, %v1209
    %vm1211 = vcmp.eq.s32.totalorder %v1206, 2
    %v1212 = vxor.u32 %v1202, 2147483648
    %v1213 = vsel %vm1211, %v1212, %v1203
    %v1214 = vsel %vm1207, %v1210, %v1213
    %v1215 = vsel %vm1204, nan, %v1214
    %v1216 = vand.u32 2147483647, %v468
    %vm1217 = vcmp.le.f32.partialorder %v1216, 0.7853982
    %vm1218 = vcmp.lt.s32.totalorder %v468, 0
    %v1219 = vand.u32 %v468, 2139095040
    %v1220 = vshrl.u32 %v1219, 23
    %v1221 = vsub.s32 %v1220, 127
    %v1222 = vand.u32 2147483647, %v468
    %v1223 = vand.u32 %v1222, 8388607
    %v1224 = vor.u32 %v1223, 8388608
    %v1225 = vsub.s32 0, %v1224
    %v1226 = vadd.s32 %v1221, 1
    %vm1227 = vcmp.gt.s32.totalorder %v1226, 0
    %v1228 = vsel %vm1227, %v1226, 0
    %v1229 = vshrl.u32 %v1228, 5
    %v1230 = vand.u32 %v1228, 31
    %v1231 = vsub.s32 32, %v1230
    %v1232 = vshrl.u32 683565275, %v1231
    %v1233 = vshll.u32 683565275, %v1230
    %v1234 = vshrl.u32 2475754826, %v1231
    %v1235 = vor.u32 %v1233, %v1234
    %v1236 = vshll.u32 2475754826, %v1230
    %v1237 = vshrl.u32 2131351028, %v1231
    %v1238 = vor.u32 %v1236, %v1237
    %v1239 = vshll.u32 2131351028, %v1230
    %v1240 = vshrl.u32 2102212464, %v1231
    %v1241 = vor.u32 %v1239, %v1240
    %v1242 = vshll.u32 2102212464, %v1230
    %v1243 = vshrl.u32 920167782, %v1231
    %v1244 = vor.u32 %v1242, %v1243
    %v1245 = vshll.u32 920167782, %v1230
    %v1246 = vshrl.u32 1326507024, %v1231
    %v1247 = vor.u32 %v1245, %v1246
    %vm1248 = vcmp.lt.s32.totalorder %v1229, 1
    %vm1249 = vcmp.lt.s32.totalorder %v1229, 2
    %vm1250 = vcmp.lt.s32.totalorder %v1229, 3
    %vm1251 = vcmp.lt.s32.totalorder %v1229, 4
    %v1252 = vsel %vm1248, %v1232, %v1235
    %v1253 = vsel %vm1251, %v1241, 2102212464
    %v1254 = vsel %vm1250, %v1238, %v1253
    %v1255 = vsel %vm1249, %v1252, %v1254
    %v1256 = vsel %vm1248, %v1235, %v1238
    %v1257 = vsel %vm1251, %v1244, 920167782
    %v1258 = vsel %vm1250, %v1241, %v1257
    %v1259 = vsel %vm1249, %v1256, %v1258
    %v1260 = vsel %vm1248, %v1238, %v1241
    %v1261 = vsel %vm1251, %v1247, 1326507024
    %v1262 = vsel %vm1250, %v1244, %v1261
    %v1263 = vsel %vm1249, %v1260, %v1262
    %v1264 = vshll.u32 %v1224, 8
    %v1265 = vmul.u32.u64.compose %v1264, %v1263
    %v1266 = vextract.low.u32 %v1265
    %v1267 = vextract.high.u32 %v1265
    %v1268 = vmul.u32.u64.compose %v1264, %v1259
    %v1269 = vextract.low.u32 %v1268
    %v1270 = vextract.high.u32 %v1268
    %v1271 = vmul.u32 %v1264, %v1255
    %v1272 = vadd.s32 %v1267, %v1269
    %vm1273 = vc.u32 %v1267, %v1269
    %v1274 = vadd.s32 %v1270, 1
    %v1275 = vsel %vm1273, %v1274, %v1270
    %v1276 = vadd.s32 %v1271, %v1275
    %v1277 = vadd.s32 %v1276, 536870912
    %v1278 = vshrl.u32 %v1277, 30
    %v1279 = vshll.u32 %v1278, 30
    %v1280 = vsub.s32 %v1276, %v1279
    %vm1281 = vcmp.lt.s32.totalorder %v1280, 0
    %v1282 = vsub.s32 0, %v1280
    %v1283 = vsel %vm1281, %v1282, %v1280
    %v1284 = vclz %v1283
    %v1285 = vsub.s32 %v1284, 2
    %vm1286 = vcmp.gt.s32.totalorder 0, %v1285
    %v1287 = vsel %vm1286, 0, %v1285
    %v1288 = vsub.s32 32, %v1287
    %v1289 = vshll.u32 %v1280, %v1287
    %v1290 = vshrl.u32 %v1272, %v1288
    %v1291 = vor.u32 %v1289, %v1290
    %v1292 = vsub.s32 4294967266, %v1287
    %v1293 = vadd.s32 %v1292, 127
    %v1294 = vshll.u32 %v1293, 23
    %v1295 = vor.u32 4788187, %v1294
    %v1296 = vand.u32 2147483647, %v1295
    %v1298 = vcvt.s32.f32 %v1291
    %v1299 = vmul.f32 %v1298, %v1296
    %v1300 = vxor.u32 %v1299, 2147483648
    %v1301 = vsel %vm1218, %v1300, %v1299
    %v1302 = vsub.s32 4, %v1278
    %v1303 = vsel %vm1218, %v1302, %v1278
    %v1304 = vsel %vm1217, %v468, %v1301
    %v1305 = vsel %vm1217, 0, %v1303
    %v1306 = vcosq.f32.pop %v1304
    %v1307 = vsinq.f32.pop %v1304
    %vm1308 = vweird.f32 %v468
    %v1309 = vadd.s32 %v1305, 3
    %v1310 = vand.u32 %v1309, 3
    %vm1311 = vcmp.lt.s32.totalorder %v1310, 2
    %vm1312 = vcmp.eq.s32.totalorder %v1310, 0
    %v1313 = vxor.u32 %v1307, 2147483648
    %v1314 = vsel %vm1312, %v1306, %v1313
    %vm1315 = vcmp.eq.s32.totalorder %v1310, 2
    %v1316 = vxor.u32 %v1306, 2147483648
    %v1317 = vsel %vm1315, %v1316, %v1307
    %v1318 = vsel %vm1311, %v1314, %v1317
    %v1319 = vsel %vm1308, nan, %v1318
    %v1320 = vand.u32 2147483647, %v205
    %vm1321 = vcmp.le.f32.partialorder %v1320, 0.7853982
    %vm1322 = vcmp.lt.s32.totalorder %v205, 0
    %v1323 = vand.u32 %v205, 2139095040
    %v1324 = vshrl.u32 %v1323, 23
    %v1325 = vsub.s32 %v1324, 127
    %v1326 = vand.u32 2147483647, %v205
    %v1327 = vand.u32 %v1326, 8388607
    %v1328 = vor.u32 %v1327, 8388608
    %v1329 = vsub.s32 0, %v1328
    %v1330 = vadd.s32 %v1325, 1
    %vm1331 = vcmp.gt.s32.totalorder %v1330, 0
    %v1332 = vsel %vm1331, %v1330, 0
    %v1333 = vshrl.u32 %v1332, 5
    %v1334 = vand.u32 %v1332, 31
    %v1335 = vsub.s32 32, %v1334
    %v1336 = vshrl.u32 683565275, %v1335
    %v1337 = vshll.u32 683565275, %v1334
    %v1338 = vshrl.u32 2475754826, %v1335
    %v1339 = vor.u32 %v1337, %v1338
    %v1340 = vshll.u32 2475754826, %v1334
    %v1341 = vshrl.u32 2131351028, %v1335
    %v1342 = vor.u32 %v1340, %v1341
    %v1343 = vshll.u32 2131351028, %v1334
    %v1344 = vshrl.u32 2102212464, %v1335
    %v1345 = vor.u32 %v1343, %v1344
    %v1346 = vshll.u32 2102212464, %v1334
    %v1347 = vshrl.u32 920167782, %v1335
    %v1348 = vor.u32 %v1346, %v1347
    %v1349 = vshll.u32 920167782, %v1334
    %v1350 = vshrl.u32 1326507024, %v1335
    %v1351 = vor.u32 %v1349, %v1350
    %vm1352 = vcmp.lt.s32.totalorder %v1333, 1
    %vm1353 = vcmp.lt.s32.totalorder %v1333, 2
    %vm1354 = vcmp.lt.s32.totalorder %v1333, 3
    %vm1355 = vcmp.lt.s32.totalorder %v1333, 4
    %v1356 = vsel %vm1352, %v1336, %v1339
    %v1357 = vsel %vm1355, %v1345, 2102212464
    %v1358 = vsel %vm1354, %v1342, %v1357
    %v1359 = vsel %vm1353, %v1356, %v1358
    %v1360 = vsel %vm1352, %v1339, %v1342
    %v1361 = vsel %vm1355, %v1348, 920167782
    %v1362 = vsel %vm1354, %v1345, %v1361
    %v1363 = vsel %vm1353, %v1360, %v1362
    %v1364 = vsel %vm1352, %v1342, %v1345
    %v1365 = vsel %vm1355, %v1351, 1326507024
    %v1366 = vsel %vm1354, %v1348, %v1365
    %v1367 = vsel %vm1353, %v1364, %v1366
    %v1368 = vshll.u32 %v1328, 8
    %v1369 = vmul.u32.u64.compose %v1368, %v1367
    %v1370 = vextract.low.u32 %v1369
    %v1371 = vextract.high.u32 %v1369
    %v1372 = vmul.u32.u64.compose %v1368, %v1363
    %v1373 = vextract.low.u32 %v1372
    %v1374 = vextract.high.u32 %v1372
    %v1375 = vmul.u32 %v1368, %v1359
    %v1376 = vadd.s32 %v1371, %v1373
    %vm1377 = vc.u32 %v1371, %v1373
    %v1378 = vadd.s32 %v1374, 1
    %v1379 = vsel %vm1377, %v1378, %v1374
    %v1380 = vadd.s32 %v1375, %v1379
    %v1381 = vadd.s32 %v1380, 536870912
    %v1382 = vshrl.u32 %v1381, 30
    %v1383 = vshll.u32 %v1382, 30
    %v1384 = vsub.s32 %v1380, %v1383
    %vm1385 = vcmp.lt.s32.totalorder %v1384, 0
    %v1386 = vsub.s32 0, %v1384
    %v1387 = vsel %vm1385, %v1386, %v1384
    %v1388 = vclz %v1387
    %v1389 = vsub.s32 %v1388, 2
    %vm1390 = vcmp.gt.s32.totalorder 0, %v1389
    %v1391 = vsel %vm1390, 0, %v1389
    %v1392 = vsub.s32 32, %v1391
    %v1393 = vshll.u32 %v1384, %v1391
    %v1394 = vshrl.u32 %v1376, %v1392
    %v1395 = vor.u32 %v1393, %v1394
    %v1396 = vsub.s32 4294967266, %v1391
    %v1397 = vadd.s32 %v1396, 127
    %v1398 = vshll.u32 %v1397, 23
    %v1399 = vor.u32 4788187, %v1398
    %v1400 = vand.u32 2147483647, %v1399
    %v1402 = vcvt.s32.f32 %v1395
    %v1403 = vmul.f32 %v1402, %v1400
    %v1404 = vxor.u32 %v1403, 2147483648
    %v1405 = vsel %vm1322, %v1404, %v1403
    %v1406 = vsub.s32 4, %v1382
    %v1407 = vsel %vm1322, %v1406, %v1382
    %v1408 = vsel %vm1321, %v205, %v1405
    %v1409 = vsel %vm1321, 0, %v1407
    %v1410 = vcosq.f32.pop %v1408
    %v1411 = vsinq.f32.pop %v1408
    %vm1412 = vweird.f32 %v205
    %v1413 = vadd.s32 %v1409, 3
    %v1414 = vand.u32 %v1413, 3
    %vm1415 = vcmp.lt.s32.totalorder %v1414, 2
    %vm1416 = vcmp.eq.s32.totalorder %v1414, 0
    %v1417 = vxor.u32 %v1411, 2147483648
    %v1418 = vsel %vm1416, %v1410, %v1417
    %vm1419 = vcmp.eq.s32.totalorder %v1414, 2
    %v1420 = vxor.u32 %v1410, 2147483648
    %v1421 = vsel %vm1419, %v1420, %v1411
    %v1422 = vsel %vm1415, %v1418, %v1421
    %v1423 = vsel %vm1412, nan, %v1422
    %v1424 = vand.u32 2147483647, %v207
    %vm1425 = vcmp.le.f32.partialorder %v1424, 0.7853982
    %vm1426 = vcmp.lt.s32.totalorder %v207, 0
    %v1427 = vand.u32 %v207, 2139095040
    %v1428 = vshrl.u32 %v1427, 23
    %v1429 = vsub.s32 %v1428, 127
    %v1430 = vand.u32 2147483647, %v207
    %v1431 = vand.u32 %v1430, 8388607
    %v1432 = vor.u32 %v1431, 8388608
    %v1433 = vsub.s32 0, %v1432
    %v1434 = vadd.s32 %v1429, 1
    %vm1435 = vcmp.gt.s32.totalorder %v1434, 0
    %v1436 = vsel %vm1435, %v1434, 0
    %v1437 = vshrl.u32 %v1436, 5
    %v1438 = vand.u32 %v1436, 31
    %v1439 = vsub.s32 32, %v1438
    %v1440 = vshrl.u32 683565275, %v1439
    %v1441 = vshll.u32 683565275, %v1438
    %v1442 = vshrl.u32 2475754826, %v1439
    %v1443 = vor.u32 %v1441, %v1442
    %v1444 = vshll.u32 2475754826, %v1438
    %v1445 = vshrl.u32 2131351028, %v1439
    %v1446 = vor.u32 %v1444, %v1445
    %v1447 = vshll.u32 2131351028, %v1438
    %v1448 = vshrl.u32 2102212464, %v1439
    %v1449 = vor.u32 %v1447, %v1448
    %v1450 = vshll.u32 2102212464, %v1438
    %v1451 = vshrl.u32 920167782, %v1439
    %v1452 = vor.u32 %v1450, %v1451
    %v1453 = vshll.u32 920167782, %v1438
    %v1454 = vshrl.u32 1326507024, %v1439
    %v1455 = vor.u32 %v1453, %v1454
    %vm1456 = vcmp.lt.s32.totalorder %v1437, 1
    %vm1457 = vcmp.lt.s32.totalorder %v1437, 2
    %vm1458 = vcmp.lt.s32.totalorder %v1437, 3
    %vm1459 = vcmp.lt.s32.totalorder %v1437, 4
    %v1460 = vsel %vm1456, %v1440, %v1443
    %v1461 = vsel %vm1459, %v1449, 2102212464
    %v1462 = vsel %vm1458, %v1446, %v1461
    %v1463 = vsel %vm1457, %v1460, %v1462
    %v1464 = vsel %vm1456, %v1443, %v1446
    %v1465 = vsel %vm1459, %v1452, 920167782
    %v1466 = vsel %vm1458, %v1449, %v1465
    %v1467 = vsel %vm1457, %v1464, %v1466
    %v1468 = vsel %vm1456, %v1446, %v1449
    %v1469 = vsel %vm1459, %v1455, 1326507024
    %v1470 = vsel %vm1458, %v1452, %v1469
    %v1471 = vsel %vm1457, %v1468, %v1470
    %v1472 = vshll.u32 %v1432, 8
    %v1473 = vmul.u32.u64.compose %v1472, %v1471
    %v1474 = vextract.low.u32 %v1473
    %v1475 = vextract.high.u32 %v1473
    %v1476 = vmul.u32.u64.compose %v1472, %v1467
    %v1477 = vextract.low.u32 %v1476
    %v1478 = vextract.high.u32 %v1476
    %v1479 = vmul.u32 %v1472, %v1463
    %v1480 = vadd.s32 %v1475, %v1477
    %vm1481 = vc.u32 %v1475, %v1477
    %v1482 = vadd.s32 %v1478, 1
    %v1483 = vsel %vm1481, %v1482, %v1478
    %v1484 = vadd.s32 %v1479, %v1483
    %v1485 = vadd.s32 %v1484, 536870912
    %v1486 = vshrl.u32 %v1485, 30
    %v1487 = vshll.u32 %v1486, 30
    %v1488 = vsub.s32 %v1484, %v1487
    %vm1489 = vcmp.lt.s32.totalorder %v1488, 0
    %v1490 = vsub.s32 0, %v1488
    %v1491 = vsel %vm1489, %v1490, %v1488
    %v1492 = vclz %v1491
    %v1493 = vsub.s32 %v1492, 2
    %vm1494 = vcmp.gt.s32.totalorder 0, %v1493
    %v1495 = vsel %vm1494, 0, %v1493
    %v1496 = vsub.s32 32, %v1495
    %v1497 = vshll.u32 %v1488, %v1495
    %v1498 = vshrl.u32 %v1480, %v1496
    %v1499 = vor.u32 %v1497, %v1498
    %v1500 = vsub.s32 4294967266, %v1495
    %v1501 = vadd.s32 %v1500, 127
    %v1502 = vshll.u32 %v1501, 23
    %v1503 = vor.u32 4788187, %v1502
    %v1504 = vand.u32 2147483647, %v1503
    %v1506 = vcvt.s32.f32 %v1499
    %v1507 = vmul.f32 %v1506, %v1504
    %v1508 = vxor.u32 %v1507, 2147483648
    %v1509 = vsel %vm1426, %v1508, %v1507
    %v1510 = vsub.s32 4, %v1486
    %v1511 = vsel %vm1426, %v1510, %v1486
    %v1512 = vsel %vm1425, %v207, %v1509
    %v1513 = vsel %vm1425, 0, %v1511
    %v1514 = vcosq.f32.pop %v1512
    %v1515 = vsinq.f32.pop %v1512
    %vm1516 = vweird.f32 %v207
    %v1517 = vadd.s32 %v1513, 3
    %v1518 = vand.u32 %v1517, 3
    %vm1519 = vcmp.lt.s32.totalorder %v1518, 2
    %vm1520 = vcmp.eq.s32.totalorder %v1518, 0
    %v1521 = vxor.u32 %v1515, 2147483648
    %v1522 = vsel %vm1520, %v1514, %v1521
    %vm1523 = vcmp.eq.s32.totalorder %v1518, 2
    %v1524 = vxor.u32 %v1514, 2147483648
    %v1525 = vsel %vm1523, %v1524, %v1515
    %v1526 = vsel %vm1519, %v1522, %v1525
    %v1527 = vsel %vm1516, nan, %v1526
    %v1528 = vand.u32 2147483647, %v294
    %vm1529 = vcmp.le.f32.partialorder %v1528, 0.7853982
    %vm1530 = vcmp.lt.s32.totalorder %v294, 0
    %v1531 = vand.u32 %v294, 2139095040
    %v1532 = vshrl.u32 %v1531, 23
    %v1533 = vsub.s32 %v1532, 127
    %v1534 = vand.u32 2147483647, %v294
    %v1535 = vand.u32 %v1534, 8388607
    %v1536 = vor.u32 %v1535, 8388608
    %v1537 = vsub.s32 0, %v1536
    %v1538 = vadd.s32 %v1533, 1
    %vm1539 = vcmp.gt.s32.totalorder %v1538, 0
    %v1540 = vsel %vm1539, %v1538, 0
    %v1541 = vshrl.u32 %v1540, 5
    %v1542 = vand.u32 %v1540, 31
    %v1543 = vsub.s32 32, %v1542
    %v1544 = vshrl.u32 683565275, %v1543
    %v1545 = vshll.u32 683565275, %v1542
    %v1546 = vshrl.u32 2475754826, %v1543
    %v1547 = vor.u32 %v1545, %v1546
    %v1548 = vshll.u32 2475754826, %v1542
    %v1549 = vshrl.u32 2131351028, %v1543
    %v1550 = vor.u32 %v1548, %v1549
    %v1551 = vshll.u32 2131351028, %v1542
    %v1552 = vshrl.u32 2102212464, %v1543
    %v1553 = vor.u32 %v1551, %v1552
    %v1554 = vshll.u32 2102212464, %v1542
    %v1555 = vshrl.u32 920167782, %v1543
    %v1556 = vor.u32 %v1554, %v1555
    %v1557 = vshll.u32 920167782, %v1542
    %v1558 = vshrl.u32 1326507024, %v1543
    %v1559 = vor.u32 %v1557, %v1558
    %vm1560 = vcmp.lt.s32.totalorder %v1541, 1
    %vm1561 = vcmp.lt.s32.totalorder %v1541, 2
    %vm1562 = vcmp.lt.s32.totalorder %v1541, 3
    %vm1563 = vcmp.lt.s32.totalorder %v1541, 4
    %v1564 = vsel %vm1560, %v1544, %v1547
    %v1565 = vsel %vm1563, %v1553, 2102212464
    %v1566 = vsel %vm1562, %v1550, %v1565
    %v1567 = vsel %vm1561, %v1564, %v1566
    %v1568 = vsel %vm1560, %v1547, %v1550
    %v1569 = vsel %vm1563, %v1556, 920167782
    %v1570 = vsel %vm1562, %v1553, %v1569
    %v1571 = vsel %vm1561, %v1568, %v1570
    %v1572 = vsel %vm1560, %v1550, %v1553
    %v1573 = vsel %vm1563, %v1559, 1326507024
    %v1574 = vsel %vm1562, %v1556, %v1573
    %v1575 = vsel %vm1561, %v1572, %v1574
    %v1576 = vshll.u32 %v1536, 8
    %v1577 = vmul.u32.u64.compose %v1576, %v1575
    %v1578 = vextract.low.u32 %v1577
    %v1579 = vextract.high.u32 %v1577
    %v1580 = vmul.u32.u64.compose %v1576, %v1571
    %v1581 = vextract.low.u32 %v1580
    %v1582 = vextract.high.u32 %v1580
    %v1583 = vmul.u32 %v1576, %v1567
    %v1584 = vadd.s32 %v1579, %v1581
    %vm1585 = vc.u32 %v1579, %v1581
    %v1586 = vadd.s32 %v1582, 1
    %v1587 = vsel %vm1585, %v1586, %v1582
    %v1588 = vadd.s32 %v1583, %v1587
    %v1589 = vadd.s32 %v1588, 536870912
    %v1590 = vshrl.u32 %v1589, 30
    %v1591 = vshll.u32 %v1590, 30
    %v1592 = vsub.s32 %v1588, %v1591
    %vm1593 = vcmp.lt.s32.totalorder %v1592, 0
    %v1594 = vsub.s32 0, %v1592
    %v1595 = vsel %vm1593, %v1594, %v1592
    %v1596 = vclz %v1595
    %v1597 = vsub.s32 %v1596, 2
    %vm1598 = vcmp.gt.s32.totalorder 0, %v1597
    %v1599 = vsel %vm1598, 0, %v1597
    %v1600 = vsub.s32 32, %v1599
    %v1601 = vshll.u32 %v1592, %v1599
    %v1602 = vshrl.u32 %v1584, %v1600
    %v1603 = vor.u32 %v1601, %v1602
    %v1604 = vsub.s32 4294967266, %v1599
    %v1605 = vadd.s32 %v1604, 127
    %v1606 = vshll.u32 %v1605, 23
    %v1607 = vor.u32 4788187, %v1606
    %v1608 = vand.u32 2147483647, %v1607
    %v1610 = vcvt.s32.f32 %v1603
    %v1611 = vmul.f32 %v1610, %v1608
    %v1612 = vxor.u32 %v1611, 2147483648
    %v1613 = vsel %vm1530, %v1612, %v1611
    %v1614 = vsub.s32 4, %v1590
    %v1615 = vsel %vm1530, %v1614, %v1590
    %v1616 = vsel %vm1529, %v294, %v1613
    %v1617 = vsel %vm1529, 0, %v1615
    %v1618 = vcosq.f32.pop %v1616
    %v1619 = vsinq.f32.pop %v1616
    %vm1620 = vweird.f32 %v294
    %v1621 = vadd.s32 %v1617, 3
    %v1622 = vand.u32 %v1621, 3
    %vm1623 = vcmp.lt.s32.totalorder %v1622, 2
    %vm1624 = vcmp.eq.s32.totalorder %v1622, 0
    %v1625 = vxor.u32 %v1619, 2147483648
    %v1626 = vsel %vm1624, %v1618, %v1625
    %vm1627 = vcmp.eq.s32.totalorder %v1622, 2
    %v1628 = vxor.u32 %v1618, 2147483648
    %v1629 = vsel %vm1627, %v1628, %v1619
    %v1630 = vsel %vm1623, %v1626, %v1629
    %v1631 = vsel %vm1620, nan, %v1630
    %v1632 = vand.u32 2147483647, %v296
    %vm1633 = vcmp.le.f32.partialorder %v1632, 0.7853982
    %vm1634 = vcmp.lt.s32.totalorder %v296, 0
    %v1635 = vand.u32 %v296, 2139095040
    %v1636 = vshrl.u32 %v1635, 23
    %v1637 = vsub.s32 %v1636, 127
    %v1638 = vand.u32 2147483647, %v296
    %v1639 = vand.u32 %v1638, 8388607
    %v1640 = vor.u32 %v1639, 8388608
    %v1641 = vsub.s32 0, %v1640
    %v1642 = vadd.s32 %v1637, 1
    %vm1643 = vcmp.gt.s32.totalorder %v1642, 0
    %v1644 = vsel %vm1643, %v1642, 0
    %v1645 = vshrl.u32 %v1644, 5
    %v1646 = vand.u32 %v1644, 31
    %v1647 = vsub.s32 32, %v1646
    %v1648 = vshrl.u32 683565275, %v1647
    %v1649 = vshll.u32 683565275, %v1646
    %v1650 = vshrl.u32 2475754826, %v1647
    %v1651 = vor.u32 %v1649, %v1650
    %v1652 = vshll.u32 2475754826, %v1646
    %v1653 = vshrl.u32 2131351028, %v1647
    %v1654 = vor.u32 %v1652, %v1653
    %v1655 = vshll.u32 2131351028, %v1646
    %v1656 = vshrl.u32 2102212464, %v1647
    %v1657 = vor.u32 %v1655, %v1656
    %v1658 = vshll.u32 2102212464, %v1646
    %v1659 = vshrl.u32 920167782, %v1647
    %v1660 = vor.u32 %v1658, %v1659
    %v1661 = vshll.u32 920167782, %v1646
    %v1662 = vshrl.u32 1326507024, %v1647
    %v1663 = vor.u32 %v1661, %v1662
    %vm1664 = vcmp.lt.s32.totalorder %v1645, 1
    %vm1665 = vcmp.lt.s32.totalorder %v1645, 2
    %vm1666 = vcmp.lt.s32.totalorder %v1645, 3
    %vm1667 = vcmp.lt.s32.totalorder %v1645, 4
    %v1668 = vsel %vm1664, %v1648, %v1651
    %v1669 = vsel %vm1667, %v1657, 2102212464
    %v1670 = vsel %vm1666, %v1654, %v1669
    %v1671 = vsel %vm1665, %v1668, %v1670
    %v1672 = vsel %vm1664, %v1651, %v1654
    %v1673 = vsel %vm1667, %v1660, 920167782
    %v1674 = vsel %vm1666, %v1657, %v1673
    %v1675 = vsel %vm1665, %v1672, %v1674
    %v1676 = vsel %vm1664, %v1654, %v1657
    %v1677 = vsel %vm1667, %v1663, 1326507024
    %v1678 = vsel %vm1666, %v1660, %v1677
    %v1679 = vsel %vm1665, %v1676, %v1678
    %v1680 = vshll.u32 %v1640, 8
    %v1681 = vmul.u32.u64.compose %v1680, %v1679
    %v1682 = vextract.low.u32 %v1681
    %v1683 = vextract.high.u32 %v1681
    %v1684 = vmul.u32.u64.compose %v1680, %v1675
    %v1685 = vextract.low.u32 %v1684
    %v1686 = vextract.high.u32 %v1684
    %v1687 = vmul.u32 %v1680, %v1671
    %v1688 = vadd.s32 %v1683, %v1685
    %vm1689 = vc.u32 %v1683, %v1685
    %v1690 = vadd.s32 %v1686, 1
    %v1691 = vsel %vm1689, %v1690, %v1686
    %v1692 = vadd.s32 %v1687, %v1691
    %v1693 = vadd.s32 %v1692, 536870912
    %v1694 = vshrl.u32 %v1693, 30
    %v1695 = vshll.u32 %v1694, 30
    %v1696 = vsub.s32 %v1692, %v1695
    %vm1697 = vcmp.lt.s32.totalorder %v1696, 0
    %v1698 = vsub.s32 0, %v1696
    %v1699 = vsel %vm1697, %v1698, %v1696
    %v1700 = vclz %v1699
    %v1701 = vsub.s32 %v1700, 2
    %vm1702 = vcmp.gt.s32.totalorder 0, %v1701
    %v1703 = vsel %vm1702, 0, %v1701
    %v1704 = vsub.s32 32, %v1703
    %v1705 = vshll.u32 %v1696, %v1703
    %v1706 = vshrl.u32 %v1688, %v1704
    %v1707 = vor.u32 %v1705, %v1706
    %v1708 = vsub.s32 4294967266, %v1703
    %v1709 = vadd.s32 %v1708, 127
    %v1710 = vshll.u32 %v1709, 23
    %v1711 = vor.u32 4788187, %v1710
    %v1712 = vand.u32 2147483647, %v1711
    %v1714 = vcvt.s32.f32 %v1707
    %v1715 = vmul.f32 %v1714, %v1712
    %v1716 = vxor.u32 %v1715, 2147483648
    %v1717 = vsel %vm1634, %v1716, %v1715
    %v1718 = vsub.s32 4, %v1694
    %v1719 = vsel %vm1634, %v1718, %v1694
    %v1720 = vsel %vm1633, %v296, %v1717
    %v1721 = vsel %vm1633, 0, %v1719
    %v1722 = vcosq.f32.pop %v1720
    %v1723 = vsinq.f32.pop %v1720
    %vm1724 = vweird.f32 %v296
    %v1725 = vadd.s32 %v1721, 3
    %v1726 = vand.u32 %v1725, 3
    %vm1727 = vcmp.lt.s32.totalorder %v1726, 2
    %vm1728 = vcmp.eq.s32.totalorder %v1726, 0
    %v1729 = vxor.u32 %v1723, 2147483648
    %v1730 = vsel %vm1728, %v1722, %v1729
    %vm1731 = vcmp.eq.s32.totalorder %v1726, 2
    %v1732 = vxor.u32 %v1722, 2147483648
    %v1733 = vsel %vm1731, %v1732, %v1723
    %v1734 = vsel %vm1727, %v1730, %v1733
    %v1735 = vsel %vm1724, nan, %v1734
    %v1736 = vand.u32 2147483647, %v383
    %vm1737 = vcmp.le.f32.partialorder %v1736, 0.7853982
    %vm1738 = vcmp.lt.s32.totalorder %v383, 0
    %v1739 = vand.u32 %v383, 2139095040
    %v1740 = vshrl.u32 %v1739, 23
    %v1741 = vsub.s32 %v1740, 127
    %v1742 = vand.u32 2147483647, %v383
    %v1743 = vand.u32 %v1742, 8388607
    %v1744 = vor.u32 %v1743, 8388608
    %v1745 = vsub.s32 0, %v1744
    %v1746 = vadd.s32 %v1741, 1
    %vm1747 = vcmp.gt.s32.totalorder %v1746, 0
    %v1748 = vsel %vm1747, %v1746, 0
    %v1749 = vshrl.u32 %v1748, 5
    %v1750 = vand.u32 %v1748, 31
    %v1751 = vsub.s32 32, %v1750
    %v1752 = vshrl.u32 683565275, %v1751
    %v1753 = vshll.u32 683565275, %v1750
    %v1754 = vshrl.u32 2475754826, %v1751
    %v1755 = vor.u32 %v1753, %v1754
    %v1756 = vshll.u32 2475754826, %v1750
    %v1757 = vshrl.u32 2131351028, %v1751
    %v1758 = vor.u32 %v1756, %v1757
    %v1759 = vshll.u32 2131351028, %v1750
    %v1760 = vshrl.u32 2102212464, %v1751
    %v1761 = vor.u32 %v1759, %v1760
    %v1762 = vshll.u32 2102212464, %v1750
    %v1763 = vshrl.u32 920167782, %v1751
    %v1764 = vor.u32 %v1762, %v1763
    %v1765 = vshll.u32 920167782, %v1750
    %v1766 = vshrl.u32 1326507024, %v1751
    %v1767 = vor.u32 %v1765, %v1766
    %vm1768 = vcmp.lt.s32.totalorder %v1749, 1
    %vm1769 = vcmp.lt.s32.totalorder %v1749, 2
    %vm1770 = vcmp.lt.s32.totalorder %v1749, 3
    %vm1771 = vcmp.lt.s32.totalorder %v1749, 4
    %v1772 = vsel %vm1768, %v1752, %v1755
    %v1773 = vsel %vm1771, %v1761, 2102212464
    %v1774 = vsel %vm1770, %v1758, %v1773
    %v1775 = vsel %vm1769, %v1772, %v1774
    %v1776 = vsel %vm1768, %v1755, %v1758
    %v1777 = vsel %vm1771, %v1764, 920167782
    %v1778 = vsel %vm1770, %v1761, %v1777
    %v1779 = vsel %vm1769, %v1776, %v1778
    %v1780 = vsel %vm1768, %v1758, %v1761
    %v1781 = vsel %vm1771, %v1767, 1326507024
    %v1782 = vsel %vm1770, %v1764, %v1781
    %v1783 = vsel %vm1769, %v1780, %v1782
    %v1784 = vshll.u32 %v1744, 8
    %v1785 = vmul.u32.u64.compose %v1784, %v1783
    %v1786 = vextract.low.u32 %v1785
    %v1787 = vextract.high.u32 %v1785
    %v1788 = vmul.u32.u64.compose %v1784, %v1779
    %v1789 = vextract.low.u32 %v1788
    %v1790 = vextract.high.u32 %v1788
    %v1791 = vmul.u32 %v1784, %v1775
    %v1792 = vadd.s32 %v1787, %v1789
    %vm1793 = vc.u32 %v1787, %v1789
    %v1794 = vadd.s32 %v1790, 1
    %v1795 = vsel %vm1793, %v1794, %v1790
    %v1796 = vadd.s32 %v1791, %v1795
    %v1797 = vadd.s32 %v1796, 536870912
    %v1798 = vshrl.u32 %v1797, 30
    %v1799 = vshll.u32 %v1798, 30
    %v1800 = vsub.s32 %v1796, %v1799
    %vm1801 = vcmp.lt.s32.totalorder %v1800, 0
    %v1802 = vsub.s32 0, %v1800
    %v1803 = vsel %vm1801, %v1802, %v1800
    %v1804 = vclz %v1803
    %v1805 = vsub.s32 %v1804, 2
    %vm1806 = vcmp.gt.s32.totalorder 0, %v1805
    %v1807 = vsel %vm1806, 0, %v1805
    %v1808 = vsub.s32 32, %v1807
    %v1809 = vshll.u32 %v1800, %v1807
    %v1810 = vshrl.u32 %v1792, %v1808
    %v1811 = vor.u32 %v1809, %v1810
    %v1812 = vsub.s32 4294967266, %v1807
    %v1813 = vadd.s32 %v1812, 127
    %v1814 = vshll.u32 %v1813, 23
    %v1815 = vor.u32 4788187, %v1814
    %v1816 = vand.u32 2147483647, %v1815
    %v1818 = vcvt.s32.f32 %v1811
    %v1819 = vmul.f32 %v1818, %v1816
    %v1820 = vxor.u32 %v1819, 2147483648
    %v1821 = vsel %vm1738, %v1820, %v1819
    %v1822 = vsub.s32 4, %v1798
    %v1823 = vsel %vm1738, %v1822, %v1798
    %v1824 = vsel %vm1737, %v383, %v1821
    %v1825 = vsel %vm1737, 0, %v1823
    %v1826 = vcosq.f32.pop %v1824
    %v1827 = vsinq.f32.pop %v1824
    %vm1828 = vweird.f32 %v383
    %v1829 = vadd.s32 %v1825, 3
    %v1830 = vand.u32 %v1829, 3
    %vm1831 = vcmp.lt.s32.totalorder %v1830, 2
    %vm1832 = vcmp.eq.s32.totalorder %v1830, 0
    %v1833 = vxor.u32 %v1827, 2147483648
    %v1834 = vsel %vm1832, %v1826, %v1833
    %vm1835 = vcmp.eq.s32.totalorder %v1830, 2
    %v1836 = vxor.u32 %v1826, 2147483648
    %v1837 = vsel %vm1835, %v1836, %v1827
    %v1838 = vsel %vm1831, %v1834, %v1837
    %v1839 = vsel %vm1828, nan, %v1838
    %v1840 = vand.u32 2147483647, %v385
    %vm1841 = vcmp.le.f32.partialorder %v1840, 0.7853982
    %vm1842 = vcmp.lt.s32.totalorder %v385, 0
    %v1843 = vand.u32 %v385, 2139095040
    %v1844 = vshrl.u32 %v1843, 23
    %v1845 = vsub.s32 %v1844, 127
    %v1846 = vand.u32 2147483647, %v385
    %v1847 = vand.u32 %v1846, 8388607
    %v1848 = vor.u32 %v1847, 8388608
    %v1849 = vsub.s32 0, %v1848
    %v1850 = vadd.s32 %v1845, 1
    %vm1851 = vcmp.gt.s32.totalorder %v1850, 0
    %v1852 = vsel %vm1851, %v1850, 0
    %v1853 = vshrl.u32 %v1852, 5
    %v1854 = vand.u32 %v1852, 31
    %v1855 = vsub.s32 32, %v1854
    %v1856 = vshrl.u32 683565275, %v1855
    %v1857 = vshll.u32 683565275, %v1854
    %v1858 = vshrl.u32 2475754826, %v1855
    %v1859 = vor.u32 %v1857, %v1858
    %v1860 = vshll.u32 2475754826, %v1854
    %v1861 = vshrl.u32 2131351028, %v1855
    %v1862 = vor.u32 %v1860, %v1861
    %v1863 = vshll.u32 2131351028, %v1854
    %v1864 = vshrl.u32 2102212464, %v1855
    %v1865 = vor.u32 %v1863, %v1864
    %v1866 = vshll.u32 2102212464, %v1854
    %v1867 = vshrl.u32 920167782, %v1855
    %v1868 = vor.u32 %v1866, %v1867
    %v1869 = vshll.u32 920167782, %v1854
    %v1870 = vshrl.u32 1326507024, %v1855
    %v1871 = vor.u32 %v1869, %v1870
    %vm1872 = vcmp.lt.s32.totalorder %v1853, 1
    %vm1873 = vcmp.lt.s32.totalorder %v1853, 2
    %vm1874 = vcmp.lt.s32.totalorder %v1853, 3
    %vm1875 = vcmp.lt.s32.totalorder %v1853, 4
    %v1876 = vsel %vm1872, %v1856, %v1859
    %v1877 = vsel %vm1875, %v1865, 2102212464
    %v1878 = vsel %vm1874, %v1862, %v1877
    %v1879 = vsel %vm1873, %v1876, %v1878
    %v1880 = vsel %vm1872, %v1859, %v1862
    %v1881 = vsel %vm1875, %v1868, 920167782
    %v1882 = vsel %vm1874, %v1865, %v1881
    %v1883 = vsel %vm1873, %v1880, %v1882
    %v1884 = vsel %vm1872, %v1862, %v1865
    %v1885 = vsel %vm1875, %v1871, 1326507024
    %v1886 = vsel %vm1874, %v1868, %v1885
    %v1887 = vsel %vm1873, %v1884, %v1886
    %v1888 = vshll.u32 %v1848, 8
    %v1889 = vmul.u32.u64.compose %v1888, %v1887
    %v1890 = vextract.low.u32 %v1889
    %v1891 = vextract.high.u32 %v1889
    %v1892 = vmul.u32.u64.compose %v1888, %v1883
    %v1893 = vextract.low.u32 %v1892
    %v1894 = vextract.high.u32 %v1892
    %v1895 = vmul.u32 %v1888, %v1879
    %v1896 = vadd.s32 %v1891, %v1893
    %vm1897 = vc.u32 %v1891, %v1893
    %v1898 = vadd.s32 %v1894, 1
    %v1899 = vsel %vm1897, %v1898, %v1894
    %v1900 = vadd.s32 %v1895, %v1899
    %v1901 = vadd.s32 %v1900, 536870912
    %v1902 = vshrl.u32 %v1901, 30
    %v1903 = vshll.u32 %v1902, 30
    %v1904 = vsub.s32 %v1900, %v1903
    %vm1905 = vcmp.lt.s32.totalorder %v1904, 0
    %v1906 = vsub.s32 0, %v1904
    %v1907 = vsel %vm1905, %v1906, %v1904
    %v1908 = vclz %v1907
    %v1909 = vsub.s32 %v1908, 2
    %vm1910 = vcmp.gt.s32.totalorder 0, %v1909
    %v1911 = vsel %vm1910, 0, %v1909
    %v1912 = vsub.s32 32, %v1911
    %v1913 = vshll.u32 %v1904, %v1911
    %v1914 = vshrl.u32 %v1896, %v1912
    %v1915 = vor.u32 %v1913, %v1914
    %v1916 = vsub.s32 4294967266, %v1911
    %v1917 = vadd.s32 %v1916, 127
    %v1918 = vshll.u32 %v1917, 23
    %v1919 = vor.u32 4788187, %v1918
    %v1920 = vand.u32 2147483647, %v1919
    %v1922 = vcvt.s32.f32 %v1915
    %v1923 = vmul.f32 %v1922, %v1920
    %v1924 = vxor.u32 %v1923, 2147483648
    %v1925 = vsel %vm1842, %v1924, %v1923
    %v1926 = vsub.s32 4, %v1902
    %v1927 = vsel %vm1842, %v1926, %v1902
    %v1928 = vsel %vm1841, %v385, %v1925
    %v1929 = vsel %vm1841, 0, %v1927
    %v1930 = vcosq.f32.pop %v1928
    %v1931 = vsinq.f32.pop %v1928
    %vm1932 = vweird.f32 %v385
    %v1933 = vadd.s32 %v1929, 3
    %v1934 = vand.u32 %v1933, 3
    %vm1935 = vcmp.lt.s32.totalorder %v1934, 2
    %vm1936 = vcmp.eq.s32.totalorder %v1934, 0
    %v1937 = vxor.u32 %v1931, 2147483648
    %v1938 = vsel %vm1936, %v1930, %v1937
    %vm1939 = vcmp.eq.s32.totalorder %v1934, 2
    %v1940 = vxor.u32 %v1930, 2147483648
    %v1941 = vsel %vm1939, %v1940, %v1931
    %v1942 = vsel %vm1935, %v1938, %v1941
    %v1943 = vsel %vm1932, nan, %v1942
    %v1944 = vand.u32 2147483647, %v472
    %vm1945 = vcmp.le.f32.partialorder %v1944, 0.7853982
    %vm1946 = vcmp.lt.s32.totalorder %v472, 0
    %v1947 = vand.u32 %v472, 2139095040
    %v1948 = vshrl.u32 %v1947, 23
    %v1949 = vsub.s32 %v1948, 127
    %v1950 = vand.u32 2147483647, %v472
    %v1951 = vand.u32 %v1950, 8388607
    %v1952 = vor.u32 %v1951, 8388608
    %v1953 = vsub.s32 0, %v1952
    %v1954 = vadd.s32 %v1949, 1
    %vm1955 = vcmp.gt.s32.totalorder %v1954, 0
    %v1956 = vsel %vm1955, %v1954, 0
    %v1957 = vshrl.u32 %v1956, 5
    %v1958 = vand.u32 %v1956, 31
    %v1959 = vsub.s32 32, %v1958
    %v1960 = vshrl.u32 683565275, %v1959
    %v1961 = vshll.u32 683565275, %v1958
    %v1962 = vshrl.u32 2475754826, %v1959
    %v1963 = vor.u32 %v1961, %v1962
    %v1964 = vshll.u32 2475754826, %v1958
    %v1965 = vshrl.u32 2131351028, %v1959
    %v1966 = vor.u32 %v1964, %v1965
    %v1967 = vshll.u32 2131351028, %v1958
    %v1968 = vshrl.u32 2102212464, %v1959
    %v1969 = vor.u32 %v1967, %v1968
    %v1970 = vshll.u32 2102212464, %v1958
    %v1971 = vshrl.u32 920167782, %v1959
    %v1972 = vor.u32 %v1970, %v1971
    %v1973 = vshll.u32 920167782, %v1958
    %v1974 = vshrl.u32 1326507024, %v1959
    %v1975 = vor.u32 %v1973, %v1974
    %vm1976 = vcmp.lt.s32.totalorder %v1957, 1
    %vm1977 = vcmp.lt.s32.totalorder %v1957, 2
    %vm1978 = vcmp.lt.s32.totalorder %v1957, 3
    %vm1979 = vcmp.lt.s32.totalorder %v1957, 4
    %v1980 = vsel %vm1976, %v1960, %v1963
    %v1981 = vsel %vm1979, %v1969, 2102212464
    %v1982 = vsel %vm1978, %v1966, %v1981
    %v1983 = vsel %vm1977, %v1980, %v1982
    %v1984 = vsel %vm1976, %v1963, %v1966
    %v1985 = vsel %vm1979, %v1972, 920167782
    %v1986 = vsel %vm1978, %v1969, %v1985
    %v1987 = vsel %vm1977, %v1984, %v1986
    %v1988 = vsel %vm1976, %v1966, %v1969
    %v1989 = vsel %vm1979, %v1975, 1326507024
    %v1990 = vsel %vm1978, %v1972, %v1989
    %v1991 = vsel %vm1977, %v1988, %v1990
    %v1992 = vshll.u32 %v1952, 8
    %v1993 = vmul.u32.u64.compose %v1992, %v1991
    %v1994 = vextract.low.u32 %v1993
    %v1995 = vextract.high.u32 %v1993
    %v1996 = vmul.u32.u64.compose %v1992, %v1987
    %v1997 = vextract.low.u32 %v1996
    %v1998 = vextract.high.u32 %v1996
    %v1999 = vmul.u32 %v1992, %v1983
    %v2000 = vadd.s32 %v1995, %v1997
    %vm2001 = vc.u32 %v1995, %v1997
    %v2002 = vadd.s32 %v1998, 1
    %v2003 = vsel %vm2001, %v2002, %v1998
    %v2004 = vadd.s32 %v1999, %v2003
    %v2005 = vadd.s32 %v2004, 536870912
    %v2006 = vshrl.u32 %v2005, 30
    %v2007 = vshll.u32 %v2006, 30
    %v2008 = vsub.s32 %v2004, %v2007
    %vm2009 = vcmp.lt.s32.totalorder %v2008, 0
    %v2010 = vsub.s32 0, %v2008
    %v2011 = vsel %vm2009, %v2010, %v2008
    %v2012 = vclz %v2011
    %v2013 = vsub.s32 %v2012, 2
    %vm2014 = vcmp.gt.s32.totalorder 0, %v2013
    %v2015 = vsel %vm2014, 0, %v2013
    %v2016 = vsub.s32 32, %v2015
    %v2017 = vshll.u32 %v2008, %v2015
    %v2018 = vshrl.u32 %v2000, %v2016
    %v2019 = vor.u32 %v2017, %v2018
    %v2020 = vsub.s32 4294967266, %v2015
    %v2021 = vadd.s32 %v2020, 127
    %v2022 = vshll.u32 %v2021, 23
    %v2023 = vor.u32 4788187, %v2022
    %v2024 = vand.u32 2147483647, %v2023
    %v2026 = vcvt.s32.f32 %v2019
    %v2027 = vmul.f32 %v2026, %v2024
    %v2028 = vxor.u32 %v2027, 2147483648
    %v2029 = vsel %vm1946, %v2028, %v2027
    %v2030 = vsub.s32 4, %v2006
    %v2031 = vsel %vm1946, %v2030, %v2006
    %v2032 = vsel %vm1945, %v472, %v2029
    %v2033 = vsel %vm1945, 0, %v2031
    %v2034 = vcosq.f32.pop %v2032
    %v2035 = vsinq.f32.pop %v2032
    %vm2036 = vweird.f32 %v472
    %v2037 = vadd.s32 %v2033, 3
    %v2038 = vand.u32 %v2037, 3
    %vm2039 = vcmp.lt.s32.totalorder %v2038, 2
    %vm2040 = vcmp.eq.s32.totalorder %v2038, 0
    %v2041 = vxor.u32 %v2035, 2147483648
    %v2042 = vsel %vm2040, %v2034, %v2041
    %vm2043 = vcmp.eq.s32.totalorder %v2038, 2
    %v2044 = vxor.u32 %v2034, 2147483648
    %v2045 = vsel %vm2043, %v2044, %v2035
    %v2046 = vsel %vm2039, %v2042, %v2045
    %v2047 = vsel %vm2036, nan, %v2046
    %v2048 = vand.u32 2147483647, %v474
    %vm2049 = vcmp.le.f32.partialorder %v2048, 0.7853982
    %vm2050 = vcmp.lt.s32.totalorder %v474, 0
    %v2051 = vand.u32 %v474, 2139095040
    %v2052 = vshrl.u32 %v2051, 23
    %v2053 = vsub.s32 %v2052, 127
    %v2054 = vand.u32 2147483647, %v474
    %v2055 = vand.u32 %v2054, 8388607
    %v2056 = vor.u32 %v2055, 8388608
    %v2057 = vsub.s32 0, %v2056
    %v2058 = vadd.s32 %v2053, 1
    %vm2059 = vcmp.gt.s32.totalorder %v2058, 0
    %v2060 = vsel %vm2059, %v2058, 0
    %v2061 = vshrl.u32 %v2060, 5
    %v2062 = vand.u32 %v2060, 31
    %v2063 = vsub.s32 32, %v2062
    %v2064 = vshrl.u32 683565275, %v2063
    %v2065 = vshll.u32 683565275, %v2062
    %v2066 = vshrl.u32 2475754826, %v2063
    %v2067 = vor.u32 %v2065, %v2066
    %v2068 = vshll.u32 2475754826, %v2062
    %v2069 = vshrl.u32 2131351028, %v2063
    %v2070 = vor.u32 %v2068, %v2069
    %v2071 = vshll.u32 2131351028, %v2062
    %v2072 = vshrl.u32 2102212464, %v2063
    %v2073 = vor.u32 %v2071, %v2072
    %v2074 = vshll.u32 2102212464, %v2062
    %v2075 = vshrl.u32 920167782, %v2063
    %v2076 = vor.u32 %v2074, %v2075
    %v2077 = vshll.u32 920167782, %v2062
    %v2078 = vshrl.u32 1326507024, %v2063
    %v2079 = vor.u32 %v2077, %v2078
    %vm2080 = vcmp.lt.s32.totalorder %v2061, 1
    %vm2081 = vcmp.lt.s32.totalorder %v2061, 2
    %vm2082 = vcmp.lt.s32.totalorder %v2061, 3
    %vm2083 = vcmp.lt.s32.totalorder %v2061, 4
    %v2084 = vsel %vm2080, %v2064, %v2067
    %v2085 = vsel %vm2083, %v2073, 2102212464
    %v2086 = vsel %vm2082, %v2070, %v2085
    %v2087 = vsel %vm2081, %v2084, %v2086
    %v2088 = vsel %vm2080, %v2067, %v2070
    %v2089 = vsel %vm2083, %v2076, 920167782
    %v2090 = vsel %vm2082, %v2073, %v2089
    %v2091 = vsel %vm2081, %v2088, %v2090
    %v2092 = vsel %vm2080, %v2070, %v2073
    %v2093 = vsel %vm2083, %v2079, 1326507024
    %v2094 = vsel %vm2082, %v2076, %v2093
    %v2095 = vsel %vm2081, %v2092, %v2094
    %v2096 = vshll.u32 %v2056, 8
    %v2097 = vmul.u32.u64.compose %v2096, %v2095
    %v2098 = vextract.low.u32 %v2097
    %v2099 = vextract.high.u32 %v2097
    %v2100 = vmul.u32.u64.compose %v2096, %v2091
    %v2101 = vextract.low.u32 %v2100
    %v2102 = vextract.high.u32 %v2100
    %v2103 = vmul.u32 %v2096, %v2087
    %v2104 = vadd.s32 %v2099, %v2101
    %vm2105 = vc.u32 %v2099, %v2101
    %v2106 = vadd.s32 %v2102, 1
    %v2107 = vsel %vm2105, %v2106, %v2102
    %v2108 = vadd.s32 %v2103, %v2107
    %v2109 = vadd.s32 %v2108, 536870912
    %v2110 = vshrl.u32 %v2109, 30
    %v2111 = vshll.u32 %v2110, 30
    %v2112 = vsub.s32 %v2108, %v2111
    %vm2113 = vcmp.lt.s32.totalorder %v2112, 0
    %v2114 = vsub.s32 0, %v2112
    %v2115 = vsel %vm2113, %v2114, %v2112
    %v2116 = vclz %v2115
    %v2117 = vsub.s32 %v2116, 2
    %vm2118 = vcmp.gt.s32.totalorder 0, %v2117
    %v2119 = vsel %vm2118, 0, %v2117
    %v2120 = vsub.s32 32, %v2119
    %v2121 = vshll.u32 %v2112, %v2119
    %v2122 = vshrl.u32 %v2104, %v2120
    %v2123 = vor.u32 %v2121, %v2122
    %v2124 = vsub.s32 4294967266, %v2119
    %v2125 = vadd.s32 %v2124, 127
    %v2126 = vshll.u32 %v2125, 23
    %v2127 = vor.u32 4788187, %v2126
    %v2128 = vand.u32 2147483647, %v2127
    %v2130 = vcvt.s32.f32 %v2123
    %v2131 = vmul.f32 %v2130, %v2128
    %v2132 = vxor.u32 %v2131, 2147483648
    %v2133 = vsel %vm2050, %v2132, %v2131
    %v2134 = vsub.s32 4, %v2110
    %v2135 = vsel %vm2050, %v2134, %v2110
    %v2136 = vsel %vm2049, %v474, %v2133
    %v2137 = vsel %vm2049, 0, %v2135
    %v2138 = vcosq.f32.pop %v2136
    %v2139 = vsinq.f32.pop %v2136
    %vm2140 = vweird.f32 %v474
    %v2141 = vadd.s32 %v2137, 3
    %v2142 = vand.u32 %v2141, 3
    %vm2143 = vcmp.lt.s32.totalorder %v2142, 2
    %vm2144 = vcmp.eq.s32.totalorder %v2142, 0
    %v2145 = vxor.u32 %v2139, 2147483648
    %v2146 = vsel %vm2144, %v2138, %v2145
    %vm2147 = vcmp.eq.s32.totalorder %v2142, 2
    %v2148 = vxor.u32 %v2138, 2147483648
    %v2149 = vsel %vm2147, %v2148, %v2139
    %v2150 = vsel %vm2143, %v2146, %v2149
    %v2151 = vsel %vm2140, nan, %v2150
    %v2152 = vand.u32 2147483647, %v211
    %vm2153 = vcmp.le.f32.partialorder %v2152, 0.7853982
    %vm2154 = vcmp.lt.s32.totalorder %v211, 0
    %v2155 = vand.u32 %v211, 2139095040
    %v2156 = vshrl.u32 %v2155, 23
    %v2157 = vsub.s32 %v2156, 127
    %v2158 = vand.u32 2147483647, %v211
    %v2159 = vand.u32 %v2158, 8388607
    %v2160 = vor.u32 %v2159, 8388608
    %v2161 = vsub.s32 0, %v2160
    %v2162 = vadd.s32 %v2157, 1
    %vm2163 = vcmp.gt.s32.totalorder %v2162, 0
    %v2164 = vsel %vm2163, %v2162, 0
    %v2165 = vshrl.u32 %v2164, 5
    %v2166 = vand.u32 %v2164, 31
    %v2167 = vsub.s32 32, %v2166
    %v2168 = vshrl.u32 683565275, %v2167
    %v2169 = vshll.u32 683565275, %v2166
    %v2170 = vshrl.u32 2475754826, %v2167
    %v2171 = vor.u32 %v2169, %v2170
    %v2172 = vshll.u32 2475754826, %v2166
    %v2173 = vshrl.u32 2131351028, %v2167
    %v2174 = vor.u32 %v2172, %v2173
    %v2175 = vshll.u32 2131351028, %v2166
    %v2176 = vshrl.u32 2102212464, %v2167
    %v2177 = vor.u32 %v2175, %v2176
    %v2178 = vshll.u32 2102212464, %v2166
    %v2179 = vshrl.u32 920167782, %v2167
    %v2180 = vor.u32 %v2178, %v2179
    %v2181 = vshll.u32 920167782, %v2166
    %v2182 = vshrl.u32 1326507024, %v2167
    %v2183 = vor.u32 %v2181, %v2182
    %vm2184 = vcmp.lt.s32.totalorder %v2165, 1
    %vm2185 = vcmp.lt.s32.totalorder %v2165, 2
    %vm2186 = vcmp.lt.s32.totalorder %v2165, 3
    %vm2187 = vcmp.lt.s32.totalorder %v2165, 4
    %v2188 = vsel %vm2184, %v2168, %v2171
    %v2189 = vsel %vm2187, %v2177, 2102212464
    %v2190 = vsel %vm2186, %v2174, %v2189
    %v2191 = vsel %vm2185, %v2188, %v2190
    %v2192 = vsel %vm2184, %v2171, %v2174
    %v2193 = vsel %vm2187, %v2180, 920167782
    %v2194 = vsel %vm2186, %v2177, %v2193
    %v2195 = vsel %vm2185, %v2192, %v2194
    %v2196 = vsel %vm2184, %v2174, %v2177
    %v2197 = vsel %vm2187, %v2183, 1326507024
    %v2198 = vsel %vm2186, %v2180, %v2197
    %v2199 = vsel %vm2185, %v2196, %v2198
    %v2200 = vshll.u32 %v2160, 8
    %v2201 = vmul.u32.u64.compose %v2200, %v2199
    %v2202 = vextract.low.u32 %v2201
    %v2203 = vextract.high.u32 %v2201
    %v2204 = vmul.u32.u64.compose %v2200, %v2195
    %v2205 = vextract.low.u32 %v2204
    %v2206 = vextract.high.u32 %v2204
    %v2207 = vmul.u32 %v2200, %v2191
    %v2208 = vadd.s32 %v2203, %v2205
    %vm2209 = vc.u32 %v2203, %v2205
    %v2210 = vadd.s32 %v2206, 1
    %v2211 = vsel %vm2209, %v2210, %v2206
    %v2212 = vadd.s32 %v2207, %v2211
    %v2213 = vadd.s32 %v2212, 536870912
    %v2214 = vshrl.u32 %v2213, 30
    %v2215 = vshll.u32 %v2214, 30
    %v2216 = vsub.s32 %v2212, %v2215
    %vm2217 = vcmp.lt.s32.totalorder %v2216, 0
    %v2218 = vsub.s32 0, %v2216
    %v2219 = vsel %vm2217, %v2218, %v2216
    %v2220 = vclz %v2219
    %v2221 = vsub.s32 %v2220, 2
    %vm2222 = vcmp.gt.s32.totalorder 0, %v2221
    %v2223 = vsel %vm2222, 0, %v2221
    %v2224 = vsub.s32 32, %v2223
    %v2225 = vshll.u32 %v2216, %v2223
    %v2226 = vshrl.u32 %v2208, %v2224
    %v2227 = vor.u32 %v2225, %v2226
    %v2228 = vsub.s32 4294967266, %v2223
    %v2229 = vadd.s32 %v2228, 127
    %v2230 = vshll.u32 %v2229, 23
    %v2231 = vor.u32 4788187, %v2230
    %v2232 = vand.u32 2147483647, %v2231
    %v2234 = vcvt.s32.f32 %v2227
    %v2235 = vmul.f32 %v2234, %v2232
    %v2236 = vxor.u32 %v2235, 2147483648
    %v2237 = vsel %vm2154, %v2236, %v2235
    %v2238 = vsub.s32 4, %v2214
    %v2239 = vsel %vm2154, %v2238, %v2214
    %v2240 = vsel %vm2153, %v211, %v2237
    %v2241 = vsel %vm2153, 0, %v2239
    %v2242 = vcosq.f32.pop %v2240
    %v2243 = vsinq.f32.pop %v2240
    %vm2244 = vweird.f32 %v211
    %v2245 = vadd.s32 %v2241, 3
    %v2246 = vand.u32 %v2245, 3
    %vm2247 = vcmp.lt.s32.totalorder %v2246, 2
    %vm2248 = vcmp.eq.s32.totalorder %v2246, 0
    %v2249 = vxor.u32 %v2243, 2147483648
    %v2250 = vsel %vm2248, %v2242, %v2249
    %vm2251 = vcmp.eq.s32.totalorder %v2246, 2
    %v2252 = vxor.u32 %v2242, 2147483648
    %v2253 = vsel %vm2251, %v2252, %v2243
    %v2254 = vsel %vm2247, %v2250, %v2253
    %v2255 = vsel %vm2244, nan, %v2254
    %v2256 = vand.u32 2147483647, %v213
    %vm2257 = vcmp.le.f32.partialorder %v2256, 0.7853982
    %vm2258 = vcmp.lt.s32.totalorder %v213, 0
    %v2259 = vand.u32 %v213, 2139095040
    %v2260 = vshrl.u32 %v2259, 23
    %v2261 = vsub.s32 %v2260, 127
    %v2262 = vand.u32 2147483647, %v213
    %v2263 = vand.u32 %v2262, 8388607
    %v2264 = vor.u32 %v2263, 8388608
    %v2265 = vsub.s32 0, %v2264
    %v2266 = vadd.s32 %v2261, 1
    %vm2267 = vcmp.gt.s32.totalorder %v2266, 0
    %v2268 = vsel %vm2267, %v2266, 0
    %v2269 = vshrl.u32 %v2268, 5
    %v2270 = vand.u32 %v2268, 31
    %v2271 = vsub.s32 32, %v2270
    %v2272 = vshrl.u32 683565275, %v2271
    %v2273 = vshll.u32 683565275, %v2270
    %v2274 = vshrl.u32 2475754826, %v2271
    %v2275 = vor.u32 %v2273, %v2274
    %v2276 = vshll.u32 2475754826, %v2270
    %v2277 = vshrl.u32 2131351028, %v2271
    %v2278 = vor.u32 %v2276, %v2277
    %v2279 = vshll.u32 2131351028, %v2270
    %v2280 = vshrl.u32 2102212464, %v2271
    %v2281 = vor.u32 %v2279, %v2280
    %v2282 = vshll.u32 2102212464, %v2270
    %v2283 = vshrl.u32 920167782, %v2271
    %v2284 = vor.u32 %v2282, %v2283
    %v2285 = vshll.u32 920167782, %v2270
    %v2286 = vshrl.u32 1326507024, %v2271
    %v2287 = vor.u32 %v2285, %v2286
    %vm2288 = vcmp.lt.s32.totalorder %v2269, 1
    %vm2289 = vcmp.lt.s32.totalorder %v2269, 2
    %vm2290 = vcmp.lt.s32.totalorder %v2269, 3
    %vm2291 = vcmp.lt.s32.totalorder %v2269, 4
    %v2292 = vsel %vm2288, %v2272, %v2275
    %v2293 = vsel %vm2291, %v2281, 2102212464
    %v2294 = vsel %vm2290, %v2278, %v2293
    %v2295 = vsel %vm2289, %v2292, %v2294
    %v2296 = vsel %vm2288, %v2275, %v2278
    %v2297 = vsel %vm2291, %v2284, 920167782
    %v2298 = vsel %vm2290, %v2281, %v2297
    %v2299 = vsel %vm2289, %v2296, %v2298
    %v2300 = vsel %vm2288, %v2278, %v2281
    %v2301 = vsel %vm2291, %v2287, 1326507024
    %v2302 = vsel %vm2290, %v2284, %v2301
    %v2303 = vsel %vm2289, %v2300, %v2302
    %v2304 = vshll.u32 %v2264, 8
    %v2305 = vmul.u32.u64.compose %v2304, %v2303
    %v2306 = vextract.low.u32 %v2305
    %v2307 = vextract.high.u32 %v2305
    %v2308 = vmul.u32.u64.compose %v2304, %v2299
    %v2309 = vextract.low.u32 %v2308
    %v2310 = vextract.high.u32 %v2308
    %v2311 = vmul.u32 %v2304, %v2295
    %v2312 = vadd.s32 %v2307, %v2309
    %vm2313 = vc.u32 %v2307, %v2309
    %v2314 = vadd.s32 %v2310, 1
    %v2315 = vsel %vm2313, %v2314, %v2310
    %v2316 = vadd.s32 %v2311, %v2315
    %v2317 = vadd.s32 %v2316, 536870912
    %v2318 = vshrl.u32 %v2317, 30
    %v2319 = vshll.u32 %v2318, 30
    %v2320 = vsub.s32 %v2316, %v2319
    %vm2321 = vcmp.lt.s32.totalorder %v2320, 0
    %v2322 = vsub.s32 0, %v2320
    %v2323 = vsel %vm2321, %v2322, %v2320
    %v2324 = vclz %v2323
    %v2325 = vsub.s32 %v2324, 2
    %vm2326 = vcmp.gt.s32.totalorder 0, %v2325
    %v2327 = vsel %vm2326, 0, %v2325
    %v2328 = vsub.s32 32, %v2327
    %v2329 = vshll.u32 %v2320, %v2327
    %v2330 = vshrl.u32 %v2312, %v2328
    %v2331 = vor.u32 %v2329, %v2330
    %v2332 = vsub.s32 4294967266, %v2327
    %v2333 = vadd.s32 %v2332, 127
    %v2334 = vshll.u32 %v2333, 23
    %v2335 = vor.u32 4788187, %v2334
    %v2336 = vand.u32 2147483647, %v2335
    %v2338 = vcvt.s32.f32 %v2331
    %v2339 = vmul.f32 %v2338, %v2336
    %v2340 = vxor.u32 %v2339, 2147483648
    %v2341 = vsel %vm2258, %v2340, %v2339
    %v2342 = vsub.s32 4, %v2318
    %v2343 = vsel %vm2258, %v2342, %v2318
    %v2344 = vsel %vm2257, %v213, %v2341
    %v2345 = vsel %vm2257, 0, %v2343
    %v2346 = vcosq.f32.pop %v2344
    %v2347 = vsinq.f32.pop %v2344
    %vm2348 = vweird.f32 %v213
    %v2349 = vadd.s32 %v2345, 3
    %v2350 = vand.u32 %v2349, 3
    %vm2351 = vcmp.lt.s32.totalorder %v2350, 2
    %vm2352 = vcmp.eq.s32.totalorder %v2350, 0
    %v2353 = vxor.u32 %v2347, 2147483648
    %v2354 = vsel %vm2352, %v2346, %v2353
    %vm2355 = vcmp.eq.s32.totalorder %v2350, 2
    %v2356 = vxor.u32 %v2346, 2147483648
    %v2357 = vsel %vm2355, %v2356, %v2347
    %v2358 = vsel %vm2351, %v2354, %v2357
    %v2359 = vsel %vm2348, nan, %v2358
    %v2360 = vand.u32 2147483647, %v300
    %vm2361 = vcmp.le.f32.partialorder %v2360, 0.7853982
    %vm2362 = vcmp.lt.s32.totalorder %v300, 0
    %v2363 = vand.u32 %v300, 2139095040
    %v2364 = vshrl.u32 %v2363, 23
    %v2365 = vsub.s32 %v2364, 127
    %v2366 = vand.u32 2147483647, %v300
    %v2367 = vand.u32 %v2366, 8388607
    %v2368 = vor.u32 %v2367, 8388608
    %v2369 = vsub.s32 0, %v2368
    %v2370 = vadd.s32 %v2365, 1
    %vm2371 = vcmp.gt.s32.totalorder %v2370, 0
    %v2372 = vsel %vm2371, %v2370, 0
    %v2373 = vshrl.u32 %v2372, 5
    %v2374 = vand.u32 %v2372, 31
    %v2375 = vsub.s32 32, %v2374
    %v2376 = vshrl.u32 683565275, %v2375
    %v2377 = vshll.u32 683565275, %v2374
    %v2378 = vshrl.u32 2475754826, %v2375
    %v2379 = vor.u32 %v2377, %v2378
    %v2380 = vshll.u32 2475754826, %v2374
    %v2381 = vshrl.u32 2131351028, %v2375
    %v2382 = vor.u32 %v2380, %v2381
    %v2383 = vshll.u32 2131351028, %v2374
    %v2384 = vshrl.u32 2102212464, %v2375
    %v2385 = vor.u32 %v2383, %v2384
    %v2386 = vshll.u32 2102212464, %v2374
    %v2387 = vshrl.u32 920167782, %v2375
    %v2388 = vor.u32 %v2386, %v2387
    %v2389 = vshll.u32 920167782, %v2374
    %v2390 = vshrl.u32 1326507024, %v2375
    %v2391 = vor.u32 %v2389, %v2390
    %vm2392 = vcmp.lt.s32.totalorder %v2373, 1
    %vm2393 = vcmp.lt.s32.totalorder %v2373, 2
    %vm2394 = vcmp.lt.s32.totalorder %v2373, 3
    %vm2395 = vcmp.lt.s32.totalorder %v2373, 4
    %v2396 = vsel %vm2392, %v2376, %v2379
    %v2397 = vsel %vm2395, %v2385, 2102212464
    %v2398 = vsel %vm2394, %v2382, %v2397
    %v2399 = vsel %vm2393, %v2396, %v2398
    %v2400 = vsel %vm2392, %v2379, %v2382
    %v2401 = vsel %vm2395, %v2388, 920167782
    %v2402 = vsel %vm2394, %v2385, %v2401
    %v2403 = vsel %vm2393, %v2400, %v2402
    %v2404 = vsel %vm2392, %v2382, %v2385
    %v2405 = vsel %vm2395, %v2391, 1326507024
    %v2406 = vsel %vm2394, %v2388, %v2405
    %v2407 = vsel %vm2393, %v2404, %v2406
    %v2408 = vshll.u32 %v2368, 8
    %v2409 = vmul.u32.u64.compose %v2408, %v2407
    %v2410 = vextract.low.u32 %v2409
    %v2411 = vextract.high.u32 %v2409
    %v2412 = vmul.u32.u64.compose %v2408, %v2403
    %v2413 = vextract.low.u32 %v2412
    %v2414 = vextract.high.u32 %v2412
    %v2415 = vmul.u32 %v2408, %v2399
    %v2416 = vadd.s32 %v2411, %v2413
    %vm2417 = vc.u32 %v2411, %v2413
    %v2418 = vadd.s32 %v2414, 1
    %v2419 = vsel %vm2417, %v2418, %v2414
    %v2420 = vadd.s32 %v2415, %v2419
    %v2421 = vadd.s32 %v2420, 536870912
    %v2422 = vshrl.u32 %v2421, 30
    %v2423 = vshll.u32 %v2422, 30
    %v2424 = vsub.s32 %v2420, %v2423
    %vm2425 = vcmp.lt.s32.totalorder %v2424, 0
    %v2426 = vsub.s32 0, %v2424
    %v2427 = vsel %vm2425, %v2426, %v2424
    %v2428 = vclz %v2427
    %v2429 = vsub.s32 %v2428, 2
    %vm2430 = vcmp.gt.s32.totalorder 0, %v2429
    %v2431 = vsel %vm2430, 0, %v2429
    %v2432 = vsub.s32 32, %v2431
    %v2433 = vshll.u32 %v2424, %v2431
    %v2434 = vshrl.u32 %v2416, %v2432
    %v2435 = vor.u32 %v2433, %v2434
    %v2436 = vsub.s32 4294967266, %v2431
    %v2437 = vadd.s32 %v2436, 127
    %v2438 = vshll.u32 %v2437, 23
    %v2439 = vor.u32 4788187, %v2438
    %v2440 = vand.u32 2147483647, %v2439
    %v2442 = vcvt.s32.f32 %v2435
    %v2443 = vmul.f32 %v2442, %v2440
    %v2444 = vxor.u32 %v2443, 2147483648
    %v2445 = vsel %vm2362, %v2444, %v2443
    %v2446 = vsub.s32 4, %v2422
    %v2447 = vsel %vm2362, %v2446, %v2422
    %v2448 = vsel %vm2361, %v300, %v2445
    %v2449 = vsel %vm2361, 0, %v2447
    %v2450 = vcosq.f32.pop %v2448
    %v2451 = vsinq.f32.pop %v2448
    %vm2452 = vweird.f32 %v300
    %v2453 = vadd.s32 %v2449, 3
    %v2454 = vand.u32 %v2453, 3
    %vm2455 = vcmp.lt.s32.totalorder %v2454, 2
    %vm2456 = vcmp.eq.s32.totalorder %v2454, 0
    %v2457 = vxor.u32 %v2451, 2147483648
    %v2458 = vsel %vm2456, %v2450, %v2457
    %vm2459 = vcmp.eq.s32.totalorder %v2454, 2
    %v2460 = vxor.u32 %v2450, 2147483648
    %v2461 = vsel %vm2459, %v2460, %v2451
    %v2462 = vsel %vm2455, %v2458, %v2461
    %v2463 = vsel %vm2452, nan, %v2462
    %v2464 = vand.u32 2147483647, %v302
    %vm2465 = vcmp.le.f32.partialorder %v2464, 0.7853982
    %vm2466 = vcmp.lt.s32.totalorder %v302, 0
    %v2467 = vand.u32 %v302, 2139095040
    %v2468 = vshrl.u32 %v2467, 23
    %v2469 = vsub.s32 %v2468, 127
    %v2470 = vand.u32 2147483647, %v302
    %v2471 = vand.u32 %v2470, 8388607
    %v2472 = vor.u32 %v2471, 8388608
    %v2473 = vsub.s32 0, %v2472
    %v2474 = vadd.s32 %v2469, 1
    %vm2475 = vcmp.gt.s32.totalorder %v2474, 0
    %v2476 = vsel %vm2475, %v2474, 0
    %v2477 = vshrl.u32 %v2476, 5
    %v2478 = vand.u32 %v2476, 31
    %v2479 = vsub.s32 32, %v2478
    %v2480 = vshrl.u32 683565275, %v2479
    %v2481 = vshll.u32 683565275, %v2478
    %v2482 = vshrl.u32 2475754826, %v2479
    %v2483 = vor.u32 %v2481, %v2482
    %v2484 = vshll.u32 2475754826, %v2478
    %v2485 = vshrl.u32 2131351028, %v2479
    %v2486 = vor.u32 %v2484, %v2485
    %v2487 = vshll.u32 2131351028, %v2478
    %v2488 = vshrl.u32 2102212464, %v2479
    %v2489 = vor.u32 %v2487, %v2488
    %v2490 = vshll.u32 2102212464, %v2478
    %v2491 = vshrl.u32 920167782, %v2479
    %v2492 = vor.u32 %v2490, %v2491
    %v2493 = vshll.u32 920167782, %v2478
    %v2494 = vshrl.u32 1326507024, %v2479
    %v2495 = vor.u32 %v2493, %v2494
    %vm2496 = vcmp.lt.s32.totalorder %v2477, 1
    %vm2497 = vcmp.lt.s32.totalorder %v2477, 2
    %vm2498 = vcmp.lt.s32.totalorder %v2477, 3
    %vm2499 = vcmp.lt.s32.totalorder %v2477, 4
    %v2500 = vsel %vm2496, %v2480, %v2483
    %v2501 = vsel %vm2499, %v2489, 2102212464
    %v2502 = vsel %vm2498, %v2486, %v2501
    %v2503 = vsel %vm2497, %v2500, %v2502
    %v2504 = vsel %vm2496, %v2483, %v2486
    %v2505 = vsel %vm2499, %v2492, 920167782
    %v2506 = vsel %vm2498, %v2489, %v2505
    %v2507 = vsel %vm2497, %v2504, %v2506
    %v2508 = vsel %vm2496, %v2486, %v2489
    %v2509 = vsel %vm2499, %v2495, 1326507024
    %v2510 = vsel %vm2498, %v2492, %v2509
    %v2511 = vsel %vm2497, %v2508, %v2510
    %v2512 = vshll.u32 %v2472, 8
    %v2513 = vmul.u32.u64.compose %v2512, %v2511
    %v2514 = vextract.low.u32 %v2513
    %v2515 = vextract.high.u32 %v2513
    %v2516 = vmul.u32.u64.compose %v2512, %v2507
    %v2517 = vextract.low.u32 %v2516
    %v2518 = vextract.high.u32 %v2516
    %v2519 = vmul.u32 %v2512, %v2503
    %v2520 = vadd.s32 %v2515, %v2517
    %vm2521 = vc.u32 %v2515, %v2517
    %v2522 = vadd.s32 %v2518, 1
    %v2523 = vsel %vm2521, %v2522, %v2518
    %v2524 = vadd.s32 %v2519, %v2523
    %v2525 = vadd.s32 %v2524, 536870912
    %v2526 = vshrl.u32 %v2525, 30
    %v2527 = vshll.u32 %v2526, 30
    %v2528 = vsub.s32 %v2524, %v2527
    %vm2529 = vcmp.lt.s32.totalorder %v2528, 0
    %v2530 = vsub.s32 0, %v2528
    %v2531 = vsel %vm2529, %v2530, %v2528
    %v2532 = vclz %v2531
    %v2533 = vsub.s32 %v2532, 2
    %vm2534 = vcmp.gt.s32.totalorder 0, %v2533
    %v2535 = vsel %vm2534, 0, %v2533
    %v2536 = vsub.s32 32, %v2535
    %v2537 = vshll.u32 %v2528, %v2535
    %v2538 = vshrl.u32 %v2520, %v2536
    %v2539 = vor.u32 %v2537, %v2538
    %v2540 = vsub.s32 4294967266, %v2535
    %v2541 = vadd.s32 %v2540, 127
    %v2542 = vshll.u32 %v2541, 23
    %v2543 = vor.u32 4788187, %v2542
    %v2544 = vand.u32 2147483647, %v2543
    %v2546 = vcvt.s32.f32 %v2539
    %v2547 = vmul.f32 %v2546, %v2544
    %v2548 = vxor.u32 %v2547, 2147483648
    %v2549 = vsel %vm2466, %v2548, %v2547
    %v2550 = vsub.s32 4, %v2526
    %v2551 = vsel %vm2466, %v2550, %v2526
    %v2552 = vsel %vm2465, %v302, %v2549
    %v2553 = vsel %vm2465, 0, %v2551
    %v2554 = vcosq.f32.pop %v2552
    %v2555 = vsinq.f32.pop %v2552
    %vm2556 = vweird.f32 %v302
    %v2557 = vadd.s32 %v2553, 3
    %v2558 = vand.u32 %v2557, 3
    %vm2559 = vcmp.lt.s32.totalorder %v2558, 2
    %vm2560 = vcmp.eq.s32.totalorder %v2558, 0
    %v2561 = vxor.u32 %v2555, 2147483648
    %v2562 = vsel %vm2560, %v2554, %v2561
    %vm2563 = vcmp.eq.s32.totalorder %v2558, 2
    %v2564 = vxor.u32 %v2554, 2147483648
    %v2565 = vsel %vm2563, %v2564, %v2555
    %v2566 = vsel %vm2559, %v2562, %v2565
    %v2567 = vsel %vm2556, nan, %v2566
    %v2568 = vand.u32 2147483647, %v389
    %vm2569 = vcmp.le.f32.partialorder %v2568, 0.7853982
    %vm2570 = vcmp.lt.s32.totalorder %v389, 0
    %v2571 = vand.u32 %v389, 2139095040
    %v2572 = vshrl.u32 %v2571, 23
    %v2573 = vsub.s32 %v2572, 127
    %v2574 = vand.u32 2147483647, %v389
    %v2575 = vand.u32 %v2574, 8388607
    %v2576 = vor.u32 %v2575, 8388608
    %v2577 = vsub.s32 0, %v2576
    %v2578 = vadd.s32 %v2573, 1
    %vm2579 = vcmp.gt.s32.totalorder %v2578, 0
    %v2580 = vsel %vm2579, %v2578, 0
    %v2581 = vshrl.u32 %v2580, 5
    %v2582 = vand.u32 %v2580, 31
    %v2583 = vsub.s32 32, %v2582
    %v2584 = vshrl.u32 683565275, %v2583
    %v2585 = vshll.u32 683565275, %v2582
    %v2586 = vshrl.u32 2475754826, %v2583
    %v2587 = vor.u32 %v2585, %v2586
    %v2588 = vshll.u32 2475754826, %v2582
    %v2589 = vshrl.u32 2131351028, %v2583
    %v2590 = vor.u32 %v2588, %v2589
    %v2591 = vshll.u32 2131351028, %v2582
    %v2592 = vshrl.u32 2102212464, %v2583
    %v2593 = vor.u32 %v2591, %v2592
    %v2594 = vshll.u32 2102212464, %v2582
    %v2595 = vshrl.u32 920167782, %v2583
    %v2596 = vor.u32 %v2594, %v2595
    %v2597 = vshll.u32 920167782, %v2582
    %v2598 = vshrl.u32 1326507024, %v2583
    %v2599 = vor.u32 %v2597, %v2598
    %vm2600 = vcmp.lt.s32.totalorder %v2581, 1
    %vm2601 = vcmp.lt.s32.totalorder %v2581, 2
    %vm2602 = vcmp.lt.s32.totalorder %v2581, 3
    %vm2603 = vcmp.lt.s32.totalorder %v2581, 4
    %v2604 = vsel %vm2600, %v2584, %v2587
    %v2605 = vsel %vm2603, %v2593, 2102212464
    %v2606 = vsel %vm2602, %v2590, %v2605
    %v2607 = vsel %vm2601, %v2604, %v2606
    %v2608 = vsel %vm2600, %v2587, %v2590
    %v2609 = vsel %vm2603, %v2596, 920167782
    %v2610 = vsel %vm2602, %v2593, %v2609
    %v2611 = vsel %vm2601, %v2608, %v2610
    %v2612 = vsel %vm2600, %v2590, %v2593
    %v2613 = vsel %vm2603, %v2599, 1326507024
    %v2614 = vsel %vm2602, %v2596, %v2613
    %v2615 = vsel %vm2601, %v2612, %v2614
    %v2616 = vshll.u32 %v2576, 8
    %v2617 = vmul.u32.u64.compose %v2616, %v2615
    %v2618 = vextract.low.u32 %v2617
    %v2619 = vextract.high.u32 %v2617
    %v2620 = vmul.u32.u64.compose %v2616, %v2611
    %v2621 = vextract.low.u32 %v2620
    %v2622 = vextract.high.u32 %v2620
    %v2623 = vmul.u32 %v2616, %v2607
    %v2624 = vadd.s32 %v2619, %v2621
    %vm2625 = vc.u32 %v2619, %v2621
    %v2626 = vadd.s32 %v2622, 1
    %v2627 = vsel %vm2625, %v2626, %v2622
    %v2628 = vadd.s32 %v2623, %v2627
    %v2629 = vadd.s32 %v2628, 536870912
    %v2630 = vshrl.u32 %v2629, 30
    %v2631 = vshll.u32 %v2630, 30
    %v2632 = vsub.s32 %v2628, %v2631
    %vm2633 = vcmp.lt.s32.totalorder %v2632, 0
    %v2634 = vsub.s32 0, %v2632
    %v2635 = vsel %vm2633, %v2634, %v2632
    %v2636 = vclz %v2635
    %v2637 = vsub.s32 %v2636, 2
    %vm2638 = vcmp.gt.s32.totalorder 0, %v2637
    %v2639 = vsel %vm2638, 0, %v2637
    %v2640 = vsub.s32 32, %v2639
    %v2641 = vshll.u32 %v2632, %v2639
    %v2642 = vshrl.u32 %v2624, %v2640
    %v2643 = vor.u32 %v2641, %v2642
    %v2644 = vsub.s32 4294967266, %v2639
    %v2645 = vadd.s32 %v2644, 127
    %v2646 = vshll.u32 %v2645, 23
    %v2647 = vor.u32 4788187, %v2646
    %v2648 = vand.u32 2147483647, %v2647
    %v2650 = vcvt.s32.f32 %v2643
    %v2651 = vmul.f32 %v2650, %v2648
    %v2652 = vxor.u32 %v2651, 2147483648
    %v2653 = vsel %vm2570, %v2652, %v2651
    %v2654 = vsub.s32 4, %v2630
    %v2655 = vsel %vm2570, %v2654, %v2630
    %v2656 = vsel %vm2569, %v389, %v2653
    %v2657 = vsel %vm2569, 0, %v2655
    %v2658 = vcosq.f32.pop %v2656
    %v2659 = vsinq.f32.pop %v2656
    %vm2660 = vweird.f32 %v389
    %v2661 = vadd.s32 %v2657, 3
    %v2662 = vand.u32 %v2661, 3
    %vm2663 = vcmp.lt.s32.totalorder %v2662, 2
    %vm2664 = vcmp.eq.s32.totalorder %v2662, 0
    %v2665 = vxor.u32 %v2659, 2147483648
    %v2666 = vsel %vm2664, %v2658, %v2665
    %vm2667 = vcmp.eq.s32.totalorder %v2662, 2
    %v2668 = vxor.u32 %v2658, 2147483648
    %v2669 = vsel %vm2667, %v2668, %v2659
    %v2670 = vsel %vm2663, %v2666, %v2669
    %v2671 = vsel %vm2660, nan, %v2670
    %v2672 = vand.u32 2147483647, %v391
    %vm2673 = vcmp.le.f32.partialorder %v2672, 0.7853982
    %vm2674 = vcmp.lt.s32.totalorder %v391, 0
    %v2675 = vand.u32 %v391, 2139095040
    %v2676 = vshrl.u32 %v2675, 23
    %v2677 = vsub.s32 %v2676, 127
    %v2678 = vand.u32 2147483647, %v391
    %v2679 = vand.u32 %v2678, 8388607
    %v2680 = vor.u32 %v2679, 8388608
    %v2681 = vsub.s32 0, %v2680
    %v2682 = vadd.s32 %v2677, 1
    %vm2683 = vcmp.gt.s32.totalorder %v2682, 0
    %v2684 = vsel %vm2683, %v2682, 0
    %v2685 = vshrl.u32 %v2684, 5
    %v2686 = vand.u32 %v2684, 31
    %v2687 = vsub.s32 32, %v2686
    %v2688 = vshrl.u32 683565275, %v2687
    %v2689 = vshll.u32 683565275, %v2686
    %v2690 = vshrl.u32 2475754826, %v2687
    %v2691 = vor.u32 %v2689, %v2690
    %v2692 = vshll.u32 2475754826, %v2686
    %v2693 = vshrl.u32 2131351028, %v2687
    %v2694 = vor.u32 %v2692, %v2693
    %v2695 = vshll.u32 2131351028, %v2686
    %v2696 = vshrl.u32 2102212464, %v2687
    %v2697 = vor.u32 %v2695, %v2696
    %v2698 = vshll.u32 2102212464, %v2686
    %v2699 = vshrl.u32 920167782, %v2687
    %v2700 = vor.u32 %v2698, %v2699
    %v2701 = vshll.u32 920167782, %v2686
    %v2702 = vshrl.u32 1326507024, %v2687
    %v2703 = vor.u32 %v2701, %v2702
    %vm2704 = vcmp.lt.s32.totalorder %v2685, 1
    %vm2705 = vcmp.lt.s32.totalorder %v2685, 2
    %vm2706 = vcmp.lt.s32.totalorder %v2685, 3
    %vm2707 = vcmp.lt.s32.totalorder %v2685, 4
    %v2708 = vsel %vm2704, %v2688, %v2691
    %v2709 = vsel %vm2707, %v2697, 2102212464
    %v2710 = vsel %vm2706, %v2694, %v2709
    %v2711 = vsel %vm2705, %v2708, %v2710
    %v2712 = vsel %vm2704, %v2691, %v2694
    %v2713 = vsel %vm2707, %v2700, 920167782
    %v2714 = vsel %vm2706, %v2697, %v2713
    %v2715 = vsel %vm2705, %v2712, %v2714
    %v2716 = vsel %vm2704, %v2694, %v2697
    %v2717 = vsel %vm2707, %v2703, 1326507024
    %v2718 = vsel %vm2706, %v2700, %v2717
    %v2719 = vsel %vm2705, %v2716, %v2718
    %v2720 = vshll.u32 %v2680, 8
    %v2721 = vmul.u32.u64.compose %v2720, %v2719
    %v2722 = vextract.low.u32 %v2721
    %v2723 = vextract.high.u32 %v2721
    %v2724 = vmul.u32.u64.compose %v2720, %v2715
    %v2725 = vextract.low.u32 %v2724
    %v2726 = vextract.high.u32 %v2724
    %v2727 = vmul.u32 %v2720, %v2711
    %v2728 = vadd.s32 %v2723, %v2725
    %vm2729 = vc.u32 %v2723, %v2725
    %v2730 = vadd.s32 %v2726, 1
    %v2731 = vsel %vm2729, %v2730, %v2726
    %v2732 = vadd.s32 %v2727, %v2731
    %v2733 = vadd.s32 %v2732, 536870912
    %v2734 = vshrl.u32 %v2733, 30
    %v2735 = vshll.u32 %v2734, 30
    %v2736 = vsub.s32 %v2732, %v2735
    %vm2737 = vcmp.lt.s32.totalorder %v2736, 0
    %v2738 = vsub.s32 0, %v2736
    %v2739 = vsel %vm2737, %v2738, %v2736
    %v2740 = vclz %v2739
    %v2741 = vsub.s32 %v2740, 2
    %vm2742 = vcmp.gt.s32.totalorder 0, %v2741
    %v2743 = vsel %vm2742, 0, %v2741
    %v2744 = vsub.s32 32, %v2743
    %v2745 = vshll.u32 %v2736, %v2743
    %v2746 = vshrl.u32 %v2728, %v2744
    %v2747 = vor.u32 %v2745, %v2746
    %v2748 = vsub.s32 4294967266, %v2743
    %v2749 = vadd.s32 %v2748, 127
    %v2750 = vshll.u32 %v2749, 23
    %v2751 = vor.u32 4788187, %v2750
    %v2752 = vand.u32 2147483647, %v2751
    %v2754 = vcvt.s32.f32 %v2747
    %v2755 = vmul.f32 %v2754, %v2752
    %v2756 = vxor.u32 %v2755, 2147483648
    %v2757 = vsel %vm2674, %v2756, %v2755
    %v2758 = vsub.s32 4, %v2734
    %v2759 = vsel %vm2674, %v2758, %v2734
    %v2760 = vsel %vm2673, %v391, %v2757
    %v2761 = vsel %vm2673, 0, %v2759
    %v2762 = vcosq.f32.pop %v2760
    %v2763 = vsinq.f32.pop %v2760
    %vm2764 = vweird.f32 %v391
    %v2765 = vadd.s32 %v2761, 3
    %v2766 = vand.u32 %v2765, 3
    %vm2767 = vcmp.lt.s32.totalorder %v2766, 2
    %vm2768 = vcmp.eq.s32.totalorder %v2766, 0
    %v2769 = vxor.u32 %v2763, 2147483648
    %v2770 = vsel %vm2768, %v2762, %v2769
    %vm2771 = vcmp.eq.s32.totalorder %v2766, 2
    %v2772 = vxor.u32 %v2762, 2147483648
    %v2773 = vsel %vm2771, %v2772, %v2763
    %v2774 = vsel %vm2767, %v2770, %v2773
    %v2775 = vsel %vm2764, nan, %v2774
    %v2776 = vand.u32 2147483647, %v478
    %vm2777 = vcmp.le.f32.partialorder %v2776, 0.7853982
    %vm2778 = vcmp.lt.s32.totalorder %v478, 0
    %v2779 = vand.u32 %v478, 2139095040
    %v2780 = vshrl.u32 %v2779, 23
    %v2781 = vsub.s32 %v2780, 127
    %v2782 = vand.u32 2147483647, %v478
    %v2783 = vand.u32 %v2782, 8388607
    %v2784 = vor.u32 %v2783, 8388608
    %v2785 = vsub.s32 0, %v2784
    %v2786 = vadd.s32 %v2781, 1
    %vm2787 = vcmp.gt.s32.totalorder %v2786, 0
    %v2788 = vsel %vm2787, %v2786, 0
    %v2789 = vshrl.u32 %v2788, 5
    %v2790 = vand.u32 %v2788, 31
    %v2791 = vsub.s32 32, %v2790
    %v2792 = vshrl.u32 683565275, %v2791
    %v2793 = vshll.u32 683565275, %v2790
    %v2794 = vshrl.u32 2475754826, %v2791
    %v2795 = vor.u32 %v2793, %v2794
    %v2796 = vshll.u32 2475754826, %v2790
    %v2797 = vshrl.u32 2131351028, %v2791
    %v2798 = vor.u32 %v2796, %v2797
    %v2799 = vshll.u32 2131351028, %v2790
    %v2800 = vshrl.u32 2102212464, %v2791
    %v2801 = vor.u32 %v2799, %v2800
    %v2802 = vshll.u32 2102212464, %v2790
    %v2803 = vshrl.u32 920167782, %v2791
    %v2804 = vor.u32 %v2802, %v2803
    %v2805 = vshll.u32 920167782, %v2790
    %v2806 = vshrl.u32 1326507024, %v2791
    %v2807 = vor.u32 %v2805, %v2806
    %vm2808 = vcmp.lt.s32.totalorder %v2789, 1
    %vm2809 = vcmp.lt.s32.totalorder %v2789, 2
    %vm2810 = vcmp.lt.s32.totalorder %v2789, 3
    %vm2811 = vcmp.lt.s32.totalorder %v2789, 4
    %v2812 = vsel %vm2808, %v2792, %v2795
    %v2813 = vsel %vm2811, %v2801, 2102212464
    %v2814 = vsel %vm2810, %v2798, %v2813
    %v2815 = vsel %vm2809, %v2812, %v2814
    %v2816 = vsel %vm2808, %v2795, %v2798
    %v2817 = vsel %vm2811, %v2804, 920167782
    %v2818 = vsel %vm2810, %v2801, %v2817
    %v2819 = vsel %vm2809, %v2816, %v2818
    %v2820 = vsel %vm2808, %v2798, %v2801
    %v2821 = vsel %vm2811, %v2807, 1326507024
    %v2822 = vsel %vm2810, %v2804, %v2821
    %v2823 = vsel %vm2809, %v2820, %v2822
    %v2824 = vshll.u32 %v2784, 8
    %v2825 = vmul.u32.u64.compose %v2824, %v2823
    %v2826 = vextract.low.u32 %v2825
    %v2827 = vextract.high.u32 %v2825
    %v2828 = vmul.u32.u64.compose %v2824, %v2819
    %v2829 = vextract.low.u32 %v2828
    %v2830 = vextract.high.u32 %v2828
    %v2831 = vmul.u32 %v2824, %v2815
    %v2832 = vadd.s32 %v2827, %v2829
    %vm2833 = vc.u32 %v2827, %v2829
    %v2834 = vadd.s32 %v2830, 1
    %v2835 = vsel %vm2833, %v2834, %v2830
    %v2836 = vadd.s32 %v2831, %v2835
    %v2837 = vadd.s32 %v2836, 536870912
    %v2838 = vshrl.u32 %v2837, 30
    %v2839 = vshll.u32 %v2838, 30
    %v2840 = vsub.s32 %v2836, %v2839
    %vm2841 = vcmp.lt.s32.totalorder %v2840, 0
    %v2842 = vsub.s32 0, %v2840
    %v2843 = vsel %vm2841, %v2842, %v2840
    %v2844 = vclz %v2843
    %v2845 = vsub.s32 %v2844, 2
    %vm2846 = vcmp.gt.s32.totalorder 0, %v2845
    %v2847 = vsel %vm2846, 0, %v2845
    %v2848 = vsub.s32 32, %v2847
    %v2849 = vshll.u32 %v2840, %v2847
    %v2850 = vshrl.u32 %v2832, %v2848
    %v2851 = vor.u32 %v2849, %v2850
    %v2852 = vsub.s32 4294967266, %v2847
    %v2853 = vadd.s32 %v2852, 127
    %v2854 = vshll.u32 %v2853, 23
    %v2855 = vor.u32 4788187, %v2854
    %v2856 = vand.u32 2147483647, %v2855
    %v2858 = vcvt.s32.f32 %v2851
    %v2859 = vmul.f32 %v2858, %v2856
    %v2860 = vxor.u32 %v2859, 2147483648
    %v2861 = vsel %vm2778, %v2860, %v2859
    %v2862 = vsub.s32 4, %v2838
    %v2863 = vsel %vm2778, %v2862, %v2838
    %v2864 = vsel %vm2777, %v478, %v2861
    %v2865 = vsel %vm2777, 0, %v2863
    %v2866 = vcosq.f32.pop %v2864
    %v2867 = vsinq.f32.pop %v2864
    %vm2868 = vweird.f32 %v478
    %v2869 = vadd.s32 %v2865, 3
    %v2870 = vand.u32 %v2869, 3
    %vm2871 = vcmp.lt.s32.totalorder %v2870, 2
    %vm2872 = vcmp.eq.s32.totalorder %v2870, 0
    %v2873 = vxor.u32 %v2867, 2147483648
    %v2874 = vsel %vm2872, %v2866, %v2873
    %vm2875 = vcmp.eq.s32.totalorder %v2870, 2
    %v2876 = vxor.u32 %v2866, 2147483648
    %v2877 = vsel %vm2875, %v2876, %v2867
    %v2878 = vsel %vm2871, %v2874, %v2877
    %v2879 = vsel %vm2868, nan, %v2878
    %v2880 = vand.u32 2147483647, %v480
    %vm2881 = vcmp.le.f32.partialorder %v2880, 0.7853982
    %vm2882 = vcmp.lt.s32.totalorder %v480, 0
    %v2883 = vand.u32 %v480, 2139095040
    %v2884 = vshrl.u32 %v2883, 23
    %v2885 = vsub.s32 %v2884, 127
    %v2886 = vand.u32 2147483647, %v480
    %v2887 = vand.u32 %v2886, 8388607
    %v2888 = vor.u32 %v2887, 8388608
    %v2889 = vsub.s32 0, %v2888
    %v2890 = vadd.s32 %v2885, 1
    %vm2891 = vcmp.gt.s32.totalorder %v2890, 0
    %v2892 = vsel %vm2891, %v2890, 0
    %v2893 = vshrl.u32 %v2892, 5
    %v2894 = vand.u32 %v2892, 31
    %v2895 = vsub.s32 32, %v2894
    %v2896 = vshrl.u32 683565275, %v2895
    %v2897 = vshll.u32 683565275, %v2894
    %v2898 = vshrl.u32 2475754826, %v2895
    %v2899 = vor.u32 %v2897, %v2898
    %v2900 = vshll.u32 2475754826, %v2894
    %v2901 = vshrl.u32 2131351028, %v2895
    %v2902 = vor.u32 %v2900, %v2901
    %v2903 = vshll.u32 2131351028, %v2894
    %v2904 = vshrl.u32 2102212464, %v2895
    %v2905 = vor.u32 %v2903, %v2904
    %v2906 = vshll.u32 2102212464, %v2894
    %v2907 = vshrl.u32 920167782, %v2895
    %v2908 = vor.u32 %v2906, %v2907
    %v2909 = vshll.u32 920167782, %v2894
    %v2910 = vshrl.u32 1326507024, %v2895
    %v2911 = vor.u32 %v2909, %v2910
    %vm2912 = vcmp.lt.s32.totalorder %v2893, 1
    %vm2913 = vcmp.lt.s32.totalorder %v2893, 2
    %vm2914 = vcmp.lt.s32.totalorder %v2893, 3
    %vm2915 = vcmp.lt.s32.totalorder %v2893, 4
    %v2916 = vsel %vm2912, %v2896, %v2899
    %v2917 = vsel %vm2915, %v2905, 2102212464
    %v2918 = vsel %vm2914, %v2902, %v2917
    %v2919 = vsel %vm2913, %v2916, %v2918
    %v2920 = vsel %vm2912, %v2899, %v2902
    %v2921 = vsel %vm2915, %v2908, 920167782
    %v2922 = vsel %vm2914, %v2905, %v2921
    %v2923 = vsel %vm2913, %v2920, %v2922
    %v2924 = vsel %vm2912, %v2902, %v2905
    %v2925 = vsel %vm2915, %v2911, 1326507024
    %v2926 = vsel %vm2914, %v2908, %v2925
    %v2927 = vsel %vm2913, %v2924, %v2926
    %v2928 = vshll.u32 %v2888, 8
    %v2929 = vmul.u32.u64.compose %v2928, %v2927
    %v2930 = vextract.low.u32 %v2929
    %v2931 = vextract.high.u32 %v2929
    %v2932 = vmul.u32.u64.compose %v2928, %v2923
    %v2933 = vextract.low.u32 %v2932
    %v2934 = vextract.high.u32 %v2932
    %v2935 = vmul.u32 %v2928, %v2919
    %v2936 = vadd.s32 %v2931, %v2933
    %vm2937 = vc.u32 %v2931, %v2933
    %v2938 = vadd.s32 %v2934, 1
    %v2939 = vsel %vm2937, %v2938, %v2934
    %v2940 = vadd.s32 %v2935, %v2939
    %v2941 = vadd.s32 %v2940, 536870912
    %v2942 = vshrl.u32 %v2941, 30
    %v2943 = vshll.u32 %v2942, 30
    %v2944 = vsub.s32 %v2940, %v2943
    %vm2945 = vcmp.lt.s32.totalorder %v2944, 0
    %v2946 = vsub.s32 0, %v2944
    %v2947 = vsel %vm2945, %v2946, %v2944
    %v2948 = vclz %v2947
    %v2949 = vsub.s32 %v2948, 2
    %vm2950 = vcmp.gt.s32.totalorder 0, %v2949
    %v2951 = vsel %vm2950, 0, %v2949
    %v2952 = vsub.s32 32, %v2951
    %v2953 = vshll.u32 %v2944, %v2951
    %v2954 = vshrl.u32 %v2936, %v2952
    %v2955 = vor.u32 %v2953, %v2954
    %v2956 = vsub.s32 4294967266, %v2951
    %v2957 = vadd.s32 %v2956, 127
    %v2958 = vshll.u32 %v2957, 23
    %v2959 = vor.u32 4788187, %v2958
    %v2960 = vand.u32 2147483647, %v2959
    %v2962 = vcvt.s32.f32 %v2955
    %v2963 = vmul.f32 %v2962, %v2960
    %v2964 = vxor.u32 %v2963, 2147483648
    %v2965 = vsel %vm2882, %v2964, %v2963
    %v2966 = vsub.s32 4, %v2942
    %v2967 = vsel %vm2882, %v2966, %v2942
    %v2968 = vsel %vm2881, %v480, %v2965
    %v2969 = vsel %vm2881, 0, %v2967
    %v2970 = vcosq.f32.pop %v2968
    %v2971 = vsinq.f32.pop %v2968
    %vm2972 = vweird.f32 %v480
    %v2973 = vadd.s32 %v2969, 3
    %v2974 = vand.u32 %v2973, 3
    %vm2975 = vcmp.lt.s32.totalorder %v2974, 2
    %vm2976 = vcmp.eq.s32.totalorder %v2974, 0
    %v2977 = vxor.u32 %v2971, 2147483648
    %v2978 = vsel %vm2976, %v2970, %v2977
    %vm2979 = vcmp.eq.s32.totalorder %v2974, 2
    %v2980 = vxor.u32 %v2970, 2147483648
    %v2981 = vsel %vm2979, %v2980, %v2971
    %v2982 = vsel %vm2975, %v2978, %v2981
    %v2983 = vsel %vm2972, nan, %v2982
    %v2984 = vand.u32 2147483647, %v217
    %vm2985 = vcmp.le.f32.partialorder %v2984, 0.7853982
    %vm2986 = vcmp.lt.s32.totalorder %v217, 0
    %v2987 = vand.u32 %v217, 2139095040
    %v2988 = vshrl.u32 %v2987, 23
    %v2989 = vsub.s32 %v2988, 127
    %v2990 = vand.u32 2147483647, %v217
    %v2991 = vand.u32 %v2990, 8388607
    %v2992 = vor.u32 %v2991, 8388608
    %v2993 = vsub.s32 0, %v2992
    %v2994 = vadd.s32 %v2989, 1
    %vm2995 = vcmp.gt.s32.totalorder %v2994, 0
    %v2996 = vsel %vm2995, %v2994, 0
    %v2997 = vshrl.u32 %v2996, 5
    %v2998 = vand.u32 %v2996, 31
    %v2999 = vsub.s32 32, %v2998
    %v3000 = vshrl.u32 683565275, %v2999
    %v3001 = vshll.u32 683565275, %v2998
    %v3002 = vshrl.u32 2475754826, %v2999
    %v3003 = vor.u32 %v3001, %v3002
    %v3004 = vshll.u32 2475754826, %v2998
    %v3005 = vshrl.u32 2131351028, %v2999
    %v3006 = vor.u32 %v3004, %v3005
    %v3007 = vshll.u32 2131351028, %v2998
    %v3008 = vshrl.u32 2102212464, %v2999
    %v3009 = vor.u32 %v3007, %v3008
    %v3010 = vshll.u32 2102212464, %v2998
    %v3011 = vshrl.u32 920167782, %v2999
    %v3012 = vor.u32 %v3010, %v3011
    %v3013 = vshll.u32 920167782, %v2998
    %v3014 = vshrl.u32 1326507024, %v2999
    %v3015 = vor.u32 %v3013, %v3014
    %vm3016 = vcmp.lt.s32.totalorder %v2997, 1
    %vm3017 = vcmp.lt.s32.totalorder %v2997, 2
    %vm3018 = vcmp.lt.s32.totalorder %v2997, 3
    %vm3019 = vcmp.lt.s32.totalorder %v2997, 4
    %v3020 = vsel %vm3016, %v3000, %v3003
    %v3021 = vsel %vm3019, %v3009, 2102212464
    %v3022 = vsel %vm3018, %v3006, %v3021
    %v3023 = vsel %vm3017, %v3020, %v3022
    %v3024 = vsel %vm3016, %v3003, %v3006
    %v3025 = vsel %vm3019, %v3012, 920167782
    %v3026 = vsel %vm3018, %v3009, %v3025
    %v3027 = vsel %vm3017, %v3024, %v3026
    %v3028 = vsel %vm3016, %v3006, %v3009
    %v3029 = vsel %vm3019, %v3015, 1326507024
    %v3030 = vsel %vm3018, %v3012, %v3029
    %v3031 = vsel %vm3017, %v3028, %v3030
    %v3032 = vshll.u32 %v2992, 8
    %v3033 = vmul.u32.u64.compose %v3032, %v3031
    %v3034 = vextract.low.u32 %v3033
    %v3035 = vextract.high.u32 %v3033
    %v3036 = vmul.u32.u64.compose %v3032, %v3027
    %v3037 = vextract.low.u32 %v3036
    %v3038 = vextract.high.u32 %v3036
    %v3039 = vmul.u32 %v3032, %v3023
    %v3040 = vadd.s32 %v3035, %v3037
    %vm3041 = vc.u32 %v3035, %v3037
    %v3042 = vadd.s32 %v3038, 1
    %v3043 = vsel %vm3041, %v3042, %v3038
    %v3044 = vadd.s32 %v3039, %v3043
    %v3045 = vadd.s32 %v3044, 536870912
    %v3046 = vshrl.u32 %v3045, 30
    %v3047 = vshll.u32 %v3046, 30
    %v3048 = vsub.s32 %v3044, %v3047
    %vm3049 = vcmp.lt.s32.totalorder %v3048, 0
    %v3050 = vsub.s32 0, %v3048
    %v3051 = vsel %vm3049, %v3050, %v3048
    %v3052 = vclz %v3051
    %v3053 = vsub.s32 %v3052, 2
    %vm3054 = vcmp.gt.s32.totalorder 0, %v3053
    %v3055 = vsel %vm3054, 0, %v3053
    %v3056 = vsub.s32 32, %v3055
    %v3057 = vshll.u32 %v3048, %v3055
    %v3058 = vshrl.u32 %v3040, %v3056
    %v3059 = vor.u32 %v3057, %v3058
    %v3060 = vsub.s32 4294967266, %v3055
    %v3061 = vadd.s32 %v3060, 127
    %v3062 = vshll.u32 %v3061, 23
    %v3063 = vor.u32 4788187, %v3062
    %v3064 = vand.u32 2147483647, %v3063
    %v3066 = vcvt.s32.f32 %v3059
    %v3067 = vmul.f32 %v3066, %v3064
    %v3068 = vxor.u32 %v3067, 2147483648
    %v3069 = vsel %vm2986, %v3068, %v3067
    %v3070 = vsub.s32 4, %v3046
    %v3071 = vsel %vm2986, %v3070, %v3046
    %v3072 = vsel %vm2985, %v217, %v3069
    %v3073 = vsel %vm2985, 0, %v3071
    %v3074 = vcosq.f32.pop %v3072
    %v3075 = vsinq.f32.pop %v3072
    %vm3076 = vweird.f32 %v217
    %v3077 = vadd.s32 %v3073, 3
    %v3078 = vand.u32 %v3077, 3
    %vm3079 = vcmp.lt.s32.totalorder %v3078, 2
    %vm3080 = vcmp.eq.s32.totalorder %v3078, 0
    %v3081 = vxor.u32 %v3075, 2147483648
    %v3082 = vsel %vm3080, %v3074, %v3081
    %vm3083 = vcmp.eq.s32.totalorder %v3078, 2
    %v3084 = vxor.u32 %v3074, 2147483648
    %v3085 = vsel %vm3083, %v3084, %v3075
    %v3086 = vsel %vm3079, %v3082, %v3085
    %v3087 = vsel %vm3076, nan, %v3086
    %v3088 = vand.u32 2147483647, %v219
    %vm3089 = vcmp.le.f32.partialorder %v3088, 0.7853982
    %vm3090 = vcmp.lt.s32.totalorder %v219, 0
    %v3091 = vand.u32 %v219, 2139095040
    %v3092 = vshrl.u32 %v3091, 23
    %v3093 = vsub.s32 %v3092, 127
    %v3094 = vand.u32 2147483647, %v219
    %v3095 = vand.u32 %v3094, 8388607
    %v3096 = vor.u32 %v3095, 8388608
    %v3097 = vsub.s32 0, %v3096
    %v3098 = vadd.s32 %v3093, 1
    %vm3099 = vcmp.gt.s32.totalorder %v3098, 0
    %v3100 = vsel %vm3099, %v3098, 0
    %v3101 = vshrl.u32 %v3100, 5
    %v3102 = vand.u32 %v3100, 31
    %v3103 = vsub.s32 32, %v3102
    %v3104 = vshrl.u32 683565275, %v3103
    %v3105 = vshll.u32 683565275, %v3102
    %v3106 = vshrl.u32 2475754826, %v3103
    %v3107 = vor.u32 %v3105, %v3106
    %v3108 = vshll.u32 2475754826, %v3102
    %v3109 = vshrl.u32 2131351028, %v3103
    %v3110 = vor.u32 %v3108, %v3109
    %v3111 = vshll.u32 2131351028, %v3102
    %v3112 = vshrl.u32 2102212464, %v3103
    %v3113 = vor.u32 %v3111, %v3112
    %v3114 = vshll.u32 2102212464, %v3102
    %v3115 = vshrl.u32 920167782, %v3103
    %v3116 = vor.u32 %v3114, %v3115
    %v3117 = vshll.u32 920167782, %v3102
    %v3118 = vshrl.u32 1326507024, %v3103
    %v3119 = vor.u32 %v3117, %v3118
    %vm3120 = vcmp.lt.s32.totalorder %v3101, 1
    %vm3121 = vcmp.lt.s32.totalorder %v3101, 2
    %vm3122 = vcmp.lt.s32.totalorder %v3101, 3
    %vm3123 = vcmp.lt.s32.totalorder %v3101, 4
    %v3124 = vsel %vm3120, %v3104, %v3107
    %v3125 = vsel %vm3123, %v3113, 2102212464
    %v3126 = vsel %vm3122, %v3110, %v3125
    %v3127 = vsel %vm3121, %v3124, %v3126
    %v3128 = vsel %vm3120, %v3107, %v3110
    %v3129 = vsel %vm3123, %v3116, 920167782
    %v3130 = vsel %vm3122, %v3113, %v3129
    %v3131 = vsel %vm3121, %v3128, %v3130
    %v3132 = vsel %vm3120, %v3110, %v3113
    %v3133 = vsel %vm3123, %v3119, 1326507024
    %v3134 = vsel %vm3122, %v3116, %v3133
    %v3135 = vsel %vm3121, %v3132, %v3134
    %v3136 = vshll.u32 %v3096, 8
    %v3137 = vmul.u32.u64.compose %v3136, %v3135
    %v3138 = vextract.low.u32 %v3137
    %v3139 = vextract.high.u32 %v3137
    %v3140 = vmul.u32.u64.compose %v3136, %v3131
    %v3141 = vextract.low.u32 %v3140
    %v3142 = vextract.high.u32 %v3140
    %v3143 = vmul.u32 %v3136, %v3127
    %v3144 = vadd.s32 %v3139, %v3141
    %vm3145 = vc.u32 %v3139, %v3141
    %v3146 = vadd.s32 %v3142, 1
    %v3147 = vsel %vm3145, %v3146, %v3142
    %v3148 = vadd.s32 %v3143, %v3147
    %v3149 = vadd.s32 %v3148, 536870912
    %v3150 = vshrl.u32 %v3149, 30
    %v3151 = vshll.u32 %v3150, 30
    %v3152 = vsub.s32 %v3148, %v3151
    %vm3153 = vcmp.lt.s32.totalorder %v3152, 0
    %v3154 = vsub.s32 0, %v3152
    %v3155 = vsel %vm3153, %v3154, %v3152
    %v3156 = vclz %v3155
    %v3157 = vsub.s32 %v3156, 2
    %vm3158 = vcmp.gt.s32.totalorder 0, %v3157
    %v3159 = vsel %vm3158, 0, %v3157
    %v3160 = vsub.s32 32, %v3159
    %v3161 = vshll.u32 %v3152, %v3159
    %v3162 = vshrl.u32 %v3144, %v3160
    %v3163 = vor.u32 %v3161, %v3162
    %v3164 = vsub.s32 4294967266, %v3159
    %v3165 = vadd.s32 %v3164, 127
    %v3166 = vshll.u32 %v3165, 23
    %v3167 = vor.u32 4788187, %v3166
    %v3168 = vand.u32 2147483647, %v3167
    %v3170 = vcvt.s32.f32 %v3163
    %v3171 = vmul.f32 %v3170, %v3168
    %v3172 = vxor.u32 %v3171, 2147483648
    %v3173 = vsel %vm3090, %v3172, %v3171
    %v3174 = vsub.s32 4, %v3150
    %v3175 = vsel %vm3090, %v3174, %v3150
    %v3176 = vsel %vm3089, %v219, %v3173
    %v3177 = vsel %vm3089, 0, %v3175
    %v3178 = vcosq.f32.pop %v3176
    %v3179 = vsinq.f32.pop %v3176
    %vm3180 = vweird.f32 %v219
    %v3181 = vadd.s32 %v3177, 3
    %v3182 = vand.u32 %v3181, 3
    %vm3183 = vcmp.lt.s32.totalorder %v3182, 2
    %vm3184 = vcmp.eq.s32.totalorder %v3182, 0
    %v3185 = vxor.u32 %v3179, 2147483648
    %v3186 = vsel %vm3184, %v3178, %v3185
    %vm3187 = vcmp.eq.s32.totalorder %v3182, 2
    %v3188 = vxor.u32 %v3178, 2147483648
    %v3189 = vsel %vm3187, %v3188, %v3179
    %v3190 = vsel %vm3183, %v3186, %v3189
    %v3191 = vsel %vm3180, nan, %v3190
    %v3192 = vand.u32 2147483647, %v306
    %vm3193 = vcmp.le.f32.partialorder %v3192, 0.7853982
    %vm3194 = vcmp.lt.s32.totalorder %v306, 0
    %v3195 = vand.u32 %v306, 2139095040
    %v3196 = vshrl.u32 %v3195, 23
    %v3197 = vsub.s32 %v3196, 127
    %v3198 = vand.u32 2147483647, %v306
    %v3199 = vand.u32 %v3198, 8388607
    %v3200 = vor.u32 %v3199, 8388608
    %v3201 = vsub.s32 0, %v3200
    %v3202 = vadd.s32 %v3197, 1
    %vm3203 = vcmp.gt.s32.totalorder %v3202, 0
    %v3204 = vsel %vm3203, %v3202, 0
    %v3205 = vshrl.u32 %v3204, 5
    %v3206 = vand.u32 %v3204, 31
    %v3207 = vsub.s32 32, %v3206
    %v3208 = vshrl.u32 683565275, %v3207
    %v3209 = vshll.u32 683565275, %v3206
    %v3210 = vshrl.u32 2475754826, %v3207
    %v3211 = vor.u32 %v3209, %v3210
    %v3212 = vshll.u32 2475754826, %v3206
    %v3213 = vshrl.u32 2131351028, %v3207
    %v3214 = vor.u32 %v3212, %v3213
    %v3215 = vshll.u32 2131351028, %v3206
    %v3216 = vshrl.u32 2102212464, %v3207
    %v3217 = vor.u32 %v3215, %v3216
    %v3218 = vshll.u32 2102212464, %v3206
    %v3219 = vshrl.u32 920167782, %v3207
    %v3220 = vor.u32 %v3218, %v3219
    %v3221 = vshll.u32 920167782, %v3206
    %v3222 = vshrl.u32 1326507024, %v3207
    %v3223 = vor.u32 %v3221, %v3222
    %vm3224 = vcmp.lt.s32.totalorder %v3205, 1
    %vm3225 = vcmp.lt.s32.totalorder %v3205, 2
    %vm3226 = vcmp.lt.s32.totalorder %v3205, 3
    %vm3227 = vcmp.lt.s32.totalorder %v3205, 4
    %v3228 = vsel %vm3224, %v3208, %v3211
    %v3229 = vsel %vm3227, %v3217, 2102212464
    %v3230 = vsel %vm3226, %v3214, %v3229
    %v3231 = vsel %vm3225, %v3228, %v3230
    %v3232 = vsel %vm3224, %v3211, %v3214
    %v3233 = vsel %vm3227, %v3220, 920167782
    %v3234 = vsel %vm3226, %v3217, %v3233
    %v3235 = vsel %vm3225, %v3232, %v3234
    %v3236 = vsel %vm3224, %v3214, %v3217
    %v3237 = vsel %vm3227, %v3223, 1326507024
    %v3238 = vsel %vm3226, %v3220, %v3237
    %v3239 = vsel %vm3225, %v3236, %v3238
    %v3240 = vshll.u32 %v3200, 8
    %v3241 = vmul.u32.u64.compose %v3240, %v3239
    %v3242 = vextract.low.u32 %v3241
    %v3243 = vextract.high.u32 %v3241
    %v3244 = vmul.u32.u64.compose %v3240, %v3235
    %v3245 = vextract.low.u32 %v3244
    %v3246 = vextract.high.u32 %v3244
    %v3247 = vmul.u32 %v3240, %v3231
    %v3248 = vadd.s32 %v3243, %v3245
    %vm3249 = vc.u32 %v3243, %v3245
    %v3250 = vadd.s32 %v3246, 1
    %v3251 = vsel %vm3249, %v3250, %v3246
    %v3252 = vadd.s32 %v3247, %v3251
    %v3253 = vadd.s32 %v3252, 536870912
    %v3254 = vshrl.u32 %v3253, 30
    %v3255 = vshll.u32 %v3254, 30
    %v3256 = vsub.s32 %v3252, %v3255
    %vm3257 = vcmp.lt.s32.totalorder %v3256, 0
    %v3258 = vsub.s32 0, %v3256
    %v3259 = vsel %vm3257, %v3258, %v3256
    %v3260 = vclz %v3259
    %v3261 = vsub.s32 %v3260, 2
    %vm3262 = vcmp.gt.s32.totalorder 0, %v3261
    %v3263 = vsel %vm3262, 0, %v3261
    %v3264 = vsub.s32 32, %v3263
    %v3265 = vshll.u32 %v3256, %v3263
    %v3266 = vshrl.u32 %v3248, %v3264
    %v3267 = vor.u32 %v3265, %v3266
    %v3268 = vsub.s32 4294967266, %v3263
    %v3269 = vadd.s32 %v3268, 127
    %v3270 = vshll.u32 %v3269, 23
    %v3271 = vor.u32 4788187, %v3270
    %v3272 = vand.u32 2147483647, %v3271
    %v3274 = vcvt.s32.f32 %v3267
    %v3275 = vmul.f32 %v3274, %v3272
    %v3276 = vxor.u32 %v3275, 2147483648
    %v3277 = vsel %vm3194, %v3276, %v3275
    %v3278 = vsub.s32 4, %v3254
    %v3279 = vsel %vm3194, %v3278, %v3254
    %v3280 = vsel %vm3193, %v306, %v3277
    %v3281 = vsel %vm3193, 0, %v3279
    %v3282 = vcosq.f32.pop %v3280
    %v3283 = vsinq.f32.pop %v3280
    %vm3284 = vweird.f32 %v306
    %v3285 = vadd.s32 %v3281, 3
    %v3286 = vand.u32 %v3285, 3
    %vm3287 = vcmp.lt.s32.totalorder %v3286, 2
    %vm3288 = vcmp.eq.s32.totalorder %v3286, 0
    %v3289 = vxor.u32 %v3283, 2147483648
    %v3290 = vsel %vm3288, %v3282, %v3289
    %vm3291 = vcmp.eq.s32.totalorder %v3286, 2
    %v3292 = vxor.u32 %v3282, 2147483648
    %v3293 = vsel %vm3291, %v3292, %v3283
    %v3294 = vsel %vm3287, %v3290, %v3293
    %v3295 = vsel %vm3284, nan, %v3294
    %v3296 = vand.u32 2147483647, %v308
    %vm3297 = vcmp.le.f32.partialorder %v3296, 0.7853982
    %vm3298 = vcmp.lt.s32.totalorder %v308, 0
    %v3299 = vand.u32 %v308, 2139095040
    %v3300 = vshrl.u32 %v3299, 23
    %v3301 = vsub.s32 %v3300, 127
    %v3302 = vand.u32 2147483647, %v308
    %v3303 = vand.u32 %v3302, 8388607
    %v3304 = vor.u32 %v3303, 8388608
    %v3305 = vsub.s32 0, %v3304
    %v3306 = vadd.s32 %v3301, 1
    %vm3307 = vcmp.gt.s32.totalorder %v3306, 0
    %v3308 = vsel %vm3307, %v3306, 0
    %v3309 = vshrl.u32 %v3308, 5
    %v3310 = vand.u32 %v3308, 31
    %v3311 = vsub.s32 32, %v3310
    %v3312 = vshrl.u32 683565275, %v3311
    %v3313 = vshll.u32 683565275, %v3310
    %v3314 = vshrl.u32 2475754826, %v3311
    %v3315 = vor.u32 %v3313, %v3314
    %v3316 = vshll.u32 2475754826, %v3310
    %v3317 = vshrl.u32 2131351028, %v3311
    %v3318 = vor.u32 %v3316, %v3317
    %v3319 = vshll.u32 2131351028, %v3310
    %v3320 = vshrl.u32 2102212464, %v3311
    %v3321 = vor.u32 %v3319, %v3320
    %v3322 = vshll.u32 2102212464, %v3310
    %v3323 = vshrl.u32 920167782, %v3311
    %v3324 = vor.u32 %v3322, %v3323
    %v3325 = vshll.u32 920167782, %v3310
    %v3326 = vshrl.u32 1326507024, %v3311
    %v3327 = vor.u32 %v3325, %v3326
    %vm3328 = vcmp.lt.s32.totalorder %v3309, 1
    %vm3329 = vcmp.lt.s32.totalorder %v3309, 2
    %vm3330 = vcmp.lt.s32.totalorder %v3309, 3
    %vm3331 = vcmp.lt.s32.totalorder %v3309, 4
    %v3332 = vsel %vm3328, %v3312, %v3315
    %v3333 = vsel %vm3331, %v3321, 2102212464
    %v3334 = vsel %vm3330, %v3318, %v3333
    %v3335 = vsel %vm3329, %v3332, %v3334
    %v3336 = vsel %vm3328, %v3315, %v3318
    %v3337 = vsel %vm3331, %v3324, 920167782
    %v3338 = vsel %vm3330, %v3321, %v3337
    %v3339 = vsel %vm3329, %v3336, %v3338
    %v3340 = vsel %vm3328, %v3318, %v3321
    %v3341 = vsel %vm3331, %v3327, 1326507024
    %v3342 = vsel %vm3330, %v3324, %v3341
    %v3343 = vsel %vm3329, %v3340, %v3342
    %v3344 = vshll.u32 %v3304, 8
    %v3345 = vmul.u32.u64.compose %v3344, %v3343
    %v3346 = vextract.low.u32 %v3345
    %v3347 = vextract.high.u32 %v3345
    %v3348 = vmul.u32.u64.compose %v3344, %v3339
    %v3349 = vextract.low.u32 %v3348
    %v3350 = vextract.high.u32 %v3348
    %v3351 = vmul.u32 %v3344, %v3335
    %v3352 = vadd.s32 %v3347, %v3349
    %vm3353 = vc.u32 %v3347, %v3349
    %v3354 = vadd.s32 %v3350, 1
    %v3355 = vsel %vm3353, %v3354, %v3350
    %v3356 = vadd.s32 %v3351, %v3355
    %v3357 = vadd.s32 %v3356, 536870912
    %v3358 = vshrl.u32 %v3357, 30
    %v3359 = vshll.u32 %v3358, 30
    %v3360 = vsub.s32 %v3356, %v3359
    %vm3361 = vcmp.lt.s32.totalorder %v3360, 0
    %v3362 = vsub.s32 0, %v3360
    %v3363 = vsel %vm3361, %v3362, %v3360
    %v3364 = vclz %v3363
    %v3365 = vsub.s32 %v3364, 2
    %vm3366 = vcmp.gt.s32.totalorder 0, %v3365
    %v3367 = vsel %vm3366, 0, %v3365
    %v3368 = vsub.s32 32, %v3367
    %v3369 = vshll.u32 %v3360, %v3367
    %v3370 = vshrl.u32 %v3352, %v3368
    %v3371 = vor.u32 %v3369, %v3370
    %v3372 = vsub.s32 4294967266, %v3367
    %v3373 = vadd.s32 %v3372, 127
    %v3374 = vshll.u32 %v3373, 23
    %v3375 = vor.u32 4788187, %v3374
    %v3376 = vand.u32 2147483647, %v3375
    %v3378 = vcvt.s32.f32 %v3371
    %v3379 = vmul.f32 %v3378, %v3376
    %v3380 = vxor.u32 %v3379, 2147483648
    %v3381 = vsel %vm3298, %v3380, %v3379
    %v3382 = vsub.s32 4, %v3358
    %v3383 = vsel %vm3298, %v3382, %v3358
    %v3384 = vsel %vm3297, %v308, %v3381
    %v3385 = vsel %vm3297, 0, %v3383
    %v3386 = vcosq.f32.pop %v3384
    %v3387 = vsinq.f32.pop %v3384
    %vm3388 = vweird.f32 %v308
    %v3389 = vadd.s32 %v3385, 3
    %v3390 = vand.u32 %v3389, 3
    %vm3391 = vcmp.lt.s32.totalorder %v3390, 2
    %vm3392 = vcmp.eq.s32.totalorder %v3390, 0
    %v3393 = vxor.u32 %v3387, 2147483648
    %v3394 = vsel %vm3392, %v3386, %v3393
    %vm3395 = vcmp.eq.s32.totalorder %v3390, 2
    %v3396 = vxor.u32 %v3386, 2147483648
    %v3397 = vsel %vm3395, %v3396, %v3387
    %v3398 = vsel %vm3391, %v3394, %v3397
    %v3399 = vsel %vm3388, nan, %v3398
    %v3400 = vand.u32 2147483647, %v395
    %vm3401 = vcmp.le.f32.partialorder %v3400, 0.7853982
    %vm3402 = vcmp.lt.s32.totalorder %v395, 0
    %v3403 = vand.u32 %v395, 2139095040
    %v3404 = vshrl.u32 %v3403, 23
    %v3405 = vsub.s32 %v3404, 127
    %v3406 = vand.u32 2147483647, %v395
    %v3407 = vand.u32 %v3406, 8388607
    %v3408 = vor.u32 %v3407, 8388608
    %v3409 = vsub.s32 0, %v3408
    %v3410 = vadd.s32 %v3405, 1
    %vm3411 = vcmp.gt.s32.totalorder %v3410, 0
    %v3412 = vsel %vm3411, %v3410, 0
    %v3413 = vshrl.u32 %v3412, 5
    %v3414 = vand.u32 %v3412, 31
    %v3415 = vsub.s32 32, %v3414
    %v3416 = vshrl.u32 683565275, %v3415
    %v3417 = vshll.u32 683565275, %v3414
    %v3418 = vshrl.u32 2475754826, %v3415
    %v3419 = vor.u32 %v3417, %v3418
    %v3420 = vshll.u32 2475754826, %v3414
    %v3421 = vshrl.u32 2131351028, %v3415
    %v3422 = vor.u32 %v3420, %v3421
    %v3423 = vshll.u32 2131351028, %v3414
    %v3424 = vshrl.u32 2102212464, %v3415
    %v3425 = vor.u32 %v3423, %v3424
    %v3426 = vshll.u32 2102212464, %v3414
    %v3427 = vshrl.u32 920167782, %v3415
    %v3428 = vor.u32 %v3426, %v3427
    %v3429 = vshll.u32 920167782, %v3414
    %v3430 = vshrl.u32 1326507024, %v3415
    %v3431 = vor.u32 %v3429, %v3430
    %vm3432 = vcmp.lt.s32.totalorder %v3413, 1
    %vm3433 = vcmp.lt.s32.totalorder %v3413, 2
    %vm3434 = vcmp.lt.s32.totalorder %v3413, 3
    %vm3435 = vcmp.lt.s32.totalorder %v3413, 4
    %v3436 = vsel %vm3432, %v3416, %v3419
    %v3437 = vsel %vm3435, %v3425, 2102212464
    %v3438 = vsel %vm3434, %v3422, %v3437
    %v3439 = vsel %vm3433, %v3436, %v3438
    %v3440 = vsel %vm3432, %v3419, %v3422
    %v3441 = vsel %vm3435, %v3428, 920167782
    %v3442 = vsel %vm3434, %v3425, %v3441
    %v3443 = vsel %vm3433, %v3440, %v3442
    %v3444 = vsel %vm3432, %v3422, %v3425
    %v3445 = vsel %vm3435, %v3431, 1326507024
    %v3446 = vsel %vm3434, %v3428, %v3445
    %v3447 = vsel %vm3433, %v3444, %v3446
    %v3448 = vshll.u32 %v3408, 8
    %v3449 = vmul.u32.u64.compose %v3448, %v3447
    %v3450 = vextract.low.u32 %v3449
    %v3451 = vextract.high.u32 %v3449
    %v3452 = vmul.u32.u64.compose %v3448, %v3443
    %v3453 = vextract.low.u32 %v3452
    %v3454 = vextract.high.u32 %v3452
    %v3455 = vmul.u32 %v3448, %v3439
    %v3456 = vadd.s32 %v3451, %v3453
    %vm3457 = vc.u32 %v3451, %v3453
    %v3458 = vadd.s32 %v3454, 1
    %v3459 = vsel %vm3457, %v3458, %v3454
    %v3460 = vadd.s32 %v3455, %v3459
    %v3461 = vadd.s32 %v3460, 536870912
    %v3462 = vshrl.u32 %v3461, 30
    %v3463 = vshll.u32 %v3462, 30
    %v3464 = vsub.s32 %v3460, %v3463
    %vm3465 = vcmp.lt.s32.totalorder %v3464, 0
    %v3466 = vsub.s32 0, %v3464
    %v3467 = vsel %vm3465, %v3466, %v3464
    %v3468 = vclz %v3467
    %v3469 = vsub.s32 %v3468, 2
    %vm3470 = vcmp.gt.s32.totalorder 0, %v3469
    %v3471 = vsel %vm3470, 0, %v3469
    %v3472 = vsub.s32 32, %v3471
    %v3473 = vshll.u32 %v3464, %v3471
    %v3474 = vshrl.u32 %v3456, %v3472
    %v3475 = vor.u32 %v3473, %v3474
    %v3476 = vsub.s32 4294967266, %v3471
    %v3477 = vadd.s32 %v3476, 127
    %v3478 = vshll.u32 %v3477, 23
    %v3479 = vor.u32 4788187, %v3478
    %v3480 = vand.u32 2147483647, %v3479
    %v3482 = vcvt.s32.f32 %v3475
    %v3483 = vmul.f32 %v3482, %v3480
    %v3484 = vxor.u32 %v3483, 2147483648
    %v3485 = vsel %vm3402, %v3484, %v3483
    %v3486 = vsub.s32 4, %v3462
    %v3487 = vsel %vm3402, %v3486, %v3462
    %v3488 = vsel %vm3401, %v395, %v3485
    %v3489 = vsel %vm3401, 0, %v3487
    %v3490 = vcosq.f32.pop %v3488
    %v3491 = vsinq.f32.pop %v3488
    %vm3492 = vweird.f32 %v395
    %v3493 = vadd.s32 %v3489, 3
    %v3494 = vand.u32 %v3493, 3
    %vm3495 = vcmp.lt.s32.totalorder %v3494, 2
    %vm3496 = vcmp.eq.s32.totalorder %v3494, 0
    %v3497 = vxor.u32 %v3491, 2147483648
    %v3498 = vsel %vm3496, %v3490, %v3497
    %vm3499 = vcmp.eq.s32.totalorder %v3494, 2
    %v3500 = vxor.u32 %v3490, 2147483648
    %v3501 = vsel %vm3499, %v3500, %v3491
    %v3502 = vsel %vm3495, %v3498, %v3501
    %v3503 = vsel %vm3492, nan, %v3502
    %v3504 = vand.u32 2147483647, %v397
    %vm3505 = vcmp.le.f32.partialorder %v3504, 0.7853982
    %vm3506 = vcmp.lt.s32.totalorder %v397, 0
    %v3507 = vand.u32 %v397, 2139095040
    %v3508 = vshrl.u32 %v3507, 23
    %v3509 = vsub.s32 %v3508, 127
    %v3510 = vand.u32 2147483647, %v397
    %v3511 = vand.u32 %v3510, 8388607
    %v3512 = vor.u32 %v3511, 8388608
    %v3513 = vsub.s32 0, %v3512
    %v3514 = vadd.s32 %v3509, 1
    %vm3515 = vcmp.gt.s32.totalorder %v3514, 0
    %v3516 = vsel %vm3515, %v3514, 0
    %v3517 = vshrl.u32 %v3516, 5
    %v3518 = vand.u32 %v3516, 31
    %v3519 = vsub.s32 32, %v3518
    %v3520 = vshrl.u32 683565275, %v3519
    %v3521 = vshll.u32 683565275, %v3518
    %v3522 = vshrl.u32 2475754826, %v3519
    %v3523 = vor.u32 %v3521, %v3522
    %v3524 = vshll.u32 2475754826, %v3518
    %v3525 = vshrl.u32 2131351028, %v3519
    %v3526 = vor.u32 %v3524, %v3525
    %v3527 = vshll.u32 2131351028, %v3518
    %v3528 = vshrl.u32 2102212464, %v3519
    %v3529 = vor.u32 %v3527, %v3528
    %v3530 = vshll.u32 2102212464, %v3518
    %v3531 = vshrl.u32 920167782, %v3519
    %v3532 = vor.u32 %v3530, %v3531
    %v3533 = vshll.u32 920167782, %v3518
    %v3534 = vshrl.u32 1326507024, %v3519
    %v3535 = vor.u32 %v3533, %v3534
    %vm3536 = vcmp.lt.s32.totalorder %v3517, 1
    %vm3537 = vcmp.lt.s32.totalorder %v3517, 2
    %vm3538 = vcmp.lt.s32.totalorder %v3517, 3
    %vm3539 = vcmp.lt.s32.totalorder %v3517, 4
    %v3540 = vsel %vm3536, %v3520, %v3523
    %v3541 = vsel %vm3539, %v3529, 2102212464
    %v3542 = vsel %vm3538, %v3526, %v3541
    %v3543 = vsel %vm3537, %v3540, %v3542
    %v3544 = vsel %vm3536, %v3523, %v3526
    %v3545 = vsel %vm3539, %v3532, 920167782
    %v3546 = vsel %vm3538, %v3529, %v3545
    %v3547 = vsel %vm3537, %v3544, %v3546
    %v3548 = vsel %vm3536, %v3526, %v3529
    %v3549 = vsel %vm3539, %v3535, 1326507024
    %v3550 = vsel %vm3538, %v3532, %v3549
    %v3551 = vsel %vm3537, %v3548, %v3550
    %v3552 = vshll.u32 %v3512, 8
    %v3553 = vmul.u32.u64.compose %v3552, %v3551
    %v3554 = vextract.low.u32 %v3553
    %v3555 = vextract.high.u32 %v3553
    %v3556 = vmul.u32.u64.compose %v3552, %v3547
    %v3557 = vextract.low.u32 %v3556
    %v3558 = vextract.high.u32 %v3556
    %v3559 = vmul.u32 %v3552, %v3543
    %v3560 = vadd.s32 %v3555, %v3557
    %vm3561 = vc.u32 %v3555, %v3557
    %v3562 = vadd.s32 %v3558, 1
    %v3563 = vsel %vm3561, %v3562, %v3558
    %v3564 = vadd.s32 %v3559, %v3563
    %v3565 = vadd.s32 %v3564, 536870912
    %v3566 = vshrl.u32 %v3565, 30
    %v3567 = vshll.u32 %v3566, 30
    %v3568 = vsub.s32 %v3564, %v3567
    %vm3569 = vcmp.lt.s32.totalorder %v3568, 0
    %v3570 = vsub.s32 0, %v3568
    %v3571 = vsel %vm3569, %v3570, %v3568
    %v3572 = vclz %v3571
    %v3573 = vsub.s32 %v3572, 2
    %vm3574 = vcmp.gt.s32.totalorder 0, %v3573
    %v3575 = vsel %vm3574, 0, %v3573
    %v3576 = vsub.s32 32, %v3575
    %v3577 = vshll.u32 %v3568, %v3575
    %v3578 = vshrl.u32 %v3560, %v3576
    %v3579 = vor.u32 %v3577, %v3578
    %v3580 = vsub.s32 4294967266, %v3575
    %v3581 = vadd.s32 %v3580, 127
    %v3582 = vshll.u32 %v3581, 23
    %v3583 = vor.u32 4788187, %v3582
    %v3584 = vand.u32 2147483647, %v3583
    %v3586 = vcvt.s32.f32 %v3579
    %v3587 = vmul.f32 %v3586, %v3584
    %v3588 = vxor.u32 %v3587, 2147483648
    %v3589 = vsel %vm3506, %v3588, %v3587
    %v3590 = vsub.s32 4, %v3566
    %v3591 = vsel %vm3506, %v3590, %v3566
    %v3592 = vsel %vm3505, %v397, %v3589
    %v3593 = vsel %vm3505, 0, %v3591
    %v3594 = vcosq.f32.pop %v3592
    %v3595 = vsinq.f32.pop %v3592
    %vm3596 = vweird.f32 %v397
    %v3597 = vadd.s32 %v3593, 3
    %v3598 = vand.u32 %v3597, 3
    %vm3599 = vcmp.lt.s32.totalorder %v3598, 2
    %vm3600 = vcmp.eq.s32.totalorder %v3598, 0
    %v3601 = vxor.u32 %v3595, 2147483648
    %v3602 = vsel %vm3600, %v3594, %v3601
    %vm3603 = vcmp.eq.s32.totalorder %v3598, 2
    %v3604 = vxor.u32 %v3594, 2147483648
    %v3605 = vsel %vm3603, %v3604, %v3595
    %v3606 = vsel %vm3599, %v3602, %v3605
    %v3607 = vsel %vm3596, nan, %v3606
    %v3608 = vand.u32 2147483647, %v484
    %vm3609 = vcmp.le.f32.partialorder %v3608, 0.7853982
    %vm3610 = vcmp.lt.s32.totalorder %v484, 0
    %v3611 = vand.u32 %v484, 2139095040
    %v3612 = vshrl.u32 %v3611, 23
    %v3613 = vsub.s32 %v3612, 127
    %v3614 = vand.u32 2147483647, %v484
    %v3615 = vand.u32 %v3614, 8388607
    %v3616 = vor.u32 %v3615, 8388608
    %v3617 = vsub.s32 0, %v3616
    %v3618 = vadd.s32 %v3613, 1
    %vm3619 = vcmp.gt.s32.totalorder %v3618, 0
    %v3620 = vsel %vm3619, %v3618, 0
    %v3621 = vshrl.u32 %v3620, 5
    %v3622 = vand.u32 %v3620, 31
    %v3623 = vsub.s32 32, %v3622
    %v3624 = vshrl.u32 683565275, %v3623
    %v3625 = vshll.u32 683565275, %v3622
    %v3626 = vshrl.u32 2475754826, %v3623
    %v3627 = vor.u32 %v3625, %v3626
    %v3628 = vshll.u32 2475754826, %v3622
    %v3629 = vshrl.u32 2131351028, %v3623
    %v3630 = vor.u32 %v3628, %v3629
    %v3631 = vshll.u32 2131351028, %v3622
    %v3632 = vshrl.u32 2102212464, %v3623
    %v3633 = vor.u32 %v3631, %v3632
    %v3634 = vshll.u32 2102212464, %v3622
    %v3635 = vshrl.u32 920167782, %v3623
    %v3636 = vor.u32 %v3634, %v3635
    %v3637 = vshll.u32 920167782, %v3622
    %v3638 = vshrl.u32 1326507024, %v3623
    %v3639 = vor.u32 %v3637, %v3638
    %vm3640 = vcmp.lt.s32.totalorder %v3621, 1
    %vm3641 = vcmp.lt.s32.totalorder %v3621, 2
    %vm3642 = vcmp.lt.s32.totalorder %v3621, 3
    %vm3643 = vcmp.lt.s32.totalorder %v3621, 4
    %v3644 = vsel %vm3640, %v3624, %v3627
    %v3645 = vsel %vm3643, %v3633, 2102212464
    %v3646 = vsel %vm3642, %v3630, %v3645
    %v3647 = vsel %vm3641, %v3644, %v3646
    %v3648 = vsel %vm3640, %v3627, %v3630
    %v3649 = vsel %vm3643, %v3636, 920167782
    %v3650 = vsel %vm3642, %v3633, %v3649
    %v3651 = vsel %vm3641, %v3648, %v3650
    %v3652 = vsel %vm3640, %v3630, %v3633
    %v3653 = vsel %vm3643, %v3639, 1326507024
    %v3654 = vsel %vm3642, %v3636, %v3653
    %v3655 = vsel %vm3641, %v3652, %v3654
    %v3656 = vshll.u32 %v3616, 8
    %v3657 = vmul.u32.u64.compose %v3656, %v3655
    %v3658 = vextract.low.u32 %v3657
    %v3659 = vextract.high.u32 %v3657
    %v3660 = vmul.u32.u64.compose %v3656, %v3651
    %v3661 = vextract.low.u32 %v3660
    %v3662 = vextract.high.u32 %v3660
    %v3663 = vmul.u32 %v3656, %v3647
    %v3664 = vadd.s32 %v3659, %v3661
    %vm3665 = vc.u32 %v3659, %v3661
    %v3666 = vadd.s32 %v3662, 1
    %v3667 = vsel %vm3665, %v3666, %v3662
    %v3668 = vadd.s32 %v3663, %v3667
    %v3669 = vadd.s32 %v3668, 536870912
    %v3670 = vshrl.u32 %v3669, 30
    %v3671 = vshll.u32 %v3670, 30
    %v3672 = vsub.s32 %v3668, %v3671
    %vm3673 = vcmp.lt.s32.totalorder %v3672, 0
    %v3674 = vsub.s32 0, %v3672
    %v3675 = vsel %vm3673, %v3674, %v3672
    %v3676 = vclz %v3675
    %v3677 = vsub.s32 %v3676, 2
    %vm3678 = vcmp.gt.s32.totalorder 0, %v3677
    %v3679 = vsel %vm3678, 0, %v3677
    %v3680 = vsub.s32 32, %v3679
    %v3681 = vshll.u32 %v3672, %v3679
    %v3682 = vshrl.u32 %v3664, %v3680
    %v3683 = vor.u32 %v3681, %v3682
    %v3684 = vsub.s32 4294967266, %v3679
    %v3685 = vadd.s32 %v3684, 127
    %v3686 = vshll.u32 %v3685, 23
    %v3687 = vor.u32 4788187, %v3686
    %v3688 = vand.u32 2147483647, %v3687
    %v3690 = vcvt.s32.f32 %v3683
    %v3691 = vmul.f32 %v3690, %v3688
    %v3692 = vxor.u32 %v3691, 2147483648
    %v3693 = vsel %vm3610, %v3692, %v3691
    %v3694 = vsub.s32 4, %v3670
    %v3695 = vsel %vm3610, %v3694, %v3670
    %v3696 = vsel %vm3609, %v484, %v3693
    %v3697 = vsel %vm3609, 0, %v3695
    %v3698 = vcosq.f32.pop %v3696
    %v3699 = vsinq.f32.pop %v3696
    %vm3700 = vweird.f32 %v484
    %v3701 = vadd.s32 %v3697, 3
    %v3702 = vand.u32 %v3701, 3
    %vm3703 = vcmp.lt.s32.totalorder %v3702, 2
    %vm3704 = vcmp.eq.s32.totalorder %v3702, 0
    %v3705 = vxor.u32 %v3699, 2147483648
    %v3706 = vsel %vm3704, %v3698, %v3705
    %vm3707 = vcmp.eq.s32.totalorder %v3702, 2
    %v3708 = vxor.u32 %v3698, 2147483648
    %v3709 = vsel %vm3707, %v3708, %v3699
    %v3710 = vsel %vm3703, %v3706, %v3709
    %v3711 = vsel %vm3700, nan, %v3710
    %v3712 = vand.u32 2147483647, %v486
    %vm3713 = vcmp.le.f32.partialorder %v3712, 0.7853982
    %vm3714 = vcmp.lt.s32.totalorder %v486, 0
    %v3715 = vand.u32 %v486, 2139095040
    %v3716 = vshrl.u32 %v3715, 23
    %v3717 = vsub.s32 %v3716, 127
    %v3718 = vand.u32 2147483647, %v486
    %v3719 = vand.u32 %v3718, 8388607
    %v3720 = vor.u32 %v3719, 8388608
    %v3721 = vsub.s32 0, %v3720
    %v3722 = vadd.s32 %v3717, 1
    %vm3723 = vcmp.gt.s32.totalorder %v3722, 0
    %v3724 = vsel %vm3723, %v3722, 0
    %v3725 = vshrl.u32 %v3724, 5
    %v3726 = vand.u32 %v3724, 31
    %v3727 = vsub.s32 32, %v3726
    %v3728 = vshrl.u32 683565275, %v3727
    %v3729 = vshll.u32 683565275, %v3726
    %v3730 = vshrl.u32 2475754826, %v3727
    %v3731 = vor.u32 %v3729, %v3730
    %v3732 = vshll.u32 2475754826, %v3726
    %v3733 = vshrl.u32 2131351028, %v3727
    %v3734 = vor.u32 %v3732, %v3733
    %v3735 = vshll.u32 2131351028, %v3726
    %v3736 = vshrl.u32 2102212464, %v3727
    %v3737 = vor.u32 %v3735, %v3736
    %v3738 = vshll.u32 2102212464, %v3726
    %v3739 = vshrl.u32 920167782, %v3727
    %v3740 = vor.u32 %v3738, %v3739
    %v3741 = vshll.u32 920167782, %v3726
    %v3742 = vshrl.u32 1326507024, %v3727
    %v3743 = vor.u32 %v3741, %v3742
    %vm3744 = vcmp.lt.s32.totalorder %v3725, 1
    %vm3745 = vcmp.lt.s32.totalorder %v3725, 2
    %vm3746 = vcmp.lt.s32.totalorder %v3725, 3
    %vm3747 = vcmp.lt.s32.totalorder %v3725, 4
    %v3748 = vsel %vm3744, %v3728, %v3731
    %v3749 = vsel %vm3747, %v3737, 2102212464
    %v3750 = vsel %vm3746, %v3734, %v3749
    %v3751 = vsel %vm3745, %v3748, %v3750
    %v3752 = vsel %vm3744, %v3731, %v3734
    %v3753 = vsel %vm3747, %v3740, 920167782
    %v3754 = vsel %vm3746, %v3737, %v3753
    %v3755 = vsel %vm3745, %v3752, %v3754
    %v3756 = vsel %vm3744, %v3734, %v3737
    %v3757 = vsel %vm3747, %v3743, 1326507024
    %v3758 = vsel %vm3746, %v3740, %v3757
    %v3759 = vsel %vm3745, %v3756, %v3758
    %v3760 = vshll.u32 %v3720, 8
    %v3761 = vmul.u32.u64.compose %v3760, %v3759
    %v3762 = vextract.low.u32 %v3761
    %v3763 = vextract.high.u32 %v3761
    %v3764 = vmul.u32.u64.compose %v3760, %v3755
    %v3765 = vextract.low.u32 %v3764
    %v3766 = vextract.high.u32 %v3764
    %v3767 = vmul.u32 %v3760, %v3751
    %v3768 = vadd.s32 %v3763, %v3765
    %vm3769 = vc.u32 %v3763, %v3765
    %v3770 = vadd.s32 %v3766, 1
    %v3771 = vsel %vm3769, %v3770, %v3766
    %v3772 = vadd.s32 %v3767, %v3771
    %v3773 = vadd.s32 %v3772, 536870912
    %v3774 = vshrl.u32 %v3773, 30
    %v3775 = vshll.u32 %v3774, 30
    %v3776 = vsub.s32 %v3772, %v3775
    %vm3777 = vcmp.lt.s32.totalorder %v3776, 0
    %v3778 = vsub.s32 0, %v3776
    %v3779 = vsel %vm3777, %v3778, %v3776
    %v3780 = vclz %v3779
    %v3781 = vsub.s32 %v3780, 2
    %vm3782 = vcmp.gt.s32.totalorder 0, %v3781
    %v3783 = vsel %vm3782, 0, %v3781
    %v3784 = vsub.s32 32, %v3783
    %v3785 = vshll.u32 %v3776, %v3783
    %v3786 = vshrl.u32 %v3768, %v3784
    %v3787 = vor.u32 %v3785, %v3786
    %v3788 = vsub.s32 4294967266, %v3783
    %v3789 = vadd.s32 %v3788, 127
    %v3790 = vshll.u32 %v3789, 23
    %v3791 = vor.u32 4788187, %v3790
    %v3792 = vand.u32 2147483647, %v3791
    %v3794 = vcvt.s32.f32 %v3787
    %v3795 = vmul.f32 %v3794, %v3792
    %v3796 = vxor.u32 %v3795, 2147483648
    %v3797 = vsel %vm3714, %v3796, %v3795
    %v3798 = vsub.s32 4, %v3774
    %v3799 = vsel %vm3714, %v3798, %v3774
    %v3800 = vsel %vm3713, %v486, %v3797
    %v3801 = vsel %vm3713, 0, %v3799
    %v3802 = vcosq.f32.pop %v3800
    %v3803 = vsinq.f32.pop %v3800
    %vm3804 = vweird.f32 %v486
    %v3805 = vadd.s32 %v3801, 3
    %v3806 = vand.u32 %v3805, 3
    %vm3807 = vcmp.lt.s32.totalorder %v3806, 2
    %vm3808 = vcmp.eq.s32.totalorder %v3806, 0
    %v3809 = vxor.u32 %v3803, 2147483648
    %v3810 = vsel %vm3808, %v3802, %v3809
    %vm3811 = vcmp.eq.s32.totalorder %v3806, 2
    %v3812 = vxor.u32 %v3802, 2147483648
    %v3813 = vsel %vm3811, %v3812, %v3803
    %v3814 = vsel %vm3807, %v3810, %v3813
    %v3815 = vsel %vm3804, nan, %v3814
    %v3816 = vld [vmem:[%s3] sm:$0xff]
    %v3817 = vld [vmem:[%s3 + $0x8] sm:$0xff]
    %v3818 = vld [vmem:[%s3 + $0x10] sm:$0xff]
    %v3819 = vld [vmem:[%s3 + $0x18] sm:$0xff]
    %v3820 = vld [vmem:[%s4] sm:$0xff]
    %v3821 = vld [vmem:[%s4 + $0x8] sm:$0xff]
    %v3822 = vld [vmem:[%s4 + $0x10] sm:$0xff]
    %v3823 = vld [vmem:[%s4 + $0x18] sm:$0xff]
    %3825 = vset.pattern.permute.xlu0 0
    %3826 = vperm.xlu0 %3825, %v3820
    %v3827 = vpop.permute.xlu0 %3826
    %3830 = vset.pattern.permute.xlu0 0
    %3831 = vperm.xlu0 %3830, %v3821
    %v3832 = vpop.permute.xlu0 %3831
    %3835 = vset.pattern.permute.xlu0 0
    %3836 = vperm.xlu0 %3835, %v3822
    %v3837 = vpop.permute.xlu0 %3836
    %3840 = vset.pattern.permute.xlu0 0
    %3841 = vperm.xlu0 %3840, %v3823
    %v3842 = vpop.permute.xlu0 %3841
    %vm3844 = vcmask 261120
    %v3846 = vsel %vm3844, %v3816, 0
    %v3849 = vsel %vm3844, %v3817, 0
    %v3852 = vsel %vm3844, %v3818, 0
    %v3855 = vsel %vm3844, %v3819, 0
    %3857 = vmatprep.subr.mxu0 0.0
    %3858 = vmatpush1.msra.mxu0 0.0
    %3859 = vmatprep.subr.mxu0 0.0
    %3860 = vmatpush1.msra.mxu0 0.0
    %3861 = vmatprep.subr.mxu0 0.0
    %3862 = vmatpush1.msra.mxu0 0.0
    %3863 = vmatprep.subr.mxu0 0.0
    %3864 = vmatpush1.msra.mxu0 0.0
    %3865 = vmatprep.subr.mxu0 0.0
    %3866 = vmatpush1.msra.mxu0 0.0
    %3867 = vmatprep.subr.mxu0 0.0
    %3868 = vmatpush1.msra.mxu0 0.0
    %3869 = vmatprep.subr.mxu0 0.0
    %3870 = vmatpush1.msra.mxu0 0.0
    %3871 = vmatprep.subr.mxu0 0.0
    %3872 = vmatpush1.msra.mxu0 0.0
    %3873 = vmatprep.subr.mxu0 0.0
    %3874 = vmatpush1.msra.mxu0 0.0
    %3875 = vmatprep.subr.mxu0 0.0
    %3876 = vmatpush1.msra.mxu0 0.0
    %3877 = vmatprep.subr.mxu0 0.0
    %3878 = vmatpush1.msra.mxu0 0.0
    %3879 = vmatprep.subr.mxu0 0.0
    %3880 = vmatpush1.msra.mxu0 0.0
    %3881 = vmatprep.subr.mxu0 %v3191
    %3882 = vmatpush1.msra.mxu0 %v3087
    %3883 = vmatprep.subr.mxu0 %v2359
    %3884 = vmatpush1.msra.mxu0 %v2255
    %3885 = vmatprep.subr.mxu0 %v1527
    %3886 = vmatpush1.msra.mxu0 %v1423
    %3887 = vmatprep.subr.mxu0 %v695
    %3888 = vmatpush1.msra.mxu0 %v591
    %3889 = vmatprep.subr.mxu0 0.0
    %3890 = vmatpush2.msra.mxu0 0.0
    %3891 = vmatprep.subr.mxu0 0.0
    %3892 = vmatpush2.msra.mxu0 0.0
    %3893 = vmatprep.subr.mxu0 0.0
    %3894 = vmatpush2.msra.mxu0 0.0
    %3895 = vmatprep.subr.mxu0 0.0
    %3896 = vmatpush2.msra.mxu0 0.0
    %3897 = vmatprep.subr.mxu0 0.0
    %3898 = vmatpush2.msra.mxu0 0.0
    %3899 = vmatprep.subr.mxu0 0.0
    %3900 = vmatpush2.msra.mxu0 0.0
    %3901 = vmatprep.subr.mxu0 0.0
    %3902 = vmatpush2.msra.mxu0 0.0
    %3903 = vmatprep.subr.mxu0 0.0
    %3904 = vmatpush2.msra.mxu0 0.0
    %3905 = vmatprep.subr.mxu0 0.0
    %3906 = vmatpush2.msra.mxu0 0.0
    %3907 = vmatprep.subr.mxu0 0.0
    %3908 = vmatpush2.msra.mxu0 0.0
    %3909 = vmatprep.subr.mxu0 0.0
    %3910 = vmatpush2.msra.mxu0 0.0
    %3911 = vmatprep.subr.mxu0 0.0
    %3912 = vmatpush2.msra.mxu0 0.0
    %3913 = vmatprep.subr.mxu0 0.0
    %3914 = vmatpush2.msra.mxu0 0.0
    %3915 = vmatprep.subr.mxu0 0.0
    %3916 = vmatpush2.msra.mxu0 0.0
    %3917 = vmatprep.subr.mxu0 0.0
    %3918 = vmatpush2.msra.mxu0 0.0
    %3919 = vmatprep.subr.mxu0 0.0
    %3920 = vmatpush2.msra.mxu0 0.0
    %3921 = vmatprep.mubr.f32.mxu0 0.0
    %3922 = vmatmul.mubr.f32.gmra.mxu0 %v3846
    %v3923 = vpop.f32.mrf.mxu0
    %v3924 = vadd.f32 %v3827, %v3923
    %v3925 = vpop.f32.mrf.mxu0
    %v3926 = vadd.f32 %v3827, %v3925
    %3927 = vmatprep.mubr.f32.mxu0 0.0
    %3928 = vmatmul.mubr.f32.gmra.mxu0 %v3849
    %v3929 = vpop.f32.mrf.mxu0
    %v3930 = vadd.f32 %v3832, %v3929
    %v3931 = vpop.f32.mrf.mxu0
    %v3932 = vadd.f32 %v3832, %v3931
    %3933 = vmatprep.mubr.f32.mxu0 0.0
    %3934 = vmatmul.mubr.f32.gmra.mxu0 %v3852
    %v3935 = vpop.f32.mrf.mxu0
    %v3936 = vadd.f32 %v3837, %v3935
    %v3937 = vpop.f32.mrf.mxu0
    %v3938 = vadd.f32 %v3837, %v3937
    %3939 = vmatprep.mubr.f32.mxu0 0.0
    %3940 = vmatmul.mubr.f32.gmra.mxu0 %v3855
    %v3941 = vpop.f32.mrf.mxu0
    %v3942 = vadd.f32 %v3842, %v3941
    %v3943 = vpop.f32.mrf.mxu0
    %v3944 = vadd.f32 %v3842, %v3943
    %3945 = vdwg.mxu0
    %3946 = vmatprep.subr.mxu0 0.0
    %3947 = vmatpush1.msra.mxu0 0.0
    %3948 = vmatprep.subr.mxu0 0.0
    %3949 = vmatpush1.msra.mxu0 0.0
    %3950 = vmatprep.subr.mxu0 0.0
    %3951 = vmatpush1.msra.mxu0 0.0
    %3952 = vmatprep.subr.mxu0 0.0
    %3953 = vmatpush1.msra.mxu0 0.0
    %3954 = vmatprep.subr.mxu0 0.0
    %3955 = vmatpush1.msra.mxu0 0.0
    %3956 = vmatprep.subr.mxu0 0.0
    %3957 = vmatpush1.msra.mxu0 0.0
    %3958 = vmatprep.subr.mxu0 0.0
    %3959 = vmatpush1.msra.mxu0 0.0
    %3960 = vmatprep.subr.mxu0 0.0
    %3961 = vmatpush1.msra.mxu0 0.0
    %3962 = vmatprep.subr.mxu0 0.0
    %3963 = vmatpush1.msra.mxu0 0.0
    %3964 = vmatprep.subr.mxu0 0.0
    %3965 = vmatpush1.msra.mxu0 0.0
    %3966 = vmatprep.subr.mxu0 0.0
    %3967 = vmatpush1.msra.mxu0 0.0
    %3968 = vmatprep.subr.mxu0 0.0
    %3969 = vmatpush1.msra.mxu0 0.0
    %3970 = vmatprep.subr.mxu0 %v3399
    %3971 = vmatpush1.msra.mxu0 %v3295
    %3972 = vmatprep.subr.mxu0 %v2567
    %3973 = vmatpush1.msra.mxu0 %v2463
    %3974 = vmatprep.subr.mxu0 %v1735
    %3975 = vmatpush1.msra.mxu0 %v1631
    %3976 = vmatprep.subr.mxu0 %v903
    %3977 = vmatpush1.msra.mxu0 %v799
    %3978 = vmatprep.subr.mxu0 0.0
    %3979 = vmatpush2.msra.mxu0 0.0
    %3980 = vmatprep.subr.mxu0 0.0
    %3981 = vmatpush2.msra.mxu0 0.0
    %3982 = vmatprep.subr.mxu0 0.0
    %3983 = vmatpush2.msra.mxu0 0.0
    %3984 = vmatprep.subr.mxu0 0.0
    %3985 = vmatpush2.msra.mxu0 0.0
    %3986 = vmatprep.subr.mxu0 0.0
    %3987 = vmatpush2.msra.mxu0 0.0
    %3988 = vmatprep.subr.mxu0 0.0
    %3989 = vmatpush2.msra.mxu0 0.0
    %3990 = vmatprep.subr.mxu0 0.0
    %3991 = vmatpush2.msra.mxu0 0.0
    %3992 = vmatprep.subr.mxu0 0.0
    %3993 = vmatpush2.msra.mxu0 0.0
    %3994 = vmatprep.subr.mxu0 0.0
    %3995 = vmatpush2.msra.mxu0 0.0
    %3996 = vmatprep.subr.mxu0 0.0
    %3997 = vmatpush2.msra.mxu0 0.0
    %3998 = vmatprep.subr.mxu0 0.0
    %3999 = vmatpush2.msra.mxu0 0.0
    %4000 = vmatprep.subr.mxu0 0.0
    %4001 = vmatpush2.msra.mxu0 0.0
    %4002 = vmatprep.subr.mxu0 0.0
    %4003 = vmatpush2.msra.mxu0 0.0
    %4004 = vmatprep.subr.mxu0 0.0
    %4005 = vmatpush2.msra.mxu0 0.0
    %4006 = vmatprep.subr.mxu0 0.0
    %4007 = vmatpush2.msra.mxu0 0.0
    %4008 = vmatprep.subr.mxu0 0.0
    %4009 = vmatpush2.msra.mxu0 0.0
    %4010 = vmatprep.mubr.f32.mxu0 0.0
    %4011 = vmatmul.mubr.f32.gmra.mxu0 %v3846
    %v4012 = vpop.f32.mrf.mxu0
    %v4013 = vadd.f32 %v3827, %v4012
    %v4014 = vpop.f32.mrf.mxu0
    %v4015 = vadd.f32 %v3827, %v4014
    %4016 = vmatprep.mubr.f32.mxu0 0.0
    %4017 = vmatmul.mubr.f32.gmra.mxu0 %v3849
    %v4018 = vpop.f32.mrf.mxu0
    %v4019 = vadd.f32 %v3832, %v4018
    %v4020 = vpop.f32.mrf.mxu0
    %v4021 = vadd.f32 %v3832, %v4020
    %4022 = vmatprep.mubr.f32.mxu0 0.0
    %4023 = vmatmul.mubr.f32.gmra.mxu0 %v3852
    %v4024 = vpop.f32.mrf.mxu0
    %v4025 = vadd.f32 %v3837, %v4024
    %v4026 = vpop.f32.mrf.mxu0
    %v4027 = vadd.f32 %v3837, %v4026
    %4028 = vmatprep.mubr.f32.mxu0 0.0
    %4029 = vmatmul.mubr.f32.gmra.mxu0 %v3855
    %v4030 = vpop.f32.mrf.mxu0
    %v4031 = vadd.f32 %v3842, %v4030
    %v4032 = vpop.f32.mrf.mxu0
    %v4033 = vadd.f32 %v3842, %v4032
    %4034 = vdwg.mxu0
    %4035 = vmatprep.subr.mxu0 0.0
    %4036 = vmatpush1.msra.mxu0 0.0
    %4037 = vmatprep.subr.mxu0 0.0
    %4038 = vmatpush1.msra.mxu0 0.0
    %4039 = vmatprep.subr.mxu0 0.0
    %4040 = vmatpush1.msra.mxu0 0.0
    %4041 = vmatprep.subr.mxu0 0.0
    %4042 = vmatpush1.msra.mxu0 0.0
    %4043 = vmatprep.subr.mxu0 0.0
    %4044 = vmatpush1.msra.mxu0 0.0
    %4045 = vmatprep.subr.mxu0 0.0
    %4046 = vmatpush1.msra.mxu0 0.0
    %4047 = vmatprep.subr.mxu0 0.0
    %4048 = vmatpush1.msra.mxu0 0.0
    %4049 = vmatprep.subr.mxu0 0.0
    %4050 = vmatpush1.msra.mxu0 0.0
    %4051 = vmatprep.subr.mxu0 0.0
    %4052 = vmatpush1.msra.mxu0 0.0
    %4053 = vmatprep.subr.mxu0 0.0
    %4054 = vmatpush1.msra.mxu0 0.0
    %4055 = vmatprep.subr.mxu0 0.0
    %4056 = vmatpush1.msra.mxu0 0.0
    %4057 = vmatprep.subr.mxu0 0.0
    %4058 = vmatpush1.msra.mxu0 0.0
    %4059 = vmatprep.subr.mxu0 %v3607
    %4060 = vmatpush1.msra.mxu0 %v3503
    %4061 = vmatprep.subr.mxu0 %v2775
    %4062 = vmatpush1.msra.mxu0 %v2671
    %4063 = vmatprep.subr.mxu0 %v1943
    %4064 = vmatpush1.msra.mxu0 %v1839
    %4065 = vmatprep.subr.mxu0 %v1111
    %4066 = vmatpush1.msra.mxu0 %v1007
    %4067 = vmatprep.subr.mxu0 0.0
    %4068 = vmatpush2.msra.mxu0 0.0
    %4069 = vmatprep.subr.mxu0 0.0
    %4070 = vmatpush2.msra.mxu0 0.0
    %4071 = vmatprep.subr.mxu0 0.0
    %4072 = vmatpush2.msra.mxu0 0.0
    %4073 = vmatprep.subr.mxu0 0.0
    %4074 = vmatpush2.msra.mxu0 0.0
    %4075 = vmatprep.subr.mxu0 0.0
    %4076 = vmatpush2.msra.mxu0 0.0
    %4077 = vmatprep.subr.mxu0 0.0
    %4078 = vmatpush2.msra.mxu0 0.0
    %4079 = vmatprep.subr.mxu0 0.0
    %4080 = vmatpush2.msra.mxu0 0.0
    %4081 = vmatprep.subr.mxu0 0.0
    %4082 = vmatpush2.msra.mxu0 0.0
    %4083 = vmatprep.subr.mxu0 0.0
    %4084 = vmatpush2.msra.mxu0 0.0
    %4085 = vmatprep.subr.mxu0 0.0
    %4086 = vmatpush2.msra.mxu0 0.0
    %4087 = vmatprep.subr.mxu0 0.0
    %4088 = vmatpush2.msra.mxu0 0.0
    %4089 = vmatprep.subr.mxu0 0.0
    %4090 = vmatpush2.msra.mxu0 0.0
    %4091 = vmatprep.subr.mxu0 0.0
    %4092 = vmatpush2.msra.mxu0 0.0
    %4093 = vmatprep.subr.mxu0 0.0
    %4094 = vmatpush2.msra.mxu0 0.0
    %4095 = vmatprep.subr.mxu0 0.0
    %4096 = vmatpush2.msra.mxu0 0.0
    %4097 = vmatprep.subr.mxu0 0.0
    %4098 = vmatpush2.msra.mxu0 0.0
    %4099 = vmatprep.mubr.f32.mxu0 0.0
    %4100 = vmatmul.mubr.f32.gmra.mxu0 %v3846
    %v4101 = vpop.f32.mrf.mxu0
    %v4102 = vadd.f32 %v3827, %v4101
    %v4103 = vpop.f32.mrf.mxu0
    %v4104 = vadd.f32 %v3827, %v4103
    %4105 = vmatprep.mubr.f32.mxu0 0.0
    %4106 = vmatmul.mubr.f32.gmra.mxu0 %v3849
    %v4107 = vpop.f32.mrf.mxu0
    %v4108 = vadd.f32 %v3832, %v4107
    %v4109 = vpop.f32.mrf.mxu0
    %v4110 = vadd.f32 %v3832, %v4109
    %4111 = vmatprep.mubr.f32.mxu0 0.0
    %4112 = vmatmul.mubr.f32.gmra.mxu0 %v3852
    %v4113 = vpop.f32.mrf.mxu0
    %v4114 = vadd.f32 %v3837, %v4113
    %v4115 = vpop.f32.mrf.mxu0
    %v4116 = vadd.f32 %v3837, %v4115
    %4117 = vmatprep.mubr.f32.mxu0 0.0
    %4118 = vmatmul.mubr.f32.gmra.mxu0 %v3855
    %v4119 = vpop.f32.mrf.mxu0
    %v4120 = vadd.f32 %v3842, %v4119
    %v4121 = vpop.f32.mrf.mxu0
    %v4122 = vadd.f32 %v3842, %v4121
    %4123 = vdwg.mxu0
    %4124 = vmatprep.subr.mxu0 0.0
    %4125 = vmatpush1.msra.mxu0 0.0
    %4126 = vmatprep.subr.mxu0 0.0
    %4127 = vmatpush1.msra.mxu0 0.0
    %4128 = vmatprep.subr.mxu0 0.0
    %4129 = vmatpush1.msra.mxu0 0.0
    %4130 = vmatprep.subr.mxu0 0.0
    %4131 = vmatpush1.msra.mxu0 0.0
    %4132 = vmatprep.subr.mxu0 0.0
    %4133 = vmatpush1.msra.mxu0 0.0
    %4134 = vmatprep.subr.mxu0 0.0
    %4135 = vmatpush1.msra.mxu0 0.0
    %4136 = vmatprep.subr.mxu0 0.0
    %4137 = vmatpush1.msra.mxu0 0.0
    %4138 = vmatprep.subr.mxu0 0.0
    %4139 = vmatpush1.msra.mxu0 0.0
    %4140 = vmatprep.subr.mxu0 0.0
    %4141 = vmatpush1.msra.mxu0 0.0
    %4142 = vmatprep.subr.mxu0 0.0
    %4143 = vmatpush1.msra.mxu0 0.0
    %4144 = vmatprep.subr.mxu0 0.0
    %4145 = vmatpush1.msra.mxu0 0.0
    %4146 = vmatprep.subr.mxu0 0.0
    %4147 = vmatpush1.msra.mxu0 0.0
    %4148 = vmatprep.subr.mxu0 %v3815
    %4149 = vmatpush1.msra.mxu0 %v3711
    %4150 = vmatprep.subr.mxu0 %v2983
    %4151 = vmatpush1.msra.mxu0 %v2879
    %4152 = vmatprep.subr.mxu0 %v2151
    %4153 = vmatpush1.msra.mxu0 %v2047
    %4154 = vmatprep.subr.mxu0 %v1319
    %4155 = vmatpush1.msra.mxu0 %v1215
    %4156 = vmatprep.subr.mxu0 0.0
    %4157 = vmatpush2.msra.mxu0 0.0
    %4158 = vmatprep.subr.mxu0 0.0
    %4159 = vmatpush2.msra.mxu0 0.0
    %4160 = vmatprep.subr.mxu0 0.0
    %4161 = vmatpush2.msra.mxu0 0.0
    %4162 = vmatprep.subr.mxu0 0.0
    %4163 = vmatpush2.msra.mxu0 0.0
    %4164 = vmatprep.subr.mxu0 0.0
    %4165 = vmatpush2.msra.mxu0 0.0
    %4166 = vmatprep.subr.mxu0 0.0
    %4167 = vmatpush2.msra.mxu0 0.0
    %4168 = vmatprep.subr.mxu0 0.0
    %4169 = vmatpush2.msra.mxu0 0.0
    %4170 = vmatprep.subr.mxu0 0.0
    %4171 = vmatpush2.msra.mxu0 0.0
    %4172 = vmatprep.subr.mxu0 0.0
    %4173 = vmatpush2.msra.mxu0 0.0
    %4174 = vmatprep.subr.mxu0 0.0
    %4175 = vmatpush2.msra.mxu0 0.0
    %4176 = vmatprep.subr.mxu0 0.0
    %4177 = vmatpush2.msra.mxu0 0.0
    %4178 = vmatprep.subr.mxu0 0.0
    %4179 = vmatpush2.msra.mxu0 0.0
    %4180 = vmatprep.subr.mxu0 0.0
    %4181 = vmatpush2.msra.mxu0 0.0
    %4182 = vmatprep.subr.mxu0 0.0
    %4183 = vmatpush2.msra.mxu0 0.0
    %4184 = vmatprep.subr.mxu0 0.0
    %4185 = vmatpush2.msra.mxu0 0.0
    %4186 = vmatprep.subr.mxu0 0.0
    %4187 = vmatpush2.msra.mxu0 0.0
    %4188 = vmatprep.mubr.f32.mxu0 0.0
    %4189 = vmatmul.mubr.f32.gmra.mxu0 %v3846
    %v4190 = vpop.f32.mrf.mxu0
    %v4191 = vadd.f32 %v3827, %v4190
    %v4192 = vpop.f32.mrf.mxu0
    %v4193 = vadd.f32 %v3827, %v4192
    %4194 = vmatprep.mubr.f32.mxu0 0.0
    %4195 = vmatmul.mubr.f32.gmra.mxu0 %v3849
    %v4196 = vpop.f32.mrf.mxu0
    %v4197 = vadd.f32 %v3832, %v4196
    %v4198 = vpop.f32.mrf.mxu0
    %v4199 = vadd.f32 %v3832, %v4198
    %4200 = vmatprep.mubr.f32.mxu0 0.0
    %4201 = vmatmul.mubr.f32.gmra.mxu0 %v3852
    %v4202 = vpop.f32.mrf.mxu0
    %v4203 = vadd.f32 %v3837, %v4202
    %v4204 = vpop.f32.mrf.mxu0
    %v4205 = vadd.f32 %v3837, %v4204
    %4206 = vmatprep.mubr.f32.mxu0 0.0
    %4207 = vmatmul.mubr.f32.gmra.mxu0 %v3855
    %v4208 = vpop.f32.mrf.mxu0
    %v4209 = vadd.f32 %v3842, %v4208
    %v4210 = vpop.f32.mrf.mxu0
    %v4211 = vadd.f32 %v3842, %v4210
    %4212 = vdwg.mxu0
    %v4213 = vsel %vm54, 1, 0
    %v4214 = vsel %vm55, 1, 0
    %v4215 = vsel %vm56, 1, 0
    %v4216 = vsel %vm57, 1, 0
    %v4217 = vsel %vm58, 1, 0
    %v4218 = vsel %vm59, 1, 0
    %v4219 = vsel %vm60, 1, 0
    %v4220 = vsel %vm61, 1, 0
    %vm4221 = vcmp.eq.s32.totalorder %v4213, 1
    %vm4222 = vcmp.eq.s32.totalorder %v4214, 1
    %vm4223 = vcmp.eq.s32.totalorder %v4215, 1
    %vm4224 = vcmp.eq.s32.totalorder %v4216, 1
    %vm4225 = vcmp.eq.s32.totalorder %v4217, 1
    %vm4226 = vcmp.eq.s32.totalorder %v4218, 1
    %vm4227 = vcmp.eq.s32.totalorder %v4219, 1
    %vm4228 = vcmp.eq.s32.totalorder %v4220, 1
    %v4229 = vsel %vm4221, %v3924, 0.0
    %v4230 = vsel %vm4222, %v3926, 0.0
    %v4231 = vsel %vm4223, %v4013, 0.0
    %v4232 = vsel %vm4224, %v4015, 0.0
    %v4233 = vsel %vm4225, %v4102, 0.0
    %v4234 = vsel %vm4226, %v4104, 0.0
    %v4235 = vsel %vm4227, %v4191, 0.0
    %v4236 = vsel %vm4228, %v4193, 0.0
    %v4237 = vsel %vm4221, %v3930, 0.0
    %v4238 = vsel %vm4222, %v3932, 0.0
    %v4239 = vsel %vm4223, %v4019, 0.0
    %v4240 = vsel %vm4224, %v4021, 0.0
    %v4241 = vsel %vm4225, %v4108, 0.0
    %v4242 = vsel %vm4226, %v4110, 0.0
    %v4243 = vsel %vm4227, %v4197, 0.0
    %v4244 = vsel %vm4228, %v4199, 0.0
    %v4245 = vsel %vm4221, %v3936, 0.0
    %v4246 = vsel %vm4222, %v3938, 0.0
    %v4247 = vsel %vm4223, %v4025, 0.0
    %v4248 = vsel %vm4224, %v4027, 0.0
    %v4249 = vsel %vm4225, %v4114, 0.0
    %v4250 = vsel %vm4226, %v4116, 0.0
    %v4251 = vsel %vm4227, %v4203, 0.0
    %v4252 = vsel %vm4228, %v4205, 0.0
    %v4253 = vsel %vm4221, %v3942, 0.0
    %v4254 = vsel %vm4222, %v3944, 0.0
    %v4255 = vsel %vm4223, %v4031, 0.0
    %v4256 = vsel %vm4224, %v4033, 0.0
    %v4257 = vsel %vm4225, %v4120, 0.0
    %v4258 = vsel %vm4226, %v4122, 0.0
    %v4259 = vsel %vm4227, %v4209, 0.0
    %v4260 = vsel %vm4228, %v4211, 0.0
    %v4261 = vadd.f32 %v4229, %v4230
    %v4262 = vadd.f32 %v4261, %v4231
    %v4263 = vadd.f32 %v4262, %v4232
    %v4264 = vadd.f32 %v4263, %v4233
    %v4265 = vadd.f32 %v4264, %v4234
    %v4266 = vadd.f32 %v4265, %v4235
    %v4267 = vadd.f32 %v4266, %v4236
    %4268 = vadd.xlane.f32.xlu0 %v4267
    %v4269 = vpop.xlane.xlu0 %4268
    %v4270 = vadd.f32 %v4237, %v4238
    %v4271 = vadd.f32 %v4270, %v4239
    %v4272 = vadd.f32 %v4271, %v4240
    %v4273 = vadd.f32 %v4272, %v4241
    %v4274 = vadd.f32 %v4273, %v4242
    %v4275 = vadd.f32 %v4274, %v4243
    %v4276 = vadd.f32 %v4275, %v4244
    %4277 = vadd.xlane.f32.xlu0 %v4276
    %v4278 = vpop.xlane.xlu0 %4277
    %v4279 = vadd.f32 %v4245, %v4246
    %v4280 = vadd.f32 %v4279, %v4247
    %v4281 = vadd.f32 %v4280, %v4248
    %v4282 = vadd.f32 %v4281, %v4249
    %v4283 = vadd.f32 %v4282, %v4250
    %v4284 = vadd.f32 %v4283, %v4251
    %v4285 = vadd.f32 %v4284, %v4252
    %4286 = vadd.xlane.f32.xlu0 %v4285
    %v4287 = vpop.xlane.xlu0 %4286
    %v4288 = vadd.f32 %v4253, %v4254
    %v4289 = vadd.f32 %v4288, %v4255
    %v4290 = vadd.f32 %v4289, %v4256
    %v4291 = vadd.f32 %v4290, %v4257
    %v4292 = vadd.f32 %v4291, %v4258
    %v4293 = vadd.f32 %v4292, %v4259
    %v4294 = vadd.f32 %v4293, %v4260
    %4295 = vadd.xlane.f32.xlu0 %v4294
    %v4296 = vpop.xlane.xlu0 %4295
    %v4297 = vmul.f32 %v4269, 0.001
    %v4298 = vmul.f32 %v4278, 0.001
    %v4299 = vmul.f32 %v4287, 0.001
    %v4300 = vmul.f32 %v4296, 0.001
    %v4301 = vmul.f32 %v4229, %v4229
    %v4302 = vmul.f32 %v4230, %v4230
    %v4303 = vmul.f32 %v4231, %v4231
    %v4304 = vmul.f32 %v4232, %v4232
    %v4305 = vmul.f32 %v4233, %v4233
    %v4306 = vmul.f32 %v4234, %v4234
    %v4307 = vmul.f32 %v4235, %v4235
    %v4308 = vmul.f32 %v4236, %v4236
    %v4309 = vmul.f32 %v4237, %v4237
    %v4310 = vmul.f32 %v4238, %v4238
    %v4311 = vmul.f32 %v4239, %v4239
    %v4312 = vmul.f32 %v4240, %v4240
    %v4313 = vmul.f32 %v4241, %v4241
    %v4314 = vmul.f32 %v4242, %v4242
    %v4315 = vmul.f32 %v4243, %v4243
    %v4316 = vmul.f32 %v4244, %v4244
    %v4317 = vmul.f32 %v4245, %v4245
    %v4318 = vmul.f32 %v4246, %v4246
    %v4319 = vmul.f32 %v4247, %v4247
    %v4320 = vmul.f32 %v4248, %v4248
    %v4321 = vmul.f32 %v4249, %v4249
    %v4322 = vmul.f32 %v4250, %v4250
    %v4323 = vmul.f32 %v4251, %v4251
    %v4324 = vmul.f32 %v4252, %v4252
    %v4325 = vmul.f32 %v4253, %v4253
    %v4326 = vmul.f32 %v4254, %v4254
    %v4327 = vmul.f32 %v4255, %v4255
    %v4328 = vmul.f32 %v4256, %v4256
    %v4329 = vmul.f32 %v4257, %v4257
    %v4330 = vmul.f32 %v4258, %v4258
    %v4331 = vmul.f32 %v4259, %v4259
    %v4332 = vmul.f32 %v4260, %v4260
    %v4333 = vadd.f32 %v4301, %v4302
    %v4334 = vadd.f32 %v4333, %v4303
    %v4335 = vadd.f32 %v4334, %v4304
    %v4336 = vadd.f32 %v4335, %v4305
    %v4337 = vadd.f32 %v4336, %v4306
    %v4338 = vadd.f32 %v4337, %v4307
    %v4339 = vadd.f32 %v4338, %v4308
    %4340 = vadd.xlane.f32.xlu0 %v4339
    %v4341 = vpop.xlane.xlu0 %4340
    %v4342 = vadd.f32 %v4309, %v4310
    %v4343 = vadd.f32 %v4342, %v4311
    %v4344 = vadd.f32 %v4343, %v4312
    %v4345 = vadd.f32 %v4344, %v4313
    %v4346 = vadd.f32 %v4345, %v4314
    %v4347 = vadd.f32 %v4346, %v4315
    %v4348 = vadd.f32 %v4347, %v4316
    %4349 = vadd.xlane.f32.xlu0 %v4348
    %v4350 = vpop.xlane.xlu0 %4349
    %v4351 = vadd.f32 %v4317, %v4318
    %v4352 = vadd.f32 %v4351, %v4319
    %v4353 = vadd.f32 %v4352, %v4320
    %v4354 = vadd.f32 %v4353, %v4321
    %v4355 = vadd.f32 %v4354, %v4322
    %v4356 = vadd.f32 %v4355, %v4323
    %v4357 = vadd.f32 %v4356, %v4324
    %4358 = vadd.xlane.f32.xlu0 %v4357
    %v4359 = vpop.xlane.xlu0 %4358
    %v4360 = vadd.f32 %v4325, %v4326
    %v4361 = vadd.f32 %v4360, %v4327
    %v4362 = vadd.f32 %v4361, %v4328
    %v4363 = vadd.f32 %v4362, %v4329
    %v4364 = vadd.f32 %v4363, %v4330
    %v4365 = vadd.f32 %v4364, %v4331
    %v4366 = vadd.f32 %v4365, %v4332
    %4367 = vadd.xlane.f32.xlu0 %v4366
    %v4368 = vpop.xlane.xlu0 %4367
    %v4369 = vmul.f32 %v4341, 0.001
    %v4370 = vmul.f32 %v4350, 0.001
    %v4371 = vmul.f32 %v4359, 0.001
    %v4372 = vmul.f32 %v4368, 0.001
    %v4373 = vmul.f32 %v4297, %v4297
    %v4374 = vmul.f32 %v4298, %v4298
    %v4375 = vmul.f32 %v4299, %v4299
    %v4376 = vmul.f32 %v4300, %v4300
    %v4377 = vsub.f32 %v4369, %v4373
    %v4378 = vsub.f32 %v4370, %v4374
    %v4379 = vsub.f32 %v4371, %v4375
    %v4380 = vsub.f32 %v4372, %v4376
    %v4381 = vadd.f32 %v4377, 1e-05
    %v4382 = vadd.f32 %v4378, 1e-05
    %v4383 = vadd.f32 %v4379, 1e-05
    %v4384 = vadd.f32 %v4380, 1e-05
    %v4385 = vrsqrt.pop %v4381
    %v4386 = vrsqrt.pop %v4382
    %v4387 = vrsqrt.pop %v4383
    %v4388 = vrsqrt.pop %v4384
    %v4389 = vld [vmem:[%s5] sm:$0xff]
    %v4390 = vld [vmem:[%s5 + $0x8] sm:$0xff]
    %v4391 = vld [vmem:[%s5 + $0x10] sm:$0xff]
    %v4392 = vld [vmem:[%s5 + $0x18] sm:$0xff]
    %v4393 = vmul.f32 %v4385, %v4389
    %v4394 = vmul.f32 %v4386, %v4390
    %v4395 = vmul.f32 %v4387, %v4391
    %v4396 = vmul.f32 %v4388, %v4392
    %v4397 = vld [vmem:[%s6] sm:$0xff]
    %v4398 = vld [vmem:[%s6 + $0x8] sm:$0xff]
    %v4399 = vld [vmem:[%s6 + $0x10] sm:$0xff]
    %v4400 = vld [vmem:[%s6 + $0x18] sm:$0xff]
    %v4401 = vmul.f32 %v4297, %v4393
    %v4402 = vmul.f32 %v4298, %v4394
    %v4403 = vmul.f32 %v4299, %v4395
    %v4404 = vmul.f32 %v4300, %v4396
    %v4405 = vsub.f32 %v4397, %v4401
    %v4406 = vsub.f32 %v4398, %v4402
    %v4407 = vsub.f32 %v4399, %v4403
    %v4408 = vsub.f32 %v4400, %v4404
    %4410 = vset.pattern.permute.xlu0 0
    %4411 = vperm.xlu0 %4410, %v4393
    %v4412 = vpop.permute.xlu0 %4411
    %4415 = vset.pattern.permute.xlu0 0
    %4416 = vperm.xlu0 %4415, %v4394
    %v4417 = vpop.permute.xlu0 %4416
    %4420 = vset.pattern.permute.xlu0 0
    %4421 = vperm.xlu0 %4420, %v4395
    %v4422 = vpop.permute.xlu0 %4421
    %4425 = vset.pattern.permute.xlu0 0
    %4426 = vperm.xlu0 %4425, %v4396
    %v4427 = vpop.permute.xlu0 %4426
    %v4429 = vmul.f32 %v3924, %v4412
    %v4430 = vmul.f32 %v3926, %v4412
    %v4431 = vmul.f32 %v4013, %v4412
    %v4432 = vmul.f32 %v4015, %v4412
    %v4433 = vmul.f32 %v4102, %v4412
    %v4434 = vmul.f32 %v4104, %v4412
    %v4435 = vmul.f32 %v4191, %v4412
    %v4436 = vmul.f32 %v4193, %v4412
    %v4437 = vmul.f32 %v3930, %v4417
    %v4438 = vmul.f32 %v3932, %v4417
    %v4439 = vmul.f32 %v4019, %v4417
    %v4440 = vmul.f32 %v4021, %v4417
    %v4441 = vmul.f32 %v4108, %v4417
    %v4442 = vmul.f32 %v4110, %v4417
    %v4443 = vmul.f32 %v4197, %v4417
    %v4444 = vmul.f32 %v4199, %v4417
    %v4445 = vmul.f32 %v3936, %v4422
    %v4446 = vmul.f32 %v3938, %v4422
    %v4447 = vmul.f32 %v4025, %v4422
    %v4448 = vmul.f32 %v4027, %v4422
    %v4449 = vmul.f32 %v4114, %v4422
    %v4450 = vmul.f32 %v4116, %v4422
    %v4451 = vmul.f32 %v4203, %v4422
    %v4452 = vmul.f32 %v4205, %v4422
    %v4453 = vmul.f32 %v3942, %v4427
    %v4454 = vmul.f32 %v3944, %v4427
    %v4455 = vmul.f32 %v4031, %v4427
    %v4456 = vmul.f32 %v4033, %v4427
    %v4457 = vmul.f32 %v4120, %v4427
    %v4458 = vmul.f32 %v4122, %v4427
    %v4459 = vmul.f32 %v4209, %v4427
    %v4460 = vmul.f32 %v4211, %v4427
    %4462 = vset.pattern.permute.xlu0 0
    %4463 = vperm.xlu0 %4462, %v4405
    %v4464 = vpop.permute.xlu0 %4463
    %4467 = vset.pattern.permute.xlu0 0
    %4468 = vperm.xlu0 %4467, %v4406
    %v4469 = vpop.permute.xlu0 %4468
    %4472 = vset.pattern.permute.xlu0 0
    %4473 = vperm.xlu0 %4472, %v4407
    %v4474 = vpop.permute.xlu0 %4473
    %4477 = vset.pattern.permute.xlu0 0
    %4478 = vperm.xlu0 %4477, %v4408
    %v4479 = vpop.permute.xlu0 %4478
    %v4481 = vadd.f32 %v4429, %v4464
    %v4482 = vadd.f32 %v4430, %v4464
    %v4483 = vadd.f32 %v4431, %v4464
    %v4484 = vadd.f32 %v4432, %v4464
    %v4485 = vadd.f32 %v4433, %v4464
    %v4486 = vadd.f32 %v4434, %v4464
    %v4487 = vadd.f32 %v4435, %v4464
    %v4488 = vadd.f32 %v4436, %v4464
    %v4489 = vadd.f32 %v4437, %v4469
    %v4490 = vadd.f32 %v4438, %v4469
    %v4491 = vadd.f32 %v4439, %v4469
    %v4492 = vadd.f32 %v4440, %v4469
    %v4493 = vadd.f32 %v4441, %v4469
    %v4494 = vadd.f32 %v4442, %v4469
    %v4495 = vadd.f32 %v4443, %v4469
    %v4496 = vadd.f32 %v4444, %v4469
    %v4497 = vadd.f32 %v4445, %v4474
    %v4498 = vadd.f32 %v4446, %v4474
    %v4499 = vadd.f32 %v4447, %v4474
    %v4500 = vadd.f32 %v4448, %v4474
    %v4501 = vadd.f32 %v4449, %v4474
    %v4502 = vadd.f32 %v4450, %v4474
    %v4503 = vadd.f32 %v4451, %v4474
    %v4504 = vadd.f32 %v4452, %v4474
    %v4505 = vadd.f32 %v4453, %v4479
    %v4506 = vadd.f32 %v4454, %v4479
    %v4507 = vadd.f32 %v4455, %v4479
    %v4508 = vadd.f32 %v4456, %v4479
    %v4509 = vadd.f32 %v4457, %v4479
    %v4510 = vadd.f32 %v4458, %v4479
    %v4511 = vadd.f32 %v4459, %v4479
    %v4512 = vadd.f32 %v4460, %v4479
    %v4513 = vmax.f32 %v4481, 0.0
    %v4514 = vmax.f32 %v4482, 0.0
    %v4515 = vmax.f32 %v4483, 0.0
    %v4516 = vmax.f32 %v4484, 0.0
    %v4517 = vmax.f32 %v4485, 0.0
    %v4518 = vmax.f32 %v4486, 0.0
    %v4519 = vmax.f32 %v4487, 0.0
    %v4520 = vmax.f32 %v4488, 0.0
    %v4521 = vmax.f32 %v4489, 0.0
    %v4522 = vmax.f32 %v4490, 0.0
    %v4523 = vmax.f32 %v4491, 0.0
    %v4524 = vmax.f32 %v4492, 0.0
    %v4525 = vmax.f32 %v4493, 0.0
    %v4526 = vmax.f32 %v4494, 0.0
    %v4527 = vmax.f32 %v4495, 0.0
    %v4528 = vmax.f32 %v4496, 0.0
    %v4529 = vmax.f32 %v4497, 0.0
    %v4530 = vmax.f32 %v4498, 0.0
    %v4531 = vmax.f32 %v4499, 0.0
    %v4532 = vmax.f32 %v4500, 0.0
    %v4533 = vmax.f32 %v4501, 0.0
    %v4534 = vmax.f32 %v4502, 0.0
    %v4535 = vmax.f32 %v4503, 0.0
    %v4536 = vmax.f32 %v4504, 0.0
    %v4537 = vmax.f32 %v4505, 0.0
    %v4538 = vmax.f32 %v4506, 0.0
    %v4539 = vmax.f32 %v4507, 0.0
    %v4540 = vmax.f32 %v4508, 0.0
    %v4541 = vmax.f32 %v4509, 0.0
    %v4542 = vmax.f32 %v4510, 0.0
    %v4543 = vmax.f32 %v4511, 0.0
    %v4544 = vmax.f32 %v4512, 0.0
    %v4545 = vld [vmem:[%s7] sm:$0xff]
    %v4546 = vld [vmem:[%s7 + $0x8] sm:$0xff]
    %v4547 = vld [vmem:[%s7 + $0x10] sm:$0xff]
    %v4548 = vld [vmem:[%s7 + $0x18] sm:$0xff]
    %v4549 = vld [vmem:[%s8] sm:$0xff]
    %v4550 = vld [vmem:[%s8 + $0x8] sm:$0xff]
    %v4551 = vld [vmem:[%s8 + $0x10] sm:$0xff]
    %v4552 = vld [vmem:[%s8 + $0x18] sm:$0xff]
    %4554 = vset.pattern.permute.xlu0 0
    %4555 = vperm.xlu0 %4554, %v4549
    %v4556 = vpop.permute.xlu0 %4555
    %4559 = vset.pattern.permute.xlu0 0
    %4560 = vperm.xlu0 %4559, %v4550
    %v4561 = vpop.permute.xlu0 %4560
    %4564 = vset.pattern.permute.xlu0 0
    %4565 = vperm.xlu0 %4564, %v4551
    %v4566 = vpop.permute.xlu0 %4565
    %4569 = vset.pattern.permute.xlu0 0
    %4570 = vperm.xlu0 %4569, %v4552
    %v4571 = vpop.permute.xlu0 %4570
    %v4574 = vsel %vm3844, %v4545, 0
    %v4577 = vsel %vm3844, %v4546, 0
    %v4580 = vsel %vm3844, %v4547, 0
    %v4583 = vsel %vm3844, %v4548, 0
    %4585 = vmatprep.subr.mxu0 0.0
    %4586 = vmatpush1.msra.mxu0 0.0
    %4587 = vmatprep.subr.mxu0 0.0
    %4588 = vmatpush1.msra.mxu0 0.0
    %4589 = vmatprep.subr.mxu0 0.0
    %4590 = vmatpush1.msra.mxu0 0.0
    %4591 = vmatprep.subr.mxu0 0.0
    %4592 = vmatpush1.msra.mxu0 0.0
    %4593 = vmatprep.subr.mxu0 0.0
    %4594 = vmatpush1.msra.mxu0 0.0
    %4595 = vmatprep.subr.mxu0 0.0
    %4596 = vmatpush1.msra.mxu0 0.0
    %4597 = vmatprep.subr.mxu0 0.0
    %4598 = vmatpush1.msra.mxu0 0.0
    %4599 = vmatprep.subr.mxu0 0.0
    %4600 = vmatpush1.msra.mxu0 0.0
    %4601 = vmatprep.subr.mxu0 0.0
    %4602 = vmatpush1.msra.mxu0 0.0
    %4603 = vmatprep.subr.mxu0 0.0
    %4604 = vmatpush1.msra.mxu0 0.0
    %4605 = vmatprep.subr.mxu0 0.0
    %4606 = vmatpush1.msra.mxu0 0.0
    %4607 = vmatprep.subr.mxu0 0.0
    %4608 = vmatpush1.msra.mxu0 0.0
    %4609 = vmatprep.subr.mxu0 %v4538
    %4610 = vmatpush1.msra.mxu0 %v4537
    %4611 = vmatprep.subr.mxu0 %v4530
    %4612 = vmatpush1.msra.mxu0 %v4529
    %4613 = vmatprep.subr.mxu0 %v4522
    %4614 = vmatpush1.msra.mxu0 %v4521
    %4615 = vmatprep.subr.mxu0 %v4514
    %4616 = vmatpush1.msra.mxu0 %v4513
    %4617 = vmatprep.subr.mxu0 0.0
    %4618 = vmatpush2.msra.mxu0 0.0
    %4619 = vmatprep.subr.mxu0 0.0
    %4620 = vmatpush2.msra.mxu0 0.0
    %4621 = vmatprep.subr.mxu0 0.0
    %4622 = vmatpush2.msra.mxu0 0.0
    %4623 = vmatprep.subr.mxu0 0.0
    %4624 = vmatpush2.msra.mxu0 0.0
    %4625 = vmatprep.subr.mxu0 0.0
    %4626 = vmatpush2.msra.mxu0 0.0
    %4627 = vmatprep.subr.mxu0 0.0
    %4628 = vmatpush2.msra.mxu0 0.0
    %4629 = vmatprep.subr.mxu0 0.0
    %4630 = vmatpush2.msra.mxu0 0.0
    %4631 = vmatprep.subr.mxu0 0.0
    %4632 = vmatpush2.msra.mxu0 0.0
    %4633 = vmatprep.subr.mxu0 0.0
    %4634 = vmatpush2.msra.mxu0 0.0
    %4635 = vmatprep.subr.mxu0 0.0
    %4636 = vmatpush2.msra.mxu0 0.0
    %4637 = vmatprep.subr.mxu0 0.0
    %4638 = vmatpush2.msra.mxu0 0.0
    %4639 = vmatprep.subr.mxu0 0.0
    %4640 = vmatpush2.msra.mxu0 0.0
    %4641 = vmatprep.subr.mxu0 0.0
    %4642 = vmatpush2.msra.mxu0 0.0
    %4643 = vmatprep.subr.mxu0 0.0
    %4644 = vmatpush2.msra.mxu0 0.0
    %4645 = vmatprep.subr.mxu0 0.0
    %4646 = vmatpush2.msra.mxu0 0.0
    %4647 = vmatprep.subr.mxu0 0.0
    %4648 = vmatpush2.msra.mxu0 0.0
    %4649 = vmatprep.mubr.f32.mxu0 0.0
    %4650 = vmatmul.mubr.f32.gmra.mxu0 %v4574
    %v4651 = vpop.f32.mrf.mxu0
    %v4652 = vadd.f32 %v4556, %v4651
    %v4653 = vpop.f32.mrf.mxu0
    %v4654 = vadd.f32 %v4556, %v4653
    %4655 = vmatprep.mubr.f32.mxu0 0.0
    %4656 = vmatmul.mubr.f32.gmra.mxu0 %v4577
    %v4657 = vpop.f32.mrf.mxu0
    %v4658 = vadd.f32 %v4561, %v4657
    %v4659 = vpop.f32.mrf.mxu0
    %v4660 = vadd.f32 %v4561, %v4659
    %4661 = vmatprep.mubr.f32.mxu0 0.0
    %4662 = vmatmul.mubr.f32.gmra.mxu0 %v4580
    %v4663 = vpop.f32.mrf.mxu0
    %v4664 = vadd.f32 %v4566, %v4663
    %v4665 = vpop.f32.mrf.mxu0
    %v4666 = vadd.f32 %v4566, %v4665
    %4667 = vmatprep.mubr.f32.mxu0 0.0
    %4668 = vmatmul.mubr.f32.gmra.mxu0 %v4583
    %v4669 = vpop.f32.mrf.mxu0
    %v4670 = vadd.f32 %v4571, %v4669
    %v4671 = vpop.f32.mrf.mxu0
    %v4672 = vadd.f32 %v4571, %v4671
    %4673 = vdwg.mxu0
    %4674 = vmatprep.subr.mxu0 0.0
    %4675 = vmatpush1.msra.mxu0 0.0
    %4676 = vmatprep.subr.mxu0 0.0
    %4677 = vmatpush1.msra.mxu0 0.0
    %4678 = vmatprep.subr.mxu0 0.0
    %4679 = vmatpush1.msra.mxu0 0.0
    %4680 = vmatprep.subr.mxu0 0.0
    %4681 = vmatpush1.msra.mxu0 0.0
    %4682 = vmatprep.subr.mxu0 0.0
    %4683 = vmatpush1.msra.mxu0 0.0
    %4684 = vmatprep.subr.mxu0 0.0
    %4685 = vmatpush1.msra.mxu0 0.0
    %4686 = vmatprep.subr.mxu0 0.0
    %4687 = vmatpush1.msra.mxu0 0.0
    %4688 = vmatprep.subr.mxu0 0.0
    %4689 = vmatpush1.msra.mxu0 0.0
    %4690 = vmatprep.subr.mxu0 0.0
    %4691 = vmatpush1.msra.mxu0 0.0
    %4692 = vmatprep.subr.mxu0 0.0
    %4693 = vmatpush1.msra.mxu0 0.0
    %4694 = vmatprep.subr.mxu0 0.0
    %4695 = vmatpush1.msra.mxu0 0.0
    %4696 = vmatprep.subr.mxu0 0.0
    %4697 = vmatpush1.msra.mxu0 0.0
    %4698 = vmatprep.subr.mxu0 %v4540
    %4699 = vmatpush1.msra.mxu0 %v4539
    %4700 = vmatprep.subr.mxu0 %v4532
    %4701 = vmatpush1.msra.mxu0 %v4531
    %4702 = vmatprep.subr.mxu0 %v4524
    %4703 = vmatpush1.msra.mxu0 %v4523
    %4704 = vmatprep.subr.mxu0 %v4516
    %4705 = vmatpush1.msra.mxu0 %v4515
    %4706 = vmatprep.subr.mxu0 0.0
    %4707 = vmatpush2.msra.mxu0 0.0
    %4708 = vmatprep.subr.mxu0 0.0
    %4709 = vmatpush2.msra.mxu0 0.0
    %4710 = vmatprep.subr.mxu0 0.0
    %4711 = vmatpush2.msra.mxu0 0.0
    %4712 = vmatprep.subr.mxu0 0.0
    %4713 = vmatpush2.msra.mxu0 0.0
    %4714 = vmatprep.subr.mxu0 0.0
    %4715 = vmatpush2.msra.mxu0 0.0
    %4716 = vmatprep.subr.mxu0 0.0
    %4717 = vmatpush2.msra.mxu0 0.0
    %4718 = vmatprep.subr.mxu0 0.0
    %4719 = vmatpush2.msra.mxu0 0.0
    %4720 = vmatprep.subr.mxu0 0.0
    %4721 = vmatpush2.msra.mxu0 0.0
    %4722 = vmatprep.subr.mxu0 0.0
    %4723 = vmatpush2.msra.mxu0 0.0
    %4724 = vmatprep.subr.mxu0 0.0
    %4725 = vmatpush2.msra.mxu0 0.0
    %4726 = vmatprep.subr.mxu0 0.0
    %4727 = vmatpush2.msra.mxu0 0.0
    %4728 = vmatprep.subr.mxu0 0.0
    %4729 = vmatpush2.msra.mxu0 0.0
    %4730 = vmatprep.subr.mxu0 0.0
    %4731 = vmatpush2.msra.mxu0 0.0
    %4732 = vmatprep.subr.mxu0 0.0
    %4733 = vmatpush2.msra.mxu0 0.0
    %4734 = vmatprep.subr.mxu0 0.0
    %4735 = vmatpush2.msra.mxu0 0.0
    %4736 = vmatprep.subr.mxu0 0.0
    %4737 = vmatpush2.msra.mxu0 0.0
    %4738 = vmatprep.mubr.f32.mxu0 0.0
    %4739 = vmatmul.mubr.f32.gmra.mxu0 %v4574
    %v4740 = vpop.f32.mrf.mxu0
    %v4741 = vadd.f32 %v4556, %v4740
    %v4742 = vpop.f32.mrf.mxu0
    %v4743 = vadd.f32 %v4556, %v4742
    %4744 = vmatprep.mubr.f32.mxu0 0.0
    %4745 = vmatmul.mubr.f32.gmra.mxu0 %v4577
    %v4746 = vpop.f32.mrf.mxu0
    %v4747 = vadd.f32 %v4561, %v4746
    %v4748 = vpop.f32.mrf.mxu0
    %v4749 = vadd.f32 %v4561, %v4748
    %4750 = vmatprep.mubr.f32.mxu0 0.0
    %4751 = vmatmul.mubr.f32.gmra.mxu0 %v4580
    %v4752 = vpop.f32.mrf.mxu0
    %v4753 = vadd.f32 %v4566, %v4752
    %v4754 = vpop.f32.mrf.mxu0
    %v4755 = vadd.f32 %v4566, %v4754
    %4756 = vmatprep.mubr.f32.mxu0 0.0
    %4757 = vmatmul.mubr.f32.gmra.mxu0 %v4583
    %v4758 = vpop.f32.mrf.mxu0
    %v4759 = vadd.f32 %v4571, %v4758
    %v4760 = vpop.f32.mrf.mxu0
    %v4761 = vadd.f32 %v4571, %v4760
    %4762 = vdwg.mxu0
    %4763 = vmatprep.subr.mxu0 0.0
    %4764 = vmatpush1.msra.mxu0 0.0
    %4765 = vmatprep.subr.mxu0 0.0
    %4766 = vmatpush1.msra.mxu0 0.0
    %4767 = vmatprep.subr.mxu0 0.0
    %4768 = vmatpush1.msra.mxu0 0.0
    %4769 = vmatprep.subr.mxu0 0.0
    %4770 = vmatpush1.msra.mxu0 0.0
    %4771 = vmatprep.subr.mxu0 0.0
    %4772 = vmatpush1.msra.mxu0 0.0
    %4773 = vmatprep.subr.mxu0 0.0
    %4774 = vmatpush1.msra.mxu0 0.0
    %4775 = vmatprep.subr.mxu0 0.0
    %4776 = vmatpush1.msra.mxu0 0.0
    %4777 = vmatprep.subr.mxu0 0.0
    %4778 = vmatpush1.msra.mxu0 0.0
    %4779 = vmatprep.subr.mxu0 0.0
    %4780 = vmatpush1.msra.mxu0 0.0
    %4781 = vmatprep.subr.mxu0 0.0
    %4782 = vmatpush1.msra.mxu0 0.0
    %4783 = vmatprep.subr.mxu0 0.0
    %4784 = vmatpush1.msra.mxu0 0.0
    %4785 = vmatprep.subr.mxu0 0.0
    %4786 = vmatpush1.msra.mxu0 0.0
    %4787 = vmatprep.subr.mxu0 %v4542
    %4788 = vmatpush1.msra.mxu0 %v4541
    %4789 = vmatprep.subr.mxu0 %v4534
    %4790 = vmatpush1.msra.mxu0 %v4533
    %4791 = vmatprep.subr.mxu0 %v4526
    %4792 = vmatpush1.msra.mxu0 %v4525
    %4793 = vmatprep.subr.mxu0 %v4518
    %4794 = vmatpush1.msra.mxu0 %v4517
    %4795 = vmatprep.subr.mxu0 0.0
    %4796 = vmatpush2.msra.mxu0 0.0
    %4797 = vmatprep.subr.mxu0 0.0
    %4798 = vmatpush2.msra.mxu0 0.0
    %4799 = vmatprep.subr.mxu0 0.0
    %4800 = vmatpush2.msra.mxu0 0.0
    %4801 = vmatprep.subr.mxu0 0.0
    %4802 = vmatpush2.msra.mxu0 0.0
    %4803 = vmatprep.subr.mxu0 0.0
    %4804 = vmatpush2.msra.mxu0 0.0
    %4805 = vmatprep.subr.mxu0 0.0
    %4806 = vmatpush2.msra.mxu0 0.0
    %4807 = vmatprep.subr.mxu0 0.0
    %4808 = vmatpush2.msra.mxu0 0.0
    %4809 = vmatprep.subr.mxu0 0.0
    %4810 = vmatpush2.msra.mxu0 0.0
    %4811 = vmatprep.subr.mxu0 0.0
    %4812 = vmatpush2.msra.mxu0 0.0
    %4813 = vmatprep.subr.mxu0 0.0
    %4814 = vmatpush2.msra.mxu0 0.0
    %4815 = vmatprep.subr.mxu0 0.0
    %4816 = vmatpush2.msra.mxu0 0.0
    %4817 = vmatprep.subr.mxu0 0.0
    %4818 = vmatpush2.msra.mxu0 0.0
    %4819 = vmatprep.subr.mxu0 0.0
    %4820 = vmatpush2.msra.mxu0 0.0
    %4821 = vmatprep.subr.mxu0 0.0
    %4822 = vmatpush2.msra.mxu0 0.0
    %4823 = vmatprep.subr.mxu0 0.0
    %4824 = vmatpush2.msra.mxu0 0.0
    %4825 = vmatprep.subr.mxu0 0.0
    %4826 = vmatpush2.msra.mxu0 0.0
    %4827 = vmatprep.mubr.f32.mxu0 0.0
    %4828 = vmatmul.mubr.f32.gmra.mxu0 %v4574
    %v4829 = vpop.f32.mrf.mxu0
    %v4830 = vadd.f32 %v4556, %v4829
    %v4831 = vpop.f32.mrf.mxu0
    %v4832 = vadd.f32 %v4556, %v4831
    %4833 = vmatprep.mubr.f32.mxu0 0.0
    %4834 = vmatmul.mubr.f32.gmra.mxu0 %v4577
    %v4835 = vpop.f32.mrf.mxu0
    %v4836 = vadd.f32 %v4561, %v4835
    %v4837 = vpop.f32.mrf.mxu0
    %v4838 = vadd.f32 %v4561, %v4837
    %4839 = vmatprep.mubr.f32.mxu0 0.0
    %4840 = vmatmul.mubr.f32.gmra.mxu0 %v4580
    %v4841 = vpop.f32.mrf.mxu0
    %v4842 = vadd.f32 %v4566, %v4841
    %v4843 = vpop.f32.mrf.mxu0
    %v4844 = vadd.f32 %v4566, %v4843
    %4845 = vmatprep.mubr.f32.mxu0 0.0
    %4846 = vmatmul.mubr.f32.gmra.mxu0 %v4583
    %v4847 = vpop.f32.mrf.mxu0
    %v4848 = vadd.f32 %v4571, %v4847
    %v4849 = vpop.f32.mrf.mxu0
    %v4850 = vadd.f32 %v4571, %v4849
    %4851 = vdwg.mxu0
    %4852 = vmatprep.subr.mxu0 0.0
    %4853 = vmatpush1.msra.mxu0 0.0
    %4854 = vmatprep.subr.mxu0 0.0
    %4855 = vmatpush1.msra.mxu0 0.0
    %4856 = vmatprep.subr.mxu0 0.0
    %4857 = vmatpush1.msra.mxu0 0.0
    %4858 = vmatprep.subr.mxu0 0.0
    %4859 = vmatpush1.msra.mxu0 0.0
    %4860 = vmatprep.subr.mxu0 0.0
    %4861 = vmatpush1.msra.mxu0 0.0
    %4862 = vmatprep.subr.mxu0 0.0
    %4863 = vmatpush1.msra.mxu0 0.0
    %4864 = vmatprep.subr.mxu0 0.0
    %4865 = vmatpush1.msra.mxu0 0.0
    %4866 = vmatprep.subr.mxu0 0.0
    %4867 = vmatpush1.msra.mxu0 0.0
    %4868 = vmatprep.subr.mxu0 0.0
    %4869 = vmatpush1.msra.mxu0 0.0
    %4870 = vmatprep.subr.mxu0 0.0
    %4871 = vmatpush1.msra.mxu0 0.0
    %4872 = vmatprep.subr.mxu0 0.0
    %4873 = vmatpush1.msra.mxu0 0.0
    %4874 = vmatprep.subr.mxu0 0.0
    %4875 = vmatpush1.msra.mxu0 0.0
    %4876 = vmatprep.subr.mxu0 %v4544
    %4877 = vmatpush1.msra.mxu0 %v4543
    %4878 = vmatprep.subr.mxu0 %v4536
    %4879 = vmatpush1.msra.mxu0 %v4535
    %4880 = vmatprep.subr.mxu0 %v4528
    %4881 = vmatpush1.msra.mxu0 %v4527
    %4882 = vmatprep.subr.mxu0 %v4520
    %4883 = vmatpush1.msra.mxu0 %v4519
    %4884 = vmatprep.subr.mxu0 0.0
    %4885 = vmatpush2.msra.mxu0 0.0
    %4886 = vmatprep.subr.mxu0 0.0
    %4887 = vmatpush2.msra.mxu0 0.0
    %4888 = vmatprep.subr.mxu0 0.0
    %4889 = vmatpush2.msra.mxu0 0.0
    %4890 = vmatprep.subr.mxu0 0.0
    %4891 = vmatpush2.msra.mxu0 0.0
    %4892 = vmatprep.subr.mxu0 0.0
    %4893 = vmatpush2.msra.mxu0 0.0
    %4894 = vmatprep.subr.mxu0 0.0
    %4895 = vmatpush2.msra.mxu0 0.0
    %4896 = vmatprep.subr.mxu0 0.0
    %4897 = vmatpush2.msra.mxu0 0.0
    %4898 = vmatprep.subr.mxu0 0.0
    %4899 = vmatpush2.msra.mxu0 0.0
    %4900 = vmatprep.subr.mxu0 0.0
    %4901 = vmatpush2.msra.mxu0 0.0
    %4902 = vmatprep.subr.mxu0 0.0
    %4903 = vmatpush2.msra.mxu0 0.0
    %4904 = vmatprep.subr.mxu0 0.0
    %4905 = vmatpush2.msra.mxu0 0.0
    %4906 = vmatprep.subr.mxu0 0.0
    %4907 = vmatpush2.msra.mxu0 0.0
    %4908 = vmatprep.subr.mxu0 0.0
    %4909 = vmatpush2.msra.mxu0 0.0
    %4910 = vmatprep.subr.mxu0 0.0
    %4911 = vmatpush2.msra.mxu0 0.0
    %4912 = vmatprep.subr.mxu0 0.0
    %4913 = vmatpush2.msra.mxu0 0.0
    %4914 = vmatprep.subr.mxu0 0.0
    %4915 = vmatpush2.msra.mxu0 0.0
    %4916 = vmatprep.mubr.f32.mxu0 0.0
    %4917 = vmatmul.mubr.f32.gmra.mxu0 %v4574
    %v4918 = vpop.f32.mrf.mxu0
    %v4919 = vadd.f32 %v4556, %v4918
    %v4920 = vpop.f32.mrf.mxu0
    %v4921 = vadd.f32 %v4556, %v4920
    %4922 = vmatprep.mubr.f32.mxu0 0.0
    %4923 = vmatmul.mubr.f32.gmra.mxu0 %v4577
    %v4924 = vpop.f32.mrf.mxu0
    %v4925 = vadd.f32 %v4561, %v4924
    %v4926 = vpop.f32.mrf.mxu0
    %v4927 = vadd.f32 %v4561, %v4926
    %4928 = vmatprep.mubr.f32.mxu0 0.0
    %4929 = vmatmul.mubr.f32.gmra.mxu0 %v4580
    %v4930 = vpop.f32.mrf.mxu0
    %v4931 = vadd.f32 %v4566, %v4930
    %v4932 = vpop.f32.mrf.mxu0
    %v4933 = vadd.f32 %v4566, %v4932
    %4934 = vmatprep.mubr.f32.mxu0 0.0
    %4935 = vmatmul.mubr.f32.gmra.mxu0 %v4583
    %v4936 = vpop.f32.mrf.mxu0
    %v4937 = vadd.f32 %v4571, %v4936
    %v4938 = vpop.f32.mrf.mxu0
    %v4939 = vadd.f32 %v4571, %v4938
    %4940 = vdwg.mxu0
    %v4941 = vsel %vm4221, %v4652, 0.0
    %v4942 = vsel %vm4222, %v4654, 0.0
    %v4943 = vsel %vm4223, %v4741, 0.0
    %v4944 = vsel %vm4224, %v4743, 0.0
    %v4945 = vsel %vm4225, %v4830, 0.0
    %v4946 = vsel %vm4226, %v4832, 0.0
    %v4947 = vsel %vm4227, %v4919, 0.0
    %v4948 = vsel %vm4228, %v4921, 0.0
    %v4949 = vsel %vm4221, %v4658, 0.0
    %v4950 = vsel %vm4222, %v4660, 0.0
    %v4951 = vsel %vm4223, %v4747, 0.0
    %v4952 = vsel %vm4224, %v4749, 0.0
    %v4953 = vsel %vm4225, %v4836, 0.0
    %v4954 = vsel %vm4226, %v4838, 0.0
    %v4955 = vsel %vm4227, %v4925, 0.0
    %v4956 = vsel %vm4228, %v4927, 0.0
    %v4957 = vsel %vm4221, %v4664, 0.0
    %v4958 = vsel %vm4222, %v4666, 0.0
    %v4959 = vsel %vm4223, %v4753, 0.0
    %v4960 = vsel %vm4224, %v4755, 0.0
    %v4961 = vsel %vm4225, %v4842, 0.0
    %v4962 = vsel %vm4226, %v4844, 0.0
    %v4963 = vsel %vm4227, %v4931, 0.0
    %v4964 = vsel %vm4228, %v4933, 0.0
    %v4965 = vsel %vm4221, %v4670, 0.0
    %v4966 = vsel %vm4222, %v4672, 0.0
    %v4967 = vsel %vm4223, %v4759, 0.0
    %v4968 = vsel %vm4224, %v4761, 0.0
    %v4969 = vsel %vm4225, %v4848, 0.0
    %v4970 = vsel %vm4226, %v4850, 0.0
    %v4971 = vsel %vm4227, %v4937, 0.0
    %v4972 = vsel %vm4228, %v4939, 0.0
    %v4973 = vadd.f32 %v4941, %v4942
    %v4974 = vadd.f32 %v4973, %v4943
    %v4975 = vadd.f32 %v4974, %v4944
    %v4976 = vadd.f32 %v4975, %v4945
    %v4977 = vadd.f32 %v4976, %v4946
    %v4978 = vadd.f32 %v4977, %v4947
    %v4979 = vadd.f32 %v4978, %v4948
    %4980 = vadd.xlane.f32.xlu0 %v4979
    %v4981 = vpop.xlane.xlu0 %4980
    %v4982 = vadd.f32 %v4949, %v4950
    %v4983 = vadd.f32 %v4982, %v4951
    %v4984 = vadd.f32 %v4983, %v4952
    %v4985 = vadd.f32 %v4984, %v4953
    %v4986 = vadd.f32 %v4985, %v4954
    %v4987 = vadd.f32 %v4986, %v4955
    %v4988 = vadd.f32 %v4987, %v4956
    %4989 = vadd.xlane.f32.xlu0 %v4988
    %v4990 = vpop.xlane.xlu0 %4989
    %v4991 = vadd.f32 %v4957, %v4958
    %v4992 = vadd.f32 %v4991, %v4959
    %v4993 = vadd.f32 %v4992, %v4960
    %v4994 = vadd.f32 %v4993, %v4961
    %v4995 = vadd.f32 %v4994, %v4962
    %v4996 = vadd.f32 %v4995, %v4963
    %v4997 = vadd.f32 %v4996, %v4964
    %4998 = vadd.xlane.f32.xlu0 %v4997
    %v4999 = vpop.xlane.xlu0 %4998
    %v5000 = vadd.f32 %v4965, %v4966
    %v5001 = vadd.f32 %v5000, %v4967
    %v5002 = vadd.f32 %v5001, %v4968
    %v5003 = vadd.f32 %v5002, %v4969
    %v5004 = vadd.f32 %v5003, %v4970
    %v5005 = vadd.f32 %v5004, %v4971
    %v5006 = vadd.f32 %v5005, %v4972
    %5007 = vadd.xlane.f32.xlu0 %v5006
    %v5008 = vpop.xlane.xlu0 %5007
    %v5009 = vmul.f32 %v4981, 0.001
    %v5010 = vmul.f32 %v4990, 0.001
    %v5011 = vmul.f32 %v4999, 0.001
    %v5012 = vmul.f32 %v5008, 0.001
    %v5013 = vmul.f32 %v4941, %v4941
    %v5014 = vmul.f32 %v4942, %v4942
    %v5015 = vmul.f32 %v4943, %v4943
    %v5016 = vmul.f32 %v4944, %v4944
    %v5017 = vmul.f32 %v4945, %v4945
    %v5018 = vmul.f32 %v4946, %v4946
    %v5019 = vmul.f32 %v4947, %v4947
    %v5020 = vmul.f32 %v4948, %v4948
    %v5021 = vmul.f32 %v4949, %v4949
    %v5022 = vmul.f32 %v4950, %v4950
    %v5023 = vmul.f32 %v4951, %v4951
    %v5024 = vmul.f32 %v4952, %v4952
    %v5025 = vmul.f32 %v4953, %v4953
    %v5026 = vmul.f32 %v4954, %v4954
    %v5027 = vmul.f32 %v4955, %v4955
    %v5028 = vmul.f32 %v4956, %v4956
    %v5029 = vmul.f32 %v4957, %v4957
    %v5030 = vmul.f32 %v4958, %v4958
    %v5031 = vmul.f32 %v4959, %v4959
    %v5032 = vmul.f32 %v4960, %v4960
    %v5033 = vmul.f32 %v4961, %v4961
    %v5034 = vmul.f32 %v4962, %v4962
    %v5035 = vmul.f32 %v4963, %v4963
    %v5036 = vmul.f32 %v4964, %v4964
    %v5037 = vmul.f32 %v4965, %v4965
    %v5038 = vmul.f32 %v4966, %v4966
    %v5039 = vmul.f32 %v4967, %v4967
    %v5040 = vmul.f32 %v4968, %v4968
    %v5041 = vmul.f32 %v4969, %v4969
    %v5042 = vmul.f32 %v4970, %v4970
    %v5043 = vmul.f32 %v4971, %v4971
    %v5044 = vmul.f32 %v4972, %v4972
    %v5045 = vadd.f32 %v5013, %v5014
    %v5046 = vadd.f32 %v5045, %v5015
    %v5047 = vadd.f32 %v5046, %v5016
    %v5048 = vadd.f32 %v5047, %v5017
    %v5049 = vadd.f32 %v5048, %v5018
    %v5050 = vadd.f32 %v5049, %v5019
    %v5051 = vadd.f32 %v5050, %v5020
    %5052 = vadd.xlane.f32.xlu0 %v5051
    %v5053 = vpop.xlane.xlu0 %5052
    %v5054 = vadd.f32 %v5021, %v5022
    %v5055 = vadd.f32 %v5054, %v5023
    %v5056 = vadd.f32 %v5055, %v5024
    %v5057 = vadd.f32 %v5056, %v5025
    %v5058 = vadd.f32 %v5057, %v5026
    %v5059 = vadd.f32 %v5058, %v5027
    %v5060 = vadd.f32 %v5059, %v5028
    %5061 = vadd.xlane.f32.xlu0 %v5060
    %v5062 = vpop.xlane.xlu0 %5061
    %v5063 = vadd.f32 %v5029, %v5030
    %v5064 = vadd.f32 %v5063, %v5031
    %v5065 = vadd.f32 %v5064, %v5032
    %v5066 = vadd.f32 %v5065, %v5033
    %v5067 = vadd.f32 %v5066, %v5034
    %v5068 = vadd.f32 %v5067, %v5035
    %v5069 = vadd.f32 %v5068, %v5036
    %5070 = vadd.xlane.f32.xlu0 %v5069
    %v5071 = vpop.xlane.xlu0 %5070
    %v5072 = vadd.f32 %v5037, %v5038
    %v5073 = vadd.f32 %v5072, %v5039
    %v5074 = vadd.f32 %v5073, %v5040
    %v5075 = vadd.f32 %v5074, %v5041
    %v5076 = vadd.f32 %v5075, %v5042
    %v5077 = vadd.f32 %v5076, %v5043
    %v5078 = vadd.f32 %v5077, %v5044
    %5079 = vadd.xlane.f32.xlu0 %v5078
    %v5080 = vpop.xlane.xlu0 %5079
    %v5081 = vmul.f32 %v5053, 0.001
    %v5082 = vmul.f32 %v5062, 0.001
    %v5083 = vmul.f32 %v5071, 0.001
    %v5084 = vmul.f32 %v5080, 0.001
    %v5085 = vmul.f32 %v5009, %v5009
    %v5086 = vmul.f32 %v5010, %v5010
    %v5087 = vmul.f32 %v5011, %v5011
    %v5088 = vmul.f32 %v5012, %v5012
    %v5089 = vsub.f32 %v5081, %v5085
    %v5090 = vsub.f32 %v5082, %v5086
    %v5091 = vsub.f32 %v5083, %v5087
    %v5092 = vsub.f32 %v5084, %v5088
    %v5093 = vadd.f32 %v5089, 1e-05
    %v5094 = vadd.f32 %v5090, 1e-05
    %v5095 = vadd.f32 %v5091, 1e-05
    %v5096 = vadd.f32 %v5092, 1e-05
    %v5097 = vrsqrt.pop %v5093
    %v5098 = vrsqrt.pop %v5094
    %v5099 = vrsqrt.pop %v5095
    %v5100 = vrsqrt.pop %v5096
    %v5101 = vld [vmem:[%s9] sm:$0xff]
    %v5102 = vld [vmem:[%s9 + $0x8] sm:$0xff]
    %v5103 = vld [vmem:[%s9 + $0x10] sm:$0xff]
    %v5104 = vld [vmem:[%s9 + $0x18] sm:$0xff]
    %v5105 = vmul.f32 %v5097, %v5101
    %v5106 = vmul.f32 %v5098, %v5102
    %v5107 = vmul.f32 %v5099, %v5103
    %v5108 = vmul.f32 %v5100, %v5104
    %v5109 = vld [vmem:[%s10] sm:$0xff]
    %v5110 = vld [vmem:[%s10 + $0x8] sm:$0xff]
    %v5111 = vld [vmem:[%s10 + $0x10] sm:$0xff]
    %v5112 = vld [vmem:[%s10 + $0x18] sm:$0xff]
    %v5113 = vmul.f32 %v5009, %v5105
    %v5114 = vmul.f32 %v5010, %v5106
    %v5115 = vmul.f32 %v5011, %v5107
    %v5116 = vmul.f32 %v5012, %v5108
    %v5117 = vsub.f32 %v5109, %v5113
    %v5118 = vsub.f32 %v5110, %v5114
    %v5119 = vsub.f32 %v5111, %v5115
    %v5120 = vsub.f32 %v5112, %v5116
    %5122 = vset.pattern.permute.xlu0 0
    %5123 = vperm.xlu0 %5122, %v5105
    %v5124 = vpop.permute.xlu0 %5123
    %5127 = vset.pattern.permute.xlu0 0
    %5128 = vperm.xlu0 %5127, %v5106
    %v5129 = vpop.permute.xlu0 %5128
    %5132 = vset.pattern.permute.xlu0 0
    %5133 = vperm.xlu0 %5132, %v5107
    %v5134 = vpop.permute.xlu0 %5133
    %5137 = vset.pattern.permute.xlu0 0
    %5138 = vperm.xlu0 %5137, %v5108
    %v5139 = vpop.permute.xlu0 %5138
    %v5141 = vmul.f32 %v4652, %v5124
    %v5142 = vmul.f32 %v4654, %v5124
    %v5143 = vmul.f32 %v4741, %v5124
    %v5144 = vmul.f32 %v4743, %v5124
    %v5145 = vmul.f32 %v4830, %v5124
    %v5146 = vmul.f32 %v4832, %v5124
    %v5147 = vmul.f32 %v4919, %v5124
    %v5148 = vmul.f32 %v4921, %v5124
    %v5149 = vmul.f32 %v4658, %v5129
    %v5150 = vmul.f32 %v4660, %v5129
    %v5151 = vmul.f32 %v4747, %v5129
    %v5152 = vmul.f32 %v4749, %v5129
    %v5153 = vmul.f32 %v4836, %v5129
    %v5154 = vmul.f32 %v4838, %v5129
    %v5155 = vmul.f32 %v4925, %v5129
    %v5156 = vmul.f32 %v4927, %v5129
    %v5157 = vmul.f32 %v4664, %v5134
    %v5158 = vmul.f32 %v4666, %v5134
    %v5159 = vmul.f32 %v4753, %v5134
    %v5160 = vmul.f32 %v4755, %v5134
    %v5161 = vmul.f32 %v4842, %v5134
    %v5162 = vmul.f32 %v4844, %v5134
    %v5163 = vmul.f32 %v4931, %v5134
    %v5164 = vmul.f32 %v4933, %v5134
    %v5165 = vmul.f32 %v4670, %v5139
    %v5166 = vmul.f32 %v4672, %v5139
    %v5167 = vmul.f32 %v4759, %v5139
    %v5168 = vmul.f32 %v4761, %v5139
    %v5169 = vmul.f32 %v4848, %v5139
    %v5170 = vmul.f32 %v4850, %v5139
    %v5171 = vmul.f32 %v4937, %v5139
    %v5172 = vmul.f32 %v4939, %v5139
    %5174 = vset.pattern.permute.xlu0 0
    %5175 = vperm.xlu0 %5174, %v5117
    %v5176 = vpop.permute.xlu0 %5175
    %5179 = vset.pattern.permute.xlu0 0
    %5180 = vperm.xlu0 %5179, %v5118
    %v5181 = vpop.permute.xlu0 %5180
    %5184 = vset.pattern.permute.xlu0 0
    %5185 = vperm.xlu0 %5184, %v5119
    %v5186 = vpop.permute.xlu0 %5185
    %5189 = vset.pattern.permute.xlu0 0
    %5190 = vperm.xlu0 %5189, %v5120
    %v5191 = vpop.permute.xlu0 %5190
    %v5193 = vadd.f32 %v5141, %v5176
    %v5194 = vadd.f32 %v5142, %v5176
    %v5195 = vadd.f32 %v5143, %v5176
    %v5196 = vadd.f32 %v5144, %v5176
    %v5197 = vadd.f32 %v5145, %v5176
    %v5198 = vadd.f32 %v5146, %v5176
    %v5199 = vadd.f32 %v5147, %v5176
    %v5200 = vadd.f32 %v5148, %v5176
    %v5201 = vadd.f32 %v5149, %v5181
    %v5202 = vadd.f32 %v5150, %v5181
    %v5203 = vadd.f32 %v5151, %v5181
    %v5204 = vadd.f32 %v5152, %v5181
    %v5205 = vadd.f32 %v5153, %v5181
    %v5206 = vadd.f32 %v5154, %v5181
    %v5207 = vadd.f32 %v5155, %v5181
    %v5208 = vadd.f32 %v5156, %v5181
    %v5209 = vadd.f32 %v5157, %v5186
    %v5210 = vadd.f32 %v5158, %v5186
    %v5211 = vadd.f32 %v5159, %v5186
    %v5212 = vadd.f32 %v5160, %v5186
    %v5213 = vadd.f32 %v5161, %v5186
    %v5214 = vadd.f32 %v5162, %v5186
    %v5215 = vadd.f32 %v5163, %v5186
    %v5216 = vadd.f32 %v5164, %v5186
    %v5217 = vadd.f32 %v5165, %v5191
    %v5218 = vadd.f32 %v5166, %v5191
    %v5219 = vadd.f32 %v5167, %v5191
    %v5220 = vadd.f32 %v5168, %v5191
    %v5221 = vadd.f32 %v5169, %v5191
    %v5222 = vadd.f32 %v5170, %v5191
    %v5223 = vadd.f32 %v5171, %v5191
    %v5224 = vadd.f32 %v5172, %v5191
    %v5225 = vmax.f32 %v5193, 0.0
    %v5226 = vmax.f32 %v5194, 0.0
    %v5227 = vmax.f32 %v5195, 0.0
    %v5228 = vmax.f32 %v5196, 0.0
    %v5229 = vmax.f32 %v5197, 0.0
    %v5230 = vmax.f32 %v5198, 0.0
    %v5231 = vmax.f32 %v5199, 0.0
    %v5232 = vmax.f32 %v5200, 0.0
    %v5233 = vmax.f32 %v5201, 0.0
    %v5234 = vmax.f32 %v5202, 0.0
    %v5235 = vmax.f32 %v5203, 0.0
    %v5236 = vmax.f32 %v5204, 0.0
    %v5237 = vmax.f32 %v5205, 0.0
    %v5238 = vmax.f32 %v5206, 0.0
    %v5239 = vmax.f32 %v5207, 0.0
    %v5240 = vmax.f32 %v5208, 0.0
    %v5241 = vmax.f32 %v5209, 0.0
    %v5242 = vmax.f32 %v5210, 0.0
    %v5243 = vmax.f32 %v5211, 0.0
    %v5244 = vmax.f32 %v5212, 0.0
    %v5245 = vmax.f32 %v5213, 0.0
    %v5246 = vmax.f32 %v5214, 0.0
    %v5247 = vmax.f32 %v5215, 0.0
    %v5248 = vmax.f32 %v5216, 0.0
    %v5249 = vmax.f32 %v5217, 0.0
    %v5250 = vmax.f32 %v5218, 0.0
    %v5251 = vmax.f32 %v5219, 0.0
    %v5252 = vmax.f32 %v5220, 0.0
    %v5253 = vmax.f32 %v5221, 0.0
    %v5254 = vmax.f32 %v5222, 0.0
    %v5255 = vmax.f32 %v5223, 0.0
    %v5256 = vmax.f32 %v5224, 0.0
    %v5257 = vld [vmem:[%s11] sm:$0xf]
    %v5258 = vld [vmem:[%s12] sm:$0xf]
    %5260 = vset.pattern.permute.xlu0 0
    %5261 = vperm.xlu0 %5260, %v5258
    %v5262 = vpop.permute.xlu0 %5261
    %v5265 = vsel %vm3844, %v5257, 0
    %5267 = vmatprep.subr.mxu0 0.0
    %5268 = vmatpush1.msra.mxu0 0.0
    %5269 = vmatprep.subr.mxu0 0.0
    %5270 = vmatpush1.msra.mxu0 0.0
    %5271 = vmatprep.subr.mxu0 0.0
    %5272 = vmatpush1.msra.mxu0 0.0
    %5273 = vmatprep.subr.mxu0 0.0
    %5274 = vmatpush1.msra.mxu0 0.0
    %5275 = vmatprep.subr.mxu0 0.0
    %5276 = vmatpush1.msra.mxu0 0.0
    %5277 = vmatprep.subr.mxu0 0.0
    %5278 = vmatpush1.msra.mxu0 0.0
    %5279 = vmatprep.subr.mxu0 0.0
    %5280 = vmatpush1.msra.mxu0 0.0
    %5281 = vmatprep.subr.mxu0 0.0
    %5282 = vmatpush1.msra.mxu0 0.0
    %5283 = vmatprep.subr.mxu0 0.0
    %5284 = vmatpush1.msra.mxu0 0.0
    %5285 = vmatprep.subr.mxu0 0.0
    %5286 = vmatpush1.msra.mxu0 0.0
    %5287 = vmatprep.subr.mxu0 0.0
    %5288 = vmatpush1.msra.mxu0 0.0
    %5289 = vmatprep.subr.mxu0 0.0
    %5290 = vmatpush1.msra.mxu0 0.0
    %5291 = vmatprep.subr.mxu0 %v5250
    %5292 = vmatpush1.msra.mxu0 %v5249
    %5293 = vmatprep.subr.mxu0 %v5242
    %5294 = vmatpush1.msra.mxu0 %v5241
    %5295 = vmatprep.subr.mxu0 %v5234
    %5296 = vmatpush1.msra.mxu0 %v5233
    %5297 = vmatprep.subr.mxu0 %v5226
    %5298 = vmatpush1.msra.mxu0 %v5225
    %5299 = vmatprep.subr.mxu0 0.0
    %5300 = vmatpush2.msra.mxu0 0.0
    %5301 = vmatprep.subr.mxu0 0.0
    %5302 = vmatpush2.msra.mxu0 0.0
    %5303 = vmatprep.subr.mxu0 0.0
    %5304 = vmatpush2.msra.mxu0 0.0
    %5305 = vmatprep.subr.mxu0 0.0
    %5306 = vmatpush2.msra.mxu0 0.0
    %5307 = vmatprep.subr.mxu0 0.0
    %5308 = vmatpush2.msra.mxu0 0.0
    %5309 = vmatprep.subr.mxu0 0.0
    %5310 = vmatpush2.msra.mxu0 0.0
    %5311 = vmatprep.subr.mxu0 0.0
    %5312 = vmatpush2.msra.mxu0 0.0
    %5313 = vmatprep.subr.mxu0 0.0
    %5314 = vmatpush2.msra.mxu0 0.0
    %5315 = vmatprep.subr.mxu0 0.0
    %5316 = vmatpush2.msra.mxu0 0.0
    %5317 = vmatprep.subr.mxu0 0.0
    %5318 = vmatpush2.msra.mxu0 0.0
    %5319 = vmatprep.subr.mxu0 0.0
    %5320 = vmatpush2.msra.mxu0 0.0
    %5321 = vmatprep.subr.mxu0 0.0
    %5322 = vmatpush2.msra.mxu0 0.0
    %5323 = vmatprep.subr.mxu0 0.0
    %5324 = vmatpush2.msra.mxu0 0.0
    %5325 = vmatprep.subr.mxu0 0.0
    %5326 = vmatpush2.msra.mxu0 0.0
    %5327 = vmatprep.subr.mxu0 0.0
    %5328 = vmatpush2.msra.mxu0 0.0
    %5329 = vmatprep.subr.mxu0 0.0
    %5330 = vmatpush2.msra.mxu0 0.0
    %5331 = vmatprep.mubr.f32.mxu0 0.0
    %5332 = vmatmul.mubr.f32.gmra.mxu0 %v5265
    %v5333 = vpop.f32.mrf.mxu0
    %v5334 = vadd.f32 %v5262, %v5333
    %v5335 = vpop.f32.mrf.mxu0
    %v5336 = vadd.f32 %v5262, %v5335
    %5337 = vdwg.mxu0
    %5338 = vmatprep.subr.mxu0 0.0
    %5339 = vmatpush1.msra.mxu0 0.0
    %5340 = vmatprep.subr.mxu0 0.0
    %5341 = vmatpush1.msra.mxu0 0.0
    %5342 = vmatprep.subr.mxu0 0.0
    %5343 = vmatpush1.msra.mxu0 0.0
    %5344 = vmatprep.subr.mxu0 0.0
    %5345 = vmatpush1.msra.mxu0 0.0
    %5346 = vmatprep.subr.mxu0 0.0
    %5347 = vmatpush1.msra.mxu0 0.0
    %5348 = vmatprep.subr.mxu0 0.0
    %5349 = vmatpush1.msra.mxu0 0.0
    %5350 = vmatprep.subr.mxu0 0.0
    %5351 = vmatpush1.msra.mxu0 0.0
    %5352 = vmatprep.subr.mxu0 0.0
    %5353 = vmatpush1.msra.mxu0 0.0
    %5354 = vmatprep.subr.mxu0 0.0
    %5355 = vmatpush1.msra.mxu0 0.0
    %5356 = vmatprep.subr.mxu0 0.0
    %5357 = vmatpush1.msra.mxu0 0.0
    %5358 = vmatprep.subr.mxu0 0.0
    %5359 = vmatpush1.msra.mxu0 0.0
    %5360 = vmatprep.subr.mxu0 0.0
    %5361 = vmatpush1.msra.mxu0 0.0
    %5362 = vmatprep.subr.mxu0 %v5252
    %5363 = vmatpush1.msra.mxu0 %v5251
    %5364 = vmatprep.subr.mxu0 %v5244
    %5365 = vmatpush1.msra.mxu0 %v5243
    %5366 = vmatprep.subr.mxu0 %v5236
    %5367 = vmatpush1.msra.mxu0 %v5235
    %5368 = vmatprep.subr.mxu0 %v5228
    %5369 = vmatpush1.msra.mxu0 %v5227
    %5370 = vmatprep.subr.mxu0 0.0
    %5371 = vmatpush2.msra.mxu0 0.0
    %5372 = vmatprep.subr.mxu0 0.0
    %5373 = vmatpush2.msra.mxu0 0.0
    %5374 = vmatprep.subr.mxu0 0.0
    %5375 = vmatpush2.msra.mxu0 0.0
    %5376 = vmatprep.subr.mxu0 0.0
    %5377 = vmatpush2.msra.mxu0 0.0
    %5378 = vmatprep.subr.mxu0 0.0
    %5379 = vmatpush2.msra.mxu0 0.0
    %5380 = vmatprep.subr.mxu0 0.0
    %5381 = vmatpush2.msra.mxu0 0.0
    %5382 = vmatprep.subr.mxu0 0.0
    %5383 = vmatpush2.msra.mxu0 0.0
    %5384 = vmatprep.subr.mxu0 0.0
    %5385 = vmatpush2.msra.mxu0 0.0
    %5386 = vmatprep.subr.mxu0 0.0
    %5387 = vmatpush2.msra.mxu0 0.0
    %5388 = vmatprep.subr.mxu0 0.0
    %5389 = vmatpush2.msra.mxu0 0.0
    %5390 = vmatprep.subr.mxu0 0.0
    %5391 = vmatpush2.msra.mxu0 0.0
    %5392 = vmatprep.subr.mxu0 0.0
    %5393 = vmatpush2.msra.mxu0 0.0
    %5394 = vmatprep.subr.mxu0 0.0
    %5395 = vmatpush2.msra.mxu0 0.0
    %5396 = vmatprep.subr.mxu0 0.0
    %5397 = vmatpush2.msra.mxu0 0.0
    %5398 = vmatprep.subr.mxu0 0.0
    %5399 = vmatpush2.msra.mxu0 0.0
    %5400 = vmatprep.subr.mxu0 0.0
    %5401 = vmatpush2.msra.mxu0 0.0
    %5402 = vmatprep.mubr.f32.mxu0 0.0
    %5403 = vmatmul.mubr.f32.gmra.mxu0 %v5265
    %v5404 = vpop.f32.mrf.mxu0
    %v5405 = vadd.f32 %v5262, %v5404
    %v5406 = vpop.f32.mrf.mxu0
    %v5407 = vadd.f32 %v5262, %v5406
    %5408 = vdwg.mxu0
    %5409 = vmatprep.subr.mxu0 0.0
    %5410 = vmatpush1.msra.mxu0 0.0
    %5411 = vmatprep.subr.mxu0 0.0
    %5412 = vmatpush1.msra.mxu0 0.0
    %5413 = vmatprep.subr.mxu0 0.0
    %5414 = vmatpush1.msra.mxu0 0.0
    %5415 = vmatprep.subr.mxu0 0.0
    %5416 = vmatpush1.msra.mxu0 0.0
    %5417 = vmatprep.subr.mxu0 0.0
    %5418 = vmatpush1.msra.mxu0 0.0
    %5419 = vmatprep.subr.mxu0 0.0
    %5420 = vmatpush1.msra.mxu0 0.0
    %5421 = vmatprep.subr.mxu0 0.0
    %5422 = vmatpush1.msra.mxu0 0.0
    %5423 = vmatprep.subr.mxu0 0.0
    %5424 = vmatpush1.msra.mxu0 0.0
    %5425 = vmatprep.subr.mxu0 0.0
    %5426 = vmatpush1.msra.mxu0 0.0
    %5427 = vmatprep.subr.mxu0 0.0
    %5428 = vmatpush1.msra.mxu0 0.0
    %5429 = vmatprep.subr.mxu0 0.0
    %5430 = vmatpush1.msra.mxu0 0.0
    %5431 = vmatprep.subr.mxu0 0.0
    %5432 = vmatpush1.msra.mxu0 0.0
    %5433 = vmatprep.subr.mxu0 %v5254
    %5434 = vmatpush1.msra.mxu0 %v5253
    %5435 = vmatprep.subr.mxu0 %v5246
    %5436 = vmatpush1.msra.mxu0 %v5245
    %5437 = vmatprep.subr.mxu0 %v5238
    %5438 = vmatpush1.msra.mxu0 %v5237
    %5439 = vmatprep.subr.mxu0 %v5230
    %5440 = vmatpush1.msra.mxu0 %v5229
    %5441 = vmatprep.subr.mxu0 0.0
    %5442 = vmatpush2.msra.mxu0 0.0
    %5443 = vmatprep.subr.mxu0 0.0
    %5444 = vmatpush2.msra.mxu0 0.0
    %5445 = vmatprep.subr.mxu0 0.0
    %5446 = vmatpush2.msra.mxu0 0.0
    %5447 = vmatprep.subr.mxu0 0.0
    %5448 = vmatpush2.msra.mxu0 0.0
    %5449 = vmatprep.subr.mxu0 0.0
    %5450 = vmatpush2.msra.mxu0 0.0
    %5451 = vmatprep.subr.mxu0 0.0
    %5452 = vmatpush2.msra.mxu0 0.0
    %5453 = vmatprep.subr.mxu0 0.0
    %5454 = vmatpush2.msra.mxu0 0.0
    %5455 = vmatprep.subr.mxu0 0.0
    %5456 = vmatpush2.msra.mxu0 0.0
    %5457 = vmatprep.subr.mxu0 0.0
    %5458 = vmatpush2.msra.mxu0 0.0
    %5459 = vmatprep.subr.mxu0 0.0
    %5460 = vmatpush2.msra.mxu0 0.0
    %5461 = vmatprep.subr.mxu0 0.0
    %5462 = vmatpush2.msra.mxu0 0.0
    %5463 = vmatprep.subr.mxu0 0.0
    %5464 = vmatpush2.msra.mxu0 0.0
    %5465 = vmatprep.subr.mxu0 0.0
    %5466 = vmatpush2.msra.mxu0 0.0
    %5467 = vmatprep.subr.mxu0 0.0
    %5468 = vmatpush2.msra.mxu0 0.0
    %5469 = vmatprep.subr.mxu0 0.0
    %5470 = vmatpush2.msra.mxu0 0.0
    %5471 = vmatprep.subr.mxu0 0.0
    %5472 = vmatpush2.msra.mxu0 0.0
    %5473 = vmatprep.mubr.f32.mxu0 0.0
    %5474 = vmatmul.mubr.f32.gmra.mxu0 %v5265
    %v5475 = vpop.f32.mrf.mxu0
    %v5476 = vadd.f32 %v5262, %v5475
    %v5477 = vpop.f32.mrf.mxu0
    %v5478 = vadd.f32 %v5262, %v5477
    %5479 = vdwg.mxu0
    %5480 = vmatprep.subr.mxu0 0.0
    %5481 = vmatpush1.msra.mxu0 0.0
    %5482 = vmatprep.subr.mxu0 0.0
    %5483 = vmatpush1.msra.mxu0 0.0
    %5484 = vmatprep.subr.mxu0 0.0
    %5485 = vmatpush1.msra.mxu0 0.0
    %5486 = vmatprep.subr.mxu0 0.0
    %5487 = vmatpush1.msra.mxu0 0.0
    %5488 = vmatprep.subr.mxu0 0.0
    %5489 = vmatpush1.msra.mxu0 0.0
    %5490 = vmatprep.subr.mxu0 0.0
    %5491 = vmatpush1.msra.mxu0 0.0
    %5492 = vmatprep.subr.mxu0 0.0
    %5493 = vmatpush1.msra.mxu0 0.0
    %5494 = vmatprep.subr.mxu0 0.0
    %5495 = vmatpush1.msra.mxu0 0.0
    %5496 = vmatprep.subr.mxu0 0.0
    %5497 = vmatpush1.msra.mxu0 0.0
    %5498 = vmatprep.subr.mxu0 0.0
    %5499 = vmatpush1.msra.mxu0 0.0
    %5500 = vmatprep.subr.mxu0 0.0
    %5501 = vmatpush1.msra.mxu0 0.0
    %5502 = vmatprep.subr.mxu0 0.0
    %5503 = vmatpush1.msra.mxu0 0.0
    %5504 = vmatprep.subr.mxu0 %v5256
    %5505 = vmatpush1.msra.mxu0 %v5255
    %5506 = vmatprep.subr.mxu0 %v5248
    %5507 = vmatpush1.msra.mxu0 %v5247
    %5508 = vmatprep.subr.mxu0 %v5240
    %5509 = vmatpush1.msra.mxu0 %v5239
    %5510 = vmatprep.subr.mxu0 %v5232
    %5511 = vmatpush1.msra.mxu0 %v5231
    %5512 = vmatprep.subr.mxu0 0.0
    %5513 = vmatpush2.msra.mxu0 0.0
    %5514 = vmatprep.subr.mxu0 0.0
    %5515 = vmatpush2.msra.mxu0 0.0
    %5516 = vmatprep.subr.mxu0 0.0
    %5517 = vmatpush2.msra.mxu0 0.0
    %5518 = vmatprep.subr.mxu0 0.0
    %5519 = vmatpush2.msra.mxu0 0.0
    %5520 = vmatprep.subr.mxu0 0.0
    %5521 = vmatpush2.msra.mxu0 0.0
    %5522 = vmatprep.subr.mxu0 0.0
    %5523 = vmatpush2.msra.mxu0 0.0
    %5524 = vmatprep.subr.mxu0 0.0
    %5525 = vmatpush2.msra.mxu0 0.0
    %5526 = vmatprep.subr.mxu0 0.0
    %5527 = vmatpush2.msra.mxu0 0.0
    %5528 = vmatprep.subr.mxu0 0.0
    %5529 = vmatpush2.msra.mxu0 0.0
    %5530 = vmatprep.subr.mxu0 0.0
    %5531 = vmatpush2.msra.mxu0 0.0
    %5532 = vmatprep.subr.mxu0 0.0
    %5533 = vmatpush2.msra.mxu0 0.0
    %5534 = vmatprep.subr.mxu0 0.0
    %5535 = vmatpush2.msra.mxu0 0.0
    %5536 = vmatprep.subr.mxu0 0.0
    %5537 = vmatpush2.msra.mxu0 0.0
    %5538 = vmatprep.subr.mxu0 0.0
    %5539 = vmatpush2.msra.mxu0 0.0
    %5540 = vmatprep.subr.mxu0 0.0
    %5541 = vmatpush2.msra.mxu0 0.0
    %5542 = vmatprep.subr.mxu0 0.0
    %5543 = vmatpush2.msra.mxu0 0.0
    %5544 = vmatprep.mubr.f32.mxu0 0.0
    %5545 = vmatmul.mubr.f32.gmra.mxu0 %v5265
    %v5546 = vpop.f32.mrf.mxu0
    %v5547 = vadd.f32 %v5262, %v5546
    %v5548 = vpop.f32.mrf.mxu0
    %v5549 = vadd.f32 %v5262, %v5548
    %5550 = vdwg.mxu0
    %v5559 = vcombine.low %v5334, %v5336
    %v5560 = vcombine.low %v5405, %v5407
    %v5561 = vcombine.low %v5476, %v5478
    %v5562 = vcombine.low %v5547, %v5549
    %5567 = vst [vmem:[#allocation2] sm:$0xff] %v5559
    %5568 = vst [vmem:[#allocation2 + $0x8] sm:$0xff] %v5560
    %5569 = vst [vmem:[#allocation2 + $0x10] sm:$0xff] %v5561
    %5570 = vst [vmem:[#allocation2 + $0x18] sm:$0xff] %v5562
    // Predicated region
    $region54: #{tpu_custom_call.1} parent=1 // pred_check
      _
    $region55: #{tpu_custom_call.1} parent=1 // pred_check_branch
      %5572 = sbr.rel (0) target = $region57
    $region56: #{tpu_custom_call.1} parent=1 // pred_region
      %s5574 = ssub.s32 512, 512
      %5575 = vsyncadd [#allocation3], %s5574
      %s5577 = sshll.u32 [#allocation2], 4
      %s5578 = int_to_ptr.vmem [resolvable:$true] %s5577
      %5580 = dma.vmem_to_hbm [thread:$0]  %s5578, 512, %s13, [#allocation3]
    $region57: #{tpu_custom_call.1} parent=1 // pred_fallthru
      _
    // Predicated region
    $region58: #{tpu_custom_call.1} parent=1 // pred_check
      _
    $region59: #{tpu_custom_call.1} parent=1 // pred_check_branch
      %5582 = sbr.rel (0) target = $region61
    $region60: #{tpu_custom_call.1} parent=1 // pred_region
      %5583 = dma.done [#allocation3], 512
    $region61: #{tpu_custom_call.1} parent=1 // pred_fallthru
      _
    %5584 = vsyncpa [#allocation3], 1

</llo_original>
